<compile_context>
chip_gen: v6e
topology: v6e:2x2x1
jax: 0.10.0
libtpu: 0.0.40
codegen_flags: <defaults>
</compile_context>

<pallas_src>
import math
from functools import partial

import jax
import jax.numpy as jnp
from jax import lax
from jax.experimental import pallas as pl
from jax.experimental.pallas import tpu as pltpu

EPS = 1e-5  # PyTorch nn.LayerNorm default eps


def _layer_norm(t, gamma, beta):
    mu = jnp.mean(t, axis=-1, keepdims=True)
    var = jnp.mean((t - mu) ** 2, axis=-1, keepdims=True)  # biased var (PyTorch)
    return (t - mu) * lax.rsqrt(var + EPS) * gamma + beta


def _double_layer_norm(x, g1, b1, g2, b2):
    """LN2(LN1(x)) fused: normalize x once, fold LN1's affine into LN2's statistics."""
    mu1 = jnp.mean(x, axis=-1, keepdims=True)
    var1 = jnp.mean((x - mu1) ** 2, axis=-1, keepdims=True)
    xhat = (x - mu1) * lax.rsqrt(var1 + EPS)
    s1 = xhat * g1                                         # LN1 output = s1 + b1
    mu2 = jnp.mean(s1, axis=-1, keepdims=True) + jnp.mean(b1, axis=-1, keepdims=True)
    c = s1 + b1 - mu2
    var2 = jnp.mean(c * c, axis=-1, keepdims=True)
    return c * lax.rsqrt(var2 + EPS) * g2 + b2


# --------------------------------------------------------------------------------------
# Kernel 1: per-token precompute  t = LN2(LN1(x));  [Q | K | V] = t @ Wqkv + bqkv
# Q is pre-scaled by 1/sqrt(D); Q and packed K|V are written once to HBM in bf16.
# --------------------------------------------------------------------------------------
def make_qkv_kernel(D):
    scale = 1.0 / math.sqrt(D)
    f32, bf16 = jnp.float32, jnp.bfloat16

    def kernel(x_ref, g1_ref, b1_ref, g2_ref, b2_ref, wqkv_ref, bqkv_ref,
               q_out_ref, kv_out_ref):
        x = x_ref[0].astype(f32)                                        # (TS, D)
        t = _double_layer_norm(x, g1_ref[...], b1_ref[...], g2_ref[...], b2_ref[...])
        # single wide-N (3D) MXU matmul, f32 accumulation, f32 bias
        proj = jnp.dot(t.astype(bf16), wqkv_ref[...],
                       preferred_element_type=f32) + bqkv_ref[...]      # (TS, 3D)
        q_out_ref[0] = (proj[:, :D] * scale).astype(q_out_ref.dtype)    # pre-scaled Q
        kv_out_ref[0] = proj[:, D:].astype(kv_out_ref.dtype)            # packed K|V

    return kernel


# --------------------------------------------------------------------------------------
# Kernel 2: flash attention over the cached K|V + O-proj + residual + suffix MLP.
# --------------------------------------------------------------------------------------
def make_flash_kernel(S, S_pad, TK, D):
    needs_mask = S_pad > S
    f32, bf16 = jnp.float32, jnp.bfloat16

    def kernel(q_ref, kv_ref, x_ref,
               g3_ref, b3_ref, wo_ref, bo_ref,
               w1_ref, bf1_ref, w2_ref, bf2_ref,
               out_ref, m_scr, l_scr, acc_scr):
        ki = pl.program_id(2)
        n_kv = pl.num_programs(2)

        @pl.when(ki == 0)
        def _init():
            m_scr[...] = jnp.full(m_scr.shape, -jnp.inf, f32)
            l_scr[...] = jnp.zeros(l_scr.shape, f32)
            acc_scr[...] = jnp.zeros(acc_scr.shape, f32)

        kv = kv_ref[0]                                                   # (TK, 2D) bf16
        k = kv[:, :D]
        v = kv[:, D:]
        # scores: contract the feature axis directly (no k.T materialization)
        s = lax.dot_general(q_ref[0], k, (((1,), (1,)), ((), ())),
                            preferred_element_type=f32)                 # (TQ, TK)
        if needs_mask:                                                   # padded keys
            key_idx = ki * TK + lax.broadcasted_iota(jnp.int32, (1, TK), 1)
            s = jnp.where(key_idx < S, s, jnp.float32(-1e30))

        # online (flash) softmax update
        m_prev = m_scr[...]
        m_new = jnp.maximum(m_prev, jnp.max(s, axis=-1, keepdims=True))
        alpha = jnp.exp(m_prev - m_new)
        p = jnp.exp(s - m_new)                                           # unnormalized
        l_scr[...] = alpha * l_scr[...] + jnp.sum(p, axis=-1, keepdims=True)
        acc_scr[...] = alpha * acc_scr[...] + jnp.dot(
            p.astype(bf16), v, preferred_element_type=f32)
        m_scr[...] = m_new

        @pl.when(ki == n_kv - 1)
        def _finalize():
            a = acc_scr[...] / l_scr[...]                                # exact normalize
            a = jnp.dot(a.astype(bf16), wo_ref[...],
                        preferred_element_type=f32) + bo_ref[...]
            y = a + x_ref[0].astype(f32)                                 # residual (f32 x)
            z = _layer_norm(y, g3_ref[...], b3_ref[...])
            z = jnp.dot(z.astype(bf16), w1_ref[...],
                        preferred_element_type=f32) + bf1_ref[...]
            z = jnp.maximum(z, 0.0)
            z = jnp.dot(z.astype(bf16), w2_ref[...],
                        preferred_element_type=f32) + bf2_ref[...]
            out_ref[0] = (y + z).astype(out_ref.dtype)

    return kernel


# --------------------------------------------------------------------------------------
# Wrapper
# --------------------------------------------------------------------------------------
def _round_up(x, m):
    return (x + m - 1) // m * m


def _choose_tiles(B, S, tq, tk):
    tq = max(8, _round_up(tq, 8))
    tk = max(8, _round_up(tk, 8))
    if S <= min(tq, tk):
        TQ = TK = _round_up(S, 8)
    else:
        TQ, TK = tq, tk
    S_pad = _round_up(S, math.lcm(TQ, TK))
    # v7x has 2 TensorCores: keep at least 2 units of parallel (B, qi) work if possible.
    if B * (S_pad // TQ) < 2:
        half = TQ // 2
        if half >= 8 and half % 8 == 0 and S_pad % half == 0:
            TQ = half
    return TQ, TK, S_pad


def _vmem_limit(est_bytes):
    # Explicit limit: above the 16/32 MiB scoped defaults, under v7x's 64 MiB physical.
    return int(min(max(2 * est_bytes, 32 * 2**20), 48 * 2**20))


@partial(jax.jit, static_argnames=("tq", "tk"))
def _forward(x, params, *, tq, tk):
    (g1, b1, g2, b2, wq, bq, wk, bk, wv, bv, wo, bo,
     g3, b3, w1, bf1, w2, bf2) = params
    B, S, D = x.shape
    TQ, TK, S_pad = _choose_tiles(B, S, tq, tk)
    n_q, n_kv = S_pad // TQ, S_pad // TK
    TS = TK                                   # precompute tile; divides S_pad
    n_s = S_pad // TS
    bfb, f4 = 2, 4

    # Pack Q/K/V projections into one (D, 3D) bf16 weight -> one wide-N matmul per tile.
    wqkv = jnp.concatenate([wq, wk, wv], axis=1).astype(jnp.bfloat16)
    bqkv = jnp.concatenate([bq, bk, bv], axis=1).astype(jnp.float32)

    x_p = x if S_pad == S else jnp.pad(x, ((0, 0), (0, S_pad - S), (0, 0)))

    # ---- pass 1: LN2(LN1(x)) + packed QKV projection (written once, bf16) ----
    pre_est = (2 * (TS * D * x.dtype.itemsize + TS * D * bfb + TS * 2 * D * bfb)
               + 2 * (D * 3 * D * bfb + 7 * D * f4)
               + 4 * TS * 3 * D * f4)
    pre_specs = [pl.BlockSpec((1, TS, D), lambda b, si: (b, si, 0))]
    for p in (g1, b1, g2, b2, wqkv, bqkv):
        pre_specs.append(pl.BlockSpec(p.shape, lambda b, si: (0, 0)))

    q_bf, kv_bf = pl.pallas_call(
        make_qkv_kernel(D),
        out_shape=(jax.ShapeDtypeStruct((B, S_pad, D), jnp.bfloat16),
                   jax.ShapeDtypeStruct((B, S_pad, 2 * D), jnp.bfloat16)),
        grid_spec=pltpu.PrefetchScalarGridSpec(
            num_scalar_prefetch=0,
            grid=(B, n_s),
            in_specs=pre_specs,
            out_specs=[pl.BlockSpec((1, TS, D), lambda b, si: (b, si, 0)),
                       pl.BlockSpec((1, TS, 2 * D), lambda b, si: (b, si, 0))],
        ),
        compiler_params=pltpu.CompilerParams(
            dimension_semantics=("parallel", "parallel"),
            vmem_limit_bytes=_vmem_limit(pre_est),
        ),
    )(x_p, g1, b1, g2, b2, wqkv, bqkv)

    # ---- pass 2: flash attention over the cached K|V + finalize (O proj, residual, MLP) ----
    flash_wparams = (g3, b3, wo, bo, w1, bf1, w2, bf2)
    flash_specs = [
        pl.BlockSpec((1, TQ, D), lambda b, qi, ki: (b, qi, 0)),        # pre-scaled Q tile
        # TODO(synk): if a profile shows exposed DMA on this stream, raise only its depth
        # with pipeline_mode=pl.Buffered(3).
        pl.BlockSpec((1, TK, 2 * D), lambda b, qi, ki: (b, ki, 0)),    # packed K|V tile
        pl.BlockSpec((1, TQ, D), lambda b, qi, ki: (b, qi, 0)),        # x tile (residual)
    ]
    for p in flash_wparams:
        flash_specs.append(pl.BlockSpec(p.shape, lambda b, qi, ki: (0, 0)))

    flash_est = (2 * (TQ * D * bfb + TK * 2 * D * bfb + 2 * TQ * D * x.dtype.itemsize)
                 + 2 * (4 * D * D * bfb + 10 * D * f4)
                 + TQ * D * f4 + 2 * TQ * 128 * f4
                 + 4 * TQ * TK * f4)

    out = pl.pallas_call(
        make_flash_kernel(S, S_pad, TK, D),
        out_shape=jax.ShapeDtypeStruct((B, S_pad, D), x.dtype),
        grid_spec=pltpu.PrefetchScalarGridSpec(
            num_scalar_prefetch=0,
            grid=(B, n_q, n_kv),
            in_specs=flash_specs,
            out_specs=pl.BlockSpec((1, TQ, D), lambda b, qi, ki: (b, qi, 0)),
            scratch_shapes=[
                pltpu.VMEM((TQ, 1), jnp.float32),   # running max m
                pltpu.VMEM((TQ, 1), jnp.float32),   # running denom l
                pltpu.VMEM((TQ, D), jnp.float32),   # unnormalized output accumulator
            ],
        ),
        compiler_params=pltpu.CompilerParams(
            dimension_semantics=("parallel", "parallel", "arbitrary"),
            vmem_limit_bytes=_vmem_limit(flash_est),
        ),
    )(q_bf, kv_bf, x_p, *flash_wparams)

    return out if S_pad == S else out[:, :S]


def sattn_tblock(x, params, *, tq=128, tk=256):
    """x: (B, S, D) float32; params: ordered list of weight/bias arrays."""
    return _forward(x, tuple(params), tq=tq, tk=tk)


# --------------------------------------------------------------------------------------
# Parameters & pure-JAX reference
# --------------------------------------------------------------------------------------
def init_params(key, D):
    """Deterministic synthetic parameters (shapes implied by the module __init__).
    Matmul weights are stored in bf16 (MXU-native); biases / LN params stay f32."""
    ks = jax.random.split(key, 12)

    def lin_w(k, din, dout):
        w = jax.random.normal(k, (din, dout), jnp.float32) / math.sqrt(din)
        return w.astype(jnp.bfloat16)

    def lin_b(k, dout):
        return jax.random.normal(k, (1, dout), jnp.float32) * 0.02

    ones = jnp.ones((1, D), jnp.float32)
    zeros = jnp.zeros((1, D), jnp.float32)
    return [
        # trunk LayerNorm 1 & 2 (gamma, beta)
        ones, zeros, ones, zeros,
        # attention projections Wq,bq, Wk,bk, Wv,bv, Wo,bo
        lin_w(ks[0], D, D), lin_b(ks[1], D),
        lin_w(ks[2], D, D), lin_b(ks[3], D),
        lin_w(ks[4], D, D), lin_b(ks[5], D),
        lin_w(ks[6], D, D), lin_b(ks[7], D),
        # suffix LayerNorm (gamma, beta)
        ones, zeros,
        # suffix MLP: W1 (D,2D), b1 (1,2D), W2 (2D,D), b2 (1,D)
        lin_w(ks[8], D, 2 * D), lin_b(ks[9], 2 * D),
        lin_w(ks[10], 2 * D, D), lin_b(ks[11], D),
    ]


def reference(x, params):
    """Pure-JAX reference of the same forward pass (same bf16-matmul / f32-acc recipe,
    standard softmax, unfused LayerNorms) for correctness checking."""
    (g1, b1, g2, b2, wq, bq, wk, bk, wv, bv, wo, bo,
     g3, b3, w1, bf1, w2, bf2) = params
    f32, bf16 = jnp.float32, jnp.bfloat16

    def mm(a, w, b):
        return jnp.einsum("...d,de->...e", a.astype(bf16), w.astype(bf16),
                          preferred_element_type=f32) + b

    h = x.astype(f32)
    t = _layer_norm(h, g1, b1)
    t = _layer_norm(t, g2, b2)
    d = wq.shape[1]
    q = (mm(t, wq, bq) * (1.0 / math.sqrt(d))).astype(bf16)
    k = mm(t, wk, bk).astype(bf16)
    v = mm(t, wv, bv).astype(bf16)
    s = jnp.einsum("bqd,bkd->bqk", q, k, preferred_element_type=f32)
    p = jax.nn.softmax(s, axis=-1)
    a = jnp.einsum("bqk,bkd->bqd", p.astype(bf16), v, preferred_element_type=f32)
    a = mm(a, wo, bo)
    y = a + h
    z = _layer_norm(y, g3, b3)
    z = jnp.maximum(mm(z, w1, bf1), 0.0)
    z = mm(z, w2, bf2)
    return y + z


if __name__ == "__main__":
    key = jax.random.PRNGKey(0)
    kx, kp, kx2 = jax.random.split(key, 3)
    D = 128
    params = init_params(kp, D)

    # Test 1: multi-tile flash path (TQ=128, TK=256 -> n_q=4, n_kv=2 per batch).
    B, S = 2, 512
    x = jax.random.normal(kx, (B, S, D), jnp.float32)
    out = jax.block_until_ready(sattn_tblock(x, params))
    ref = reference(x, params)
    assert out.shape == (B, S, D)
    assert jnp.allclose(out, ref, atol=5e-2, rtol=5e-2), \
        f"mismatch vs JAX reference: {float(jnp.max(jnp.abs(out - ref)))}"

    # Test 2: ragged sequence (S=200 padded to 256 with masked keys), B=1 (B*n_q >= 2).
    B2, S2 = 1, 200
    x2 = jax.random.normal(kx2, (B2, S2, D), jnp.float32)
    out2 = jax.block_until_ready(sattn_tblock(x2, params))
    ref2 = reference(x2, params)
    assert out2.shape == (B2, S2, D)
    assert jnp.allclose(out2, ref2, atol=5e-2, rtol=5e-2), \
        f"ragged mismatch vs JAX reference: {float(jnp.max(jnp.abs(out2 - ref2)))}"

    print("KERNEL_OK")
</pallas_src>

<mosaic_0001>
module attributes {stable_mosaic.version = 11 : i64} {
  func.func @kernel(%arg0: i32, %arg1: i32, %arg2: memref<1x256x128xf32, #tpu.memory_space<vmem>>, %arg3: memref<1x128xf32, #tpu.memory_space<vmem>>, %arg4: memref<1x128xf32, #tpu.memory_space<vmem>>, %arg5: memref<1x128xf32, #tpu.memory_space<vmem>>, %arg6: memref<1x128xf32, #tpu.memory_space<vmem>>, %arg7: memref<128x384xbf16, #tpu.memory_space<vmem>>, %arg8: memref<1x384xf32, #tpu.memory_space<vmem>>, %arg9: memref<1x256x128xbf16, #tpu.memory_space<vmem>>, %arg10: memref<1x256x256xbf16, #tpu.memory_space<vmem>>) attributes {dimension_semantics = [#tpu.dimension_semantics<parallel>, #tpu.dimension_semantics<parallel>], iteration_bounds = array<i64: 2, 2>, scalar_prefetch = 0 : i64, scratch_operands = 0 : i64, tpu.core_type = #tpu.core_type<tc>, window_params = [{transform_indices = @transform_0, window_bounds = array<i64: 1, 256, 128>}, {pipeline_mode = #tpu.pipeline_mode<synchronous>, transform_indices = @transform_1, window_bounds = array<i64: 1, 128>}, {pipeline_mode = #tpu.pipeline_mode<synchronous>, transform_indices = @transform_2, window_bounds = array<i64: 1, 128>}, {pipeline_mode = #tpu.pipeline_mode<synchronous>, transform_indices = @transform_3, window_bounds = array<i64: 1, 128>}, {pipeline_mode = #tpu.pipeline_mode<synchronous>, transform_indices = @transform_4, window_bounds = array<i64: 1, 128>}, {pipeline_mode = #tpu.pipeline_mode<synchronous>, transform_indices = @transform_5, window_bounds = array<i64: 128, 384>}, {pipeline_mode = #tpu.pipeline_mode<synchronous>, transform_indices = @transform_6, window_bounds = array<i64: 1, 384>}, {transform_indices = @transform_7, window_bounds = array<i64: 1, 256, 128>}, {transform_indices = @transform_8, window_bounds = array<i64: 1, 256, 256>}]} {
    %c0 = arith.constant 0 : index
    %c0_0 = arith.constant 0 : index
    %c0_1 = arith.constant 0 : index
    %0 = vector.load %arg2[%c0, %c0_0, %c0_1] : memref<1x256x128xf32, #tpu.memory_space<vmem>>, vector<1x256x128xf32>
    %1 = vector.shape_cast %0 : vector<1x256x128xf32> to vector<256x128xf32>
    %c0_2 = arith.constant 0 : index
    %c0_3 = arith.constant 0 : index
    %2 = vector.load %arg3[%c0_2, %c0_3] : memref<1x128xf32, #tpu.memory_space<vmem>>, vector<1x128xf32>
    %c0_4 = arith.constant 0 : index
    %c0_5 = arith.constant 0 : index
    %3 = vector.load %arg4[%c0_4, %c0_5] : memref<1x128xf32, #tpu.memory_space<vmem>>, vector<1x128xf32>
    %c0_6 = arith.constant 0 : index
    %c0_7 = arith.constant 0 : index
    %4 = vector.load %arg5[%c0_6, %c0_7] : memref<1x128xf32, #tpu.memory_space<vmem>>, vector<1x128xf32>
    %c0_8 = arith.constant 0 : index
    %c0_9 = arith.constant 0 : index
    %5 = vector.load %arg6[%c0_8, %c0_9] : memref<1x128xf32, #tpu.memory_space<vmem>>, vector<1x128xf32>
    %cst = arith.constant dense<0.000000e+00> : vector<256xf32>
    %6 = vector.multi_reduction <add>, %1, %cst [1] : vector<256x128xf32> to vector<256xf32>
    %7 = vector.shape_cast %6 : vector<256xf32> to vector<256x1xf32>
    %cst_10 = arith.constant 1.280000e+02 : f32
    %8 = vector.broadcast %cst_10 : f32 to vector<256x1xf32>
    %9 = arith.divf %7, %8 : vector<256x1xf32>
    %10 = vector.broadcast %9 : vector<256x1xf32> to vector<256x128xf32>
    %11 = arith.subf %1, %10 : vector<256x128xf32>
    %12 = arith.mulf %11, %11 : vector<256x128xf32>
    %cst_11 = arith.constant dense<0.000000e+00> : vector<256xf32>
    %13 = vector.multi_reduction <add>, %12, %cst_11 [1] : vector<256x128xf32> to vector<256xf32>
    %14 = vector.shape_cast %13 : vector<256xf32> to vector<256x1xf32>
    %cst_12 = arith.constant 1.280000e+02 : f32
    %15 = vector.broadcast %cst_12 : f32 to vector<256x1xf32>
    %16 = arith.divf %14, %15 : vector<256x1xf32>
    %17 = vector.broadcast %9 : vector<256x1xf32> to vector<256x128xf32>
    %18 = arith.subf %1, %17 : vector<256x128xf32>
    %cst_13 = arith.constant 9.99999974E-6 : f32
    %19 = vector.broadcast %cst_13 : f32 to vector<256x1xf32>
    %20 = arith.addf %16, %19 : vector<256x1xf32>
    %21 = math.rsqrt %20 : vector<256x1xf32>
    %22 = vector.broadcast %21 : vector<256x1xf32> to vector<256x128xf32>
    %23 = arith.mulf %18, %22 : vector<256x128xf32>
    %24 = vector.broadcast %2 : vector<1x128xf32> to vector<256x128xf32>
    %25 = arith.mulf %23, %24 : vector<256x128xf32>
    %cst_14 = arith.constant dense<0.000000e+00> : vector<256xf32>
    %26 = vector.multi_reduction <add>, %25, %cst_14 [1] : vector<256x128xf32> to vector<256xf32>
    %27 = vector.shape_cast %26 : vector<256xf32> to vector<256x1xf32>
    %cst_15 = arith.constant 1.280000e+02 : f32
    %28 = vector.broadcast %cst_15 : f32 to vector<256x1xf32>
    %29 = arith.divf %27, %28 : vector<256x1xf32>
    %cst_16 = arith.constant dense<0.000000e+00> : vector<1xf32>
    %30 = vector.multi_reduction <add>, %3, %cst_16 [1] : vector<1x128xf32> to vector<1xf32>
    %31 = vector.shape_cast %30 : vector<1xf32> to vector<1x1xf32>
    %cst_17 = arith.constant 1.280000e+02 : f32
    %32 = vector.broadcast %cst_17 : f32 to vector<1x1xf32>
    %33 = arith.divf %31, %32 : vector<1x1xf32>
    %34 = vector.broadcast %33 : vector<1x1xf32> to vector<256x1xf32>
    %35 = arith.addf %29, %34 : vector<256x1xf32>
    %36 = vector.broadcast %3 : vector<1x128xf32> to vector<256x128xf32>
    %37 = arith.addf %25, %36 : vector<256x128xf32>
    %38 = vector.broadcast %35 : vector<256x1xf32> to vector<256x128xf32>
    %39 = arith.subf %37, %38 : vector<256x128xf32>
    %40 = arith.mulf %39, %39 : vector<256x128xf32>
    %cst_18 = arith.constant dense<0.000000e+00> : vector<256xf32>
    %41 = vector.multi_reduction <add>, %40, %cst_18 [1] : vector<256x128xf32> to vector<256xf32>
    %42 = vector.shape_cast %41 : vector<256xf32> to vector<256x1xf32>
    %cst_19 = arith.constant 1.280000e+02 : f32
    %43 = vector.broadcast %cst_19 : f32 to vector<256x1xf32>
    %44 = arith.divf %42, %43 : vector<256x1xf32>
    %cst_20 = arith.constant 9.99999974E-6 : f32
    %45 = vector.broadcast %cst_20 : f32 to vector<256x1xf32>
    %46 = arith.addf %44, %45 : vector<256x1xf32>
    %47 = math.rsqrt %46 : vector<256x1xf32>
    %48 = vector.broadcast %47 : vector<256x1xf32> to vector<256x128xf32>
    %49 = arith.mulf %39, %48 : vector<256x128xf32>
    %50 = vector.broadcast %4 : vector<1x128xf32> to vector<256x128xf32>
    %51 = arith.mulf %49, %50 : vector<256x128xf32>
    %52 = vector.broadcast %5 : vector<1x128xf32> to vector<256x128xf32>
    %53 = arith.addf %51, %52 : vector<256x128xf32>
    %54 = arith.truncf %53 : vector<256x128xf32> to vector<256x128xbf16>
    %c0_21 = arith.constant 0 : index
    %c0_22 = arith.constant 0 : index
    %55 = vector.load %arg7[%c0_21, %c0_22] : memref<128x384xbf16, #tpu.memory_space<vmem>>, vector<128x384xbf16>
    %cst_23 = arith.constant dense<0.000000e+00> : vector<256x384xf32>
    %56 = tpu.matmul %54, %55, %cst_23 {dimension_numbers = #tpu.dot_dimension_numbers<[1], [0], [0], [1], [0, 0, 1, 1], [], []>} : vector<256x128xbf16>, vector<128x384xbf16>, vector<256x384xf32> -> vector<256x384xf32>
    %c0_24 = arith.constant 0 : index
    %c0_25 = arith.constant 0 : index
    %57 = vector.load %arg8[%c0_24, %c0_25] : memref<1x384xf32, #tpu.memory_space<vmem>>, vector<1x384xf32>
    %58 = vector.broadcast %57 : vector<1x384xf32> to vector<256x384xf32>
    %59 = arith.addf %56, %58 : vector<256x384xf32>
    %60 = vector.extract_strided_slice %59 {offsets = [0, 0], sizes = [256, 128], strides = [1, 1]} : vector<256x384xf32> to vector<256x128xf32>
    %cst_26 = arith.constant 0.0883883461 : f32
    %61 = vector.broadcast %cst_26 : f32 to vector<256x128xf32>
    %62 = arith.mulf %60, %61 : vector<256x128xf32>
    %63 = arith.truncf %62 : vector<256x128xf32> to vector<256x128xbf16>
    %c0_27 = arith.constant 0 : index
    %c0_28 = arith.constant 0 : index
    %c0_29 = arith.constant 0 : index
    %64 = vector.load %arg9[%c0_27, %c0_28, %c0_29] : memref<1x256x128xbf16, #tpu.memory_space<vmem>>, vector<1x256x128xbf16>
    %65 = vector.shape_cast %64 : vector<1x256x128xbf16> to vector<256x128xbf16>
    %66 = vector.shape_cast %63 : vector<256x128xbf16> to vector<1x256x128xbf16>
    tpu.vector_store %arg9[%c0_27, %c0_28, %c0_29], %66 {strides = array<i32>} : memref<1x256x128xbf16, #tpu.memory_space<vmem>>, vector<1x256x128xbf16>,
    %67 = vector.extract_strided_slice %59 {offsets = [0, 128], sizes = [256, 256], strides = [1, 1]} : vector<256x384xf32> to vector<256x256xf32>
    %68 = arith.truncf %67 : vector<256x256xf32> to vector<256x256xbf16>
    %c0_30 = arith.constant 0 : index
    %c0_31 = arith.constant 0 : index
    %c0_32 = arith.constant 0 : index
    %69 = vector.load %arg10[%c0_30, %c0_31, %c0_32] : memref<1x256x256xbf16, #tpu.memory_space<vmem>>, vector<1x256x256xbf16>
    %70 = vector.shape_cast %69 : vector<1x256x256xbf16> to vector<256x256xbf16>
    %71 = vector.shape_cast %68 : vector<256x256xbf16> to vector<1x256x256xbf16>
    tpu.vector_store %arg10[%c0_30, %c0_31, %c0_32], %71 {strides = array<i32>} : memref<1x256x256xbf16, #tpu.memory_space<vmem>>, vector<1x256x256xbf16>,
    return
  }
  func.func @transform_0(%arg0: i32, %arg1: i32) -> (i32, i32, i32) {
    %c0_i32 = arith.constant 0 : i32
    %c0_i32_0 = arith.constant 0 : i32
    return %arg0, %arg1, %c0_i32 : i32, i32, i32
  }
  func.func @transform_1(%arg0: i32, %arg1: i32) -> (i32, i32) {
    %c0_i32 = arith.constant 0 : i32
    %c0_i32_0 = arith.constant 0 : i32
    %c0_i32_1 = arith.constant 0 : i32
    return %c0_i32, %c0_i32_0 : i32, i32
  }
  func.func @transform_2(%arg0: i32, %arg1: i32) -> (i32, i32) {
    %c0_i32 = arith.constant 0 : i32
    %c0_i32_0 = arith.constant 0 : i32
    %c0_i32_1 = arith.constant 0 : i32
    return %c0_i32, %c0_i32_0 : i32, i32
  }
  func.func @transform_3(%arg0: i32, %arg1: i32) -> (i32, i32) {
    %c0_i32 = arith.constant 0 : i32
    %c0_i32_0 = arith.constant 0 : i32
    %c0_i32_1 = arith.constant 0 : i32
    return %c0_i32, %c0_i32_0 : i32, i32
  }
  func.func @transform_4(%arg0: i32, %arg1: i32) -> (i32, i32) {
    %c0_i32 = arith.constant 0 : i32
    %c0_i32_0 = arith.constant 0 : i32
    %c0_i32_1 = arith.constant 0 : i32
    return %c0_i32, %c0_i32_0 : i32, i32
  }
  func.func @transform_5(%arg0: i32, %arg1: i32) -> (i32, i32) {
    %c0_i32 = arith.constant 0 : i32
    %c0_i32_0 = arith.constant 0 : i32
    %c0_i32_1 = arith.constant 0 : i32
    return %c0_i32, %c0_i32_0 : i32, i32
  }
  func.func @transform_6(%arg0: i32, %arg1: i32) -> (i32, i32) {
    %c0_i32 = arith.constant 0 : i32
    %c0_i32_0 = arith.constant 0 : i32
    %c0_i32_1 = arith.constant 0 : i32
    return %c0_i32, %c0_i32_0 : i32, i32
  }
  func.func @transform_7(%arg0: i32, %arg1: i32) -> (i32, i32, i32) {
    %c0_i32 = arith.constant 0 : i32
    %c0_i32_0 = arith.constant 0 : i32
    return %arg0, %arg1, %c0_i32 : i32, i32, i32
  }
  func.func @transform_8(%arg0: i32, %arg1: i32) -> (i32, i32, i32) {
    %c0_i32 = arith.constant 0 : i32
    %c0_i32_0 = arith.constant 0 : i32
    return %arg0, %arg1, %c0_i32 : i32, i32, i32
  }
}

module attributes {stable_mosaic.version = 11 : i64} {
  func.func @kernel(%arg0: i32, %arg1: i32, %arg2: i32, %arg3: memref<1x128x128xbf16, #tpu.memory_space<vmem>>, %arg4: memref<1x256x256xbf16, #tpu.memory_space<vmem>>, %arg5: memref<1x128x128xf32, #tpu.memory_space<vmem>>, %arg6: memref<1x128xf32, #tpu.memory_space<vmem>>, %arg7: memref<1x128xf32, #tpu.memory_space<vmem>>, %arg8: memref<128x128xbf16, #tpu.memory_space<vmem>>, %arg9: memref<1x128xf32, #tpu.memory_space<vmem>>, %arg10: memref<128x256xbf16, #tpu.memory_space<vmem>>, %arg11: memref<1x256xf32, #tpu.memory_space<vmem>>, %arg12: memref<256x128xbf16, #tpu.memory_space<vmem>>, %arg13: memref<1x128xf32, #tpu.memory_space<vmem>>, %arg14: memref<1x128x128xf32, #tpu.memory_space<vmem>>, %arg15: memref<128x1xf32, #tpu.memory_space<vmem>>, %arg16: memref<128x1xf32, #tpu.memory_space<vmem>>, %arg17: memref<128x128xf32, #tpu.memory_space<vmem>>) attributes {dimension_semantics = [#tpu.dimension_semantics<parallel>, #tpu.dimension_semantics<parallel>, #tpu.dimension_semantics<arbitrary>], iteration_bounds = array<i64: 2, 4, 2>, scalar_prefetch = 0 : i64, scratch_operands = 3 : i64, tpu.core_type = #tpu.core_type<tc>, window_params = [{transform_indices = @transform_0, window_bounds = array<i64: 1, 128, 128>}, {transform_indices = @transform_1, window_bounds = array<i64: 1, 256, 256>}, {transform_indices = @transform_2, window_bounds = array<i64: 1, 128, 128>}, {pipeline_mode = #tpu.pipeline_mode<synchronous>, transform_indices = @transform_3, window_bounds = array<i64: 1, 128>}, {pipeline_mode = #tpu.pipeline_mode<synchronous>, transform_indices = @transform_4, window_bounds = array<i64: 1, 128>}, {pipeline_mode = #tpu.pipeline_mode<synchronous>, transform_indices = @transform_5, window_bounds = array<i64: 128, 128>}, {pipeline_mode = #tpu.pipeline_mode<synchronous>, transform_indices = @transform_6, window_bounds = array<i64: 1, 128>}, {pipeline_mode = #tpu.pipeline_mode<synchronous>, transform_indices = @transform_7, window_bounds = array<i64: 128, 256>}, {pipeline_mode = #tpu.pipeline_mode<synchronous>, transform_indices = @transform_8, window_bounds = array<i64: 1, 256>}, {pipeline_mode = #tpu.pipeline_mode<synchronous>, transform_indices = @transform_9, window_bounds = array<i64: 256, 128>}, {pipeline_mode = #tpu.pipeline_mode<synchronous>, transform_indices = @transform_10, window_bounds = array<i64: 1, 128>}, {transform_indices = @transform_11, window_bounds = array<i64: 1, 128, 128>}]} {
    %c0_i32 = arith.constant 0 : i32
    %0 = arith.cmpi eq, %arg2, %c0_i32 : i32
    %1 = arith.extui %0 : i1 to i32
    %c0_i32_0 = arith.constant 0 : i32
    %2 = arith.cmpi ne, %1, %c0_i32_0 : i32
    scf.if %2 {
      %cst_22 = arith.constant 0xFF800000 : f32
      %36 = vector.broadcast %cst_22 : f32 to vector<128x1xf32>
      %c0_23 = arith.constant 0 : index
      %c0_24 = arith.constant 0 : index
      %37 = vector.load %arg15[%c0_23, %c0_24] : memref<128x1xf32, #tpu.memory_space<vmem>>, vector<128x1xf32>
      tpu.vector_store %arg15[%c0_23, %c0_24], %36 {strides = array<i32>} : memref<128x1xf32, #tpu.memory_space<vmem>>, vector<128x1xf32>,
      %cst_25 = arith.constant 0.000000e+00 : f32
      %38 = vector.broadcast %cst_25 : f32 to vector<128x1xf32>
      %c0_26 = arith.constant 0 : index
      %c0_27 = arith.constant 0 : index
      %39 = vector.load %arg16[%c0_26, %c0_27] : memref<128x1xf32, #tpu.memory_space<vmem>>, vector<128x1xf32>
      tpu.vector_store %arg16[%c0_26, %c0_27], %38 {strides = array<i32>} : memref<128x1xf32, #tpu.memory_space<vmem>>, vector<128x1xf32>,
      %cst_28 = arith.constant 0.000000e+00 : f32
      %40 = vector.broadcast %cst_28 : f32 to vector<128x128xf32>
      %c0_29 = arith.constant 0 : index
      %c0_30 = arith.constant 0 : index
      %41 = vector.load %arg17[%c0_29, %c0_30] : memref<128x128xf32, #tpu.memory_space<vmem>>, vector<128x128xf32>
      tpu.vector_store %arg17[%c0_29, %c0_30], %40 {strides = array<i32>} : memref<128x128xf32, #tpu.memory_space<vmem>>, vector<128x128xf32>,
    } else {
    }
    %c0 = arith.constant 0 : index
    %c0_1 = arith.constant 0 : index
    %c0_2 = arith.constant 0 : index
    %3 = vector.load %arg4[%c0, %c0_1, %c0_2] : memref<1x256x256xbf16, #tpu.memory_space<vmem>>, vector<1x256x256xbf16>
    %4 = vector.shape_cast %3 : vector<1x256x256xbf16> to vector<256x256xbf16>
    %5 = vector.extract_strided_slice %4 {offsets = [0, 0], sizes = [256, 128], strides = [1, 1]} : vector<256x256xbf16> to vector<256x128xbf16>
    %6 = vector.extract_strided_slice %4 {offsets = [0, 128], sizes = [256, 128], strides = [1, 1]} : vector<256x256xbf16> to vector<256x128xbf16>
    %c0_3 = arith.constant 0 : index
    %c0_4 = arith.constant 0 : index
    %c0_5 = arith.constant 0 : index
    %7 = vector.load %arg3[%c0_3, %c0_4, %c0_5] : memref<1x128x128xbf16, #tpu.memory_space<vmem>>, vector<1x128x128xbf16>
    %8 = vector.shape_cast %7 : vector<1x128x128xbf16> to vector<128x128xbf16>
    %cst = arith.constant dense<0.000000e+00> : vector<128x256xf32>
    %9 = tpu.matmul %8, %5, %cst {dimension_numbers = #tpu.dot_dimension_numbers<[1], [1], [0], [0], [0, 0, 1, 0], [], []>} : vector<128x128xbf16>, vector<256x128xbf16>, vector<128x256xf32> -> vector<128x256xf32>
    %c0_6 = arith.constant 0 : index
    %c0_7 = arith.constant 0 : index
    %10 = vector.load %arg15[%c0_6, %c0_7] : memref<128x1xf32, #tpu.memory_space<vmem>>, vector<128x1xf32>
    %cst_8 = arith.constant dense<0xFF800000> : vector<128xf32>
    %11 = vector.multi_reduction <maximumf>, %9, %cst_8 [1] : vector<128x256xf32> to vector<128xf32>
    %12 = vector.shape_cast %11 : vector<128xf32> to vector<128x1xf32>
    %13 = arith.maximumf %10, %12 : vector<128x1xf32>
    %14 = arith.subf %10, %13 : vector<128x1xf32>
    %15 = math.exp %14 : vector<128x1xf32>
    %16 = vector.broadcast %13 : vector<128x1xf32> to vector<128x256xf32>
    %17 = arith.subf %9, %16 : vector<128x256xf32>
    %18 = math.exp %17 : vector<128x256xf32>
    %c0_9 = arith.constant 0 : index
    %c0_10 = arith.constant 0 : index
    %19 = vector.load %arg16[%c0_9, %c0_10] : memref<128x1xf32, #tpu.memory_space<vmem>>, vector<128x1xf32>
    %20 = arith.mulf %15, %19 : vector<128x1xf32>
    %cst_11 = arith.constant dense<0.000000e+00> : vector<128xf32>
    %21 = vector.multi_reduction <add>, %18, %cst_11 [1] : vector<128x256xf32> to vector<128xf32>
    %22 = vector.shape_cast %21 : vector<128xf32> to vector<128x1xf32>
    %23 = arith.addf %20, %22 : vector<128x1xf32>
    %c0_12 = arith.constant 0 : index
    %c0_13 = arith.constant 0 : index
    %24 = vector.load %arg16[%c0_12, %c0_13] : memref<128x1xf32, #tpu.memory_space<vmem>>, vector<128x1xf32>
    tpu.vector_store %arg16[%c0_12, %c0_13], %23 {strides = array<i32>} : memref<128x1xf32, #tpu.memory_space<vmem>>, vector<128x1xf32>,
    %c0_14 = arith.constant 0 : index
    %c0_15 = arith.constant 0 : index
    %25 = vector.load %arg17[%c0_14, %c0_15] : memref<128x128xf32, #tpu.memory_space<vmem>>, vector<128x128xf32>
    %26 = vector.broadcast %15 : vector<128x1xf32> to vector<128x128xf32>
    %27 = arith.mulf %26, %25 : vector<128x128xf32>
    %28 = arith.truncf %18 : vector<128x256xf32> to vector<128x256xbf16>
    %cst_16 = arith.constant dense<0.000000e+00> : vector<128x128xf32>
    %29 = tpu.matmul %28, %6, %cst_16 {dimension_numbers = #tpu.dot_dimension_numbers<[1], [0], [0], [1], [0, 0, 1, 1], [], []>} : vector<128x256xbf16>, vector<256x128xbf16>, vector<128x128xf32> -> vector<128x128xf32>
    %30 = arith.addf %27, %29 : vector<128x128xf32>
    %c0_17 = arith.constant 0 : index
    %c0_18 = arith.constant 0 : index
    %31 = vector.load %arg17[%c0_17, %c0_18] : memref<128x128xf32, #tpu.memory_space<vmem>>, vector<128x128xf32>
    tpu.vector_store %arg17[%c0_17, %c0_18], %30 {strides = array<i32>} : memref<128x128xf32, #tpu.memory_space<vmem>>, vector<128x128xf32>,
    %c0_19 = arith.constant 0 : index
    %c0_20 = arith.constant 0 : index
    %32 = vector.load %arg15[%c0_19, %c0_20] : memref<128x1xf32, #tpu.memory_space<vmem>>, vector<128x1xf32>
    tpu.vector_store %arg15[%c0_19, %c0_20], %13 {strides = array<i32>} : memref<128x1xf32, #tpu.memory_space<vmem>>, vector<128x1xf32>,
    %c1_i32 = arith.constant 1 : i32
    %33 = arith.cmpi eq, %arg2, %c1_i32 : i32
    %34 = arith.extui %33 : i1 to i32
    %c0_i32_21 = arith.constant 0 : i32
    %35 = arith.cmpi ne, %34, %c0_i32_21 : i32
    scf.if %35 {
      %c0_22 = arith.constant 0 : index
      %c0_23 = arith.constant 0 : index
      %36 = vector.load %arg17[%c0_22, %c0_23] : memref<128x128xf32, #tpu.memory_space<vmem>>, vector<128x128xf32>
      %c0_24 = arith.constant 0 : index
      %c0_25 = arith.constant 0 : index
      %37 = vector.load %arg16[%c0_24, %c0_25] : memref<128x1xf32, #tpu.memory_space<vmem>>, vector<128x1xf32>
      %38 = vector.broadcast %37 : vector<128x1xf32> to vector<128x128xf32>
      %39 = arith.divf %36, %38 : vector<128x128xf32>
      %40 = arith.truncf %39 : vector<128x128xf32> to vector<128x128xbf16>
      %c0_26 = arith.constant 0 : index
      %c0_27 = arith.constant 0 : index
      %41 = vector.load %arg8[%c0_26, %c0_27] : memref<128x128xbf16, #tpu.memory_space<vmem>>, vector<128x128xbf16>
      %cst_28 = arith.constant dense<0.000000e+00> : vector<128x128xf32>
      %42 = tpu.matmul %40, %41, %cst_28 {dimension_numbers = #tpu.dot_dimension_numbers<[1], [0], [0], [1], [0, 0, 1, 1], [], []>} : vector<128x128xbf16>, vector<128x128xbf16>, vector<128x128xf32> -> vector<128x128xf32>
      %c0_29 = arith.constant 0 : index
      %c0_30 = arith.constant 0 : index
      %43 = vector.load %arg9[%c0_29, %c0_30] : memref<1x128xf32, #tpu.memory_space<vmem>>, vector<1x128xf32>
      %44 = vector.broadcast %43 : vector<1x128xf32> to vector<128x128xf32>
      %45 = arith.addf %42, %44 : vector<128x128xf32>
      %c0_31 = arith.constant 0 : index
      %c0_32 = arith.constant 0 : index
      %c0_33 = arith.constant 0 : index
      %46 = vector.load %arg5[%c0_31, %c0_32, %c0_33] : memref<1x128x128xf32, #tpu.memory_space<vmem>>, vector<1x128x128xf32>
      %47 = vector.shape_cast %46 : vector<1x128x128xf32> to vector<128x128xf32>
      %48 = arith.addf %45, %47 : vector<128x128xf32>
      %c0_34 = arith.constant 0 : index
      %c0_35 = arith.constant 0 : index
      %49 = vector.load %arg6[%c0_34, %c0_35] : memref<1x128xf32, #tpu.memory_space<vmem>>, vector<1x128xf32>
      %c0_36 = arith.constant 0 : index
      %c0_37 = arith.constant 0 : index
      %50 = vector.load %arg7[%c0_36, %c0_37] : memref<1x128xf32, #tpu.memory_space<vmem>>, vector<1x128xf32>
      %cst_38 = arith.constant dense<0.000000e+00> : vector<128xf32>
      %51 = vector.multi_reduction <add>, %48, %cst_38 [1] : vector<128x128xf32> to vector<128xf32>
      %52 = vector.shape_cast %51 : vector<128xf32> to vector<128x1xf32>
      %cst_39 = arith.constant 1.280000e+02 : f32
      %53 = vector.broadcast %cst_39 : f32 to vector<128x1xf32>
      %54 = arith.divf %52, %53 : vector<128x1xf32>
      %55 = vector.broadcast %54 : vector<128x1xf32> to vector<128x128xf32>
      %56 = arith.subf %48, %55 : vector<128x128xf32>
      %57 = arith.mulf %56, %56 : vector<128x128xf32>
      %cst_40 = arith.constant dense<0.000000e+00> : vector<128xf32>
      %58 = vector.multi_reduction <add>, %57, %cst_40 [1] : vector<128x128xf32> to vector<128xf32>
      %59 = vector.shape_cast %58 : vector<128xf32> to vector<128x1xf32>
      %cst_41 = arith.constant 1.280000e+02 : f32
      %60 = vector.broadcast %cst_41 : f32 to vector<128x1xf32>
      %61 = arith.divf %59, %60 : vector<128x1xf32>
      %62 = vector.broadcast %54 : vector<128x1xf32> to vector<128x128xf32>
      %63 = arith.subf %48, %62 : vector<128x128xf32>
      %cst_42 = arith.constant 9.99999974E-6 : f32
      %64 = vector.broadcast %cst_42 : f32 to vector<128x1xf32>
      %65 = arith.addf %61, %64 : vector<128x1xf32>
      %66 = math.rsqrt %65 : vector<128x1xf32>
      %67 = vector.broadcast %66 : vector<128x1xf32> to vector<128x128xf32>
      %68 = arith.mulf %63, %67 : vector<128x128xf32>
      %69 = vector.broadcast %49 : vector<1x128xf32> to vector<128x128xf32>
      %70 = arith.mulf %68, %69 : vector<128x128xf32>
      %71 = vector.broadcast %50 : vector<1x128xf32> to vector<128x128xf32>
      %72 = arith.addf %70, %71 : vector<128x128xf32>
      %73 = arith.truncf %72 : vector<128x128xf32> to vector<128x128xbf16>
      %c0_43 = arith.constant 0 : index
      %c0_44 = arith.constant 0 : index
      %74 = vector.load %arg10[%c0_43, %c0_44] : memref<128x256xbf16, #tpu.memory_space<vmem>>, vector<128x256xbf16>
      %cst_45 = arith.constant dense<0.000000e+00> : vector<128x256xf32>
      %75 = tpu.matmul %73, %74, %cst_45 {dimension_numbers = #tpu.dot_dimension_numbers<[1], [0], [0], [1], [0, 0, 1, 1], [], []>} : vector<128x128xbf16>, vector<128x256xbf16>, vector<128x256xf32> -> vector<128x256xf32>
      %c0_46 = arith.constant 0 : index
      %c0_47 = arith.constant 0 : index
      %76 = vector.load %arg11[%c0_46, %c0_47] : memref<1x256xf32, #tpu.memory_space<vmem>>, vector<1x256xf32>
      %77 = vector.broadcast %76 : vector<1x256xf32> to vector<128x256xf32>
      %78 = arith.addf %75, %77 : vector<128x256xf32>
      %cst_48 = arith.constant 0.000000e+00 : f32
      %79 = vector.broadcast %cst_48 : f32 to vector<128x256xf32>
      %80 = arith.maximumf %78, %79 : vector<128x256xf32>
      %81 = arith.truncf %80 : vector<128x256xf32> to vector<128x256xbf16>
      %c0_49 = arith.constant 0 : index
      %c0_50 = arith.constant 0 : index
      %82 = vector.load %arg12[%c0_49, %c0_50] : memref<256x128xbf16, #tpu.memory_space<vmem>>, vector<256x128xbf16>
      %cst_51 = arith.constant dense<0.000000e+00> : vector<128x128xf32>
      %83 = tpu.matmul %81, %82, %cst_51 {dimension_numbers = #tpu.dot_dimension_numbers<[1], [0], [0], [1], [0, 0, 1, 1], [], []>} : vector<128x256xbf16>, vector<256x128xbf16>, vector<128x128xf32> -> vector<128x128xf32>
      %c0_52 = arith.constant 0 : index
      %c0_53 = arith.constant 0 : index
      %84 = vector.load %arg13[%c0_52, %c0_53] : memref<1x128xf32, #tpu.memory_space<vmem>>, vector<1x128xf32>
      %85 = vector.broadcast %84 : vector<1x128xf32> to vector<128x128xf32>
      %86 = arith.addf %83, %85 : vector<128x128xf32>
      %87 = arith.addf %48, %86 : vector<128x128xf32>
      %c0_54 = arith.constant 0 : index
      %c0_55 = arith.constant 0 : index
      %c0_56 = arith.constant 0 : index
      %88 = vector.load %arg14[%c0_54, %c0_55, %c0_56] : memref<1x128x128xf32, #tpu.memory_space<vmem>>, vector<1x128x128xf32>
      %89 = vector.shape_cast %88 : vector<1x128x128xf32> to vector<128x128xf32>
      %90 = vector.shape_cast %87 : vector<128x128xf32> to vector<1x128x128xf32>
      tpu.vector_store %arg14[%c0_54, %c0_55, %c0_56], %90 {strides = array<i32>} : memref<1x128x128xf32, #tpu.memory_space<vmem>>, vector<1x128x128xf32>,
    } else {
    }
    return
  }
  func.func @transform_0(%arg0: i32, %arg1: i32, %arg2: i32) -> (i32, i32, i32) {
    %c0_i32 = arith.constant 0 : i32
    %c0_i32_0 = arith.constant 0 : i32
    return %arg0, %arg1, %c0_i32 : i32, i32, i32
  }
  func.func @transform_1(%arg0: i32, %arg1: i32, %arg2: i32) -> (i32, i32, i32) {
    %c0_i32 = arith.constant 0 : i32
    %c0_i32_0 = arith.constant 0 : i32
    return %arg0, %arg2, %c0_i32 : i32, i32, i32
  }
  func.func @transform_2(%arg0: i32, %arg1: i32, %arg2: i32) -> (i32, i32, i32) {
    %c0_i32 = arith.constant 0 : i32
    %c0_i32_0 = arith.constant 0 : i32
    return %arg0, %arg1, %c0_i32 : i32, i32, i32
  }
  func.func @transform_3(%arg0: i32, %arg1: i32, %arg2: i32) -> (i32, i32) {
    %c0_i32 = arith.constant 0 : i32
    %c0_i32_0 = arith.constant 0 : i32
    %c0_i32_1 = arith.constant 0 : i32
    return %c0_i32, %c0_i32_0 : i32, i32
  }
  func.func @transform_4(%arg0: i32, %arg1: i32, %arg2: i32) -> (i32, i32) {
    %c0_i32 = arith.constant 0 : i32
    %c0_i32_0 = arith.constant 0 : i32
    %c0_i32_1 = arith.constant 0 : i32
    return %c0_i32, %c0_i32_0 : i32, i32
  }
  func.func @transform_5(%arg0: i32, %arg1: i32, %arg2: i32) -> (i32, i32) {
    %c0_i32 = arith.constant 0 : i32
    %c0_i32_0 = arith.constant 0 : i32
    %c0_i32_1 = arith.constant 0 : i32
    return %c0_i32, %c0_i32_0 : i32, i32
  }
  func.func @transform_6(%arg0: i32, %arg1: i32, %arg2: i32) -> (i32, i32) {
    %c0_i32 = arith.constant 0 : i32
    %c0_i32_0 = arith.constant 0 : i32
    %c0_i32_1 = arith.constant 0 : i32
    return %c0_i32, %c0_i32_0 : i32, i32
  }
  func.func @transform_7(%arg0: i32, %arg1: i32, %arg2: i32) -> (i32, i32) {
    %c0_i32 = arith.constant 0 : i32
    %c0_i32_0 = arith.constant 0 : i32
    %c0_i32_1 = arith.constant 0 : i32
    return %c0_i32, %c0_i32_0 : i32, i32
  }
  func.func @transform_8(%arg0: i32, %arg1: i32, %arg2: i32) -> (i32, i32) {
    %c0_i32 = arith.constant 0 : i32
    %c0_i32_0 = arith.constant 0 : i32
    %c0_i32_1 = arith.constant 0 : i32
    return %c0_i32, %c0_i32_0 : i32, i32
  }
  func.func @transform_9(%arg0: i32, %arg1: i32, %arg2: i32) -> (i32, i32) {
    %c0_i32 = arith.constant 0 : i32
    %c0_i32_0 = arith.constant 0 : i32
    %c0_i32_1 = arith.constant 0 : i32
    return %c0_i32, %c0_i32_0 : i32, i32
  }
  func.func @transform_10(%arg0: i32, %arg1: i32, %arg2: i32) -> (i32, i32) {
    %c0_i32 = arith.constant 0 : i32
    %c0_i32_0 = arith.constant 0 : i32
    %c0_i32_1 = arith.constant 0 : i32
    return %c0_i32, %c0_i32_0 : i32, i32
  }
  func.func @transform_11(%arg0: i32, %arg1: i32, %arg2: i32) -> (i32, i32, i32) {
    %c0_i32 = arith.constant 0 : i32
    %c0_i32_0 = arith.constant 0 : i32
    return %arg0, %arg1, %c0_i32 : i32, i32, i32
  }
}

</mosaic_0001>

<llo_original>
// kernel: _forward.2
$region0: #{_forward.2}
  #allocation0 [shape = 'u32[]', space=smem, size = 0x4, offset = 0x4, fixed_abs, tag = 'smem constant byte address 0x4 - core index']
  #allocation1 [shape = 'u32[144,128]{1,0:T(1,128)}', space=vmem, size = 0x12000, scoped, tag = 'internal scratch']
  %s0 = inlined_call_operand.hbm [shape: f32[2,512,128], index: 0, kind: input, shape index: {}]
  %s1 = inlined_call_operand.hbm [shape: f32[1,128], index: 1, kind: input, shape index: {}]
  %s2 = inlined_call_operand.hbm [shape: f32[1,128], index: 2, kind: input, shape index: {}]
  %s3 = inlined_call_operand.hbm [shape: f32[1,128], index: 3, kind: input, shape index: {}]
  %s4 = inlined_call_operand.hbm [shape: f32[1,128], index: 4, kind: input, shape index: {}]
  %s5 = inlined_call_operand.vmem [shape: bf16[128,384], index: 5, kind: input, shape index: {}]
  %s6 = inlined_call_operand.vmem [shape: f32[1,384], index: 6, kind: input, shape index: {}]
  %s7 = inlined_call_operand.vmem [shape: bf16[2,512,128], index: 7, kind: output, shape index: {0}]
  %s8 = inlined_call_operand.vmem [shape: bf16[2,512,256], index: 8, kind: output, shape index: {1}]
  %9 = xla_tuple %s7, %s8
  %s10 = sld [smem:[#allocation0]]
  $region89: #{_forward.2} parent=0
    _
  %s12 = ssub.s32 1, %s10
  %s13 = scalar_select 0, %s12, %s10
  $region1: #{_forward.2} parent=0
    #allocation2 [shape = 'u8[262144]{0}', space=vmem, size = 0x40000, scoped, tag = 'input window, operand 0']
    #allocation3 [shape = 's32[2]{0}', space=sflag, size = 0x8, scoped, tag = 'scoped memory for _forward.2']
    #allocation4 [shape = 'u8[512]{0}', space=vmem, size = 0x400, scoped, tag = 'input window, operand 1, single buffered']
    #allocation5 [shape = 's32[1]{0}', space=sflag, size = 0x4, scoped, tag = 'scoped memory for _forward.2']
    #allocation6 [shape = 'u8[512]{0}', space=vmem, size = 0x400, scoped, tag = 'input window, operand 2, single buffered']
    #allocation7 [shape = 'u8[512]{0}', space=vmem, size = 0x400, scoped, tag = 'input window, operand 3, single buffered']
    #allocation8 [shape = 's32[1]{0}', space=sflag, size = 0x4, scoped, tag = 'scoped memory for _forward.2']
    #allocation9 [shape = 'u8[512]{0}', space=vmem, size = 0x400, scoped, tag = 'input window, operand 4, single buffered']
    %14 = vsyncpa [#allocation3], 0
    %s15 = scalar_lea.sflag [#allocation3], 1
    %16 = vsyncpa %s15, 0
    %17 = vsyncpa [#allocation5], 0
    %18 = vsyncpa [#allocation8], 0
    loop: start=0, step=1, limit=6
    $region2: #{_forward.2} parent=1 // loop_pre_header
      _
    $region3: #{_forward.2} parent=1 // loop_header
      %s20 = sphi 0, %s24
      %p21 = scmp.ge.s32.totalorder %s20, 6
      %s27 = sphi 0, %s39
      %s28 = sphi 0, %s35
      %s29 = sphi 0, %s27
      %s30 = sphi 0, %s28
      %s31 = sphi 0, %s29
      %s32 = sphi 0, %s30
      %s44 = sphi 0, %s46
      %s47 = sphi 0, %s44
      %s48 = sphi 0, %s47
      %s64 = sphi 0, %s48
      %s68 = sphi 0, %s68
      %s70 = sphi 0, %s68
      %s71 = sphi 0, %s70
      %s85 = sphi 0, %s71
      %s89 = sphi 0, %s89
      %s91 = sphi 0, %s89
      %s92 = sphi 0, %s91
      %s106 = sphi 0, %s92
      %s110 = sphi 0, %s110
      %s112 = sphi 0, %s110
      %s113 = sphi 0, %s112
      %s127 = sphi 0, %s113
      %s131 = sphi 0, %s131
      %s133 = sphi 0, %s131
      %s134 = sphi 0, %s133
      %s148 = sphi 0, %s134
      %s152 = sphi 0, %s152
      %s154 = sphi 0, %s152
      %s155 = sphi 0, %s154
      %s169 = sphi 0, %s155
      %s173 = sphi 0, %s173
      %s175 = sphi 0, %s173
      %s176 = sphi 0, %s175
      %s190 = sphi 0, %s176
      %s198 = sphi 0, %s200
      %s201 = sphi 0, %s198
      %s202 = sphi 0, %s201
      %s218 = sphi 0, %s202
      %s226 = sphi 0, %s228
      %s229 = sphi 0, %s226
      %s230 = sphi 0, %s229
      %s246 = sphi 0, %s230
    $region4: #{_forward.2} parent=1 // loop_header_branch
      %23 = sbr.rel (%p21) target = $region8
    $region5: #{_forward.2} parent=1 // loop_body
      %s25 = ssub.s32 %s20, 1
      %s26 = ssub.s32 %s20, 2
      %s33 = sadd.s32 1, %s28
      %p34 = scmp.ge.s32.totalorder %s33, 2
      %s35 = scalar_select %p34, 0, %s33
      %s36 = sadd.s32 1, %s27
      %s37 = scalar_select %p34, %s36, %s27
      %p38 = scmp.ge.s32.totalorder %s37, 2
      %s39 = scalar_select %p38, 0, %s37
      %s40 = ssub.s32 %s27, %s39
      %s41 = ssub.s32 %s28, %s35
      %s42 = sor.u32 %s40, %s41
      %p43 = scmp.eq.s32.totalorder %s42, 0
      %s45 = sadd.s32 %s44, 1
      %s46 = scalar_select %p43, %s44, %s45
      %p49 = pneg %p43
      %p50 = scmp.eq.s32.totalorder %s20, 3
      %p51 = por %p49, %p50
      %p52 = scmp.ne.s32.totalorder %s44, %s47
      %p53 = scmp.eq.s32.totalorder %s20, 0
      %p54 = por %p52, %p53
      %p55 = scmp.ne.s32.totalorder %s44, %s47
      %p56 = scmp.eq.s32.totalorder %s25, 3
      %p57 = por %p55, %p56
      %p58 = scmp.ne.s32.totalorder %s47, %s48
      %p59 = scmp.eq.s32.totalorder %s25, 0
      %p60 = por %p58, %p59
      %p61 = scmp.ne.s32.totalorder %s47, %s48
      %p62 = scmp.eq.s32.totalorder %s26, 3
      %p63 = por %p61, %p62
      %p65 = scmp.ne.s32.totalorder %s48, %s64
      %p66 = scmp.eq.s32.totalorder %s26, 0
      %p67 = por %p65, %p66
      %s69 = sadd.s32 %s68, 1
      %p72 = scmp.eq.s32.totalorder %s20, 3
      %p73 = scmp.ne.s32.totalorder %s68, %s70
      %p74 = scmp.eq.s32.totalorder %s20, 0
      %p75 = por %p73, %p74
      %p76 = scmp.ne.s32.totalorder %s68, %s70
      %p77 = scmp.eq.s32.totalorder %s25, 3
      %p78 = por %p76, %p77
      %p79 = scmp.ne.s32.totalorder %s70, %s71
      %p80 = scmp.eq.s32.totalorder %s25, 0
      %p81 = por %p79, %p80
      %p82 = scmp.ne.s32.totalorder %s70, %s71
      %p83 = scmp.eq.s32.totalorder %s26, 3
      %p84 = por %p82, %p83
      %p86 = scmp.ne.s32.totalorder %s71, %s85
      %p87 = scmp.eq.s32.totalorder %s26, 0
      %p88 = por %p86, %p87
      %s90 = sadd.s32 %s89, 1
      %p93 = scmp.eq.s32.totalorder %s20, 3
      %p94 = scmp.ne.s32.totalorder %s89, %s91
      %p95 = scmp.eq.s32.totalorder %s20, 0
      %p96 = por %p94, %p95
      %p97 = scmp.ne.s32.totalorder %s89, %s91
      %p98 = scmp.eq.s32.totalorder %s25, 3
      %p99 = por %p97, %p98
      %p100 = scmp.ne.s32.totalorder %s91, %s92
      %p101 = scmp.eq.s32.totalorder %s25, 0
      %p102 = por %p100, %p101
      %p103 = scmp.ne.s32.totalorder %s91, %s92
      %p104 = scmp.eq.s32.totalorder %s26, 3
      %p105 = por %p103, %p104
      %p107 = scmp.ne.s32.totalorder %s92, %s106
      %p108 = scmp.eq.s32.totalorder %s26, 0
      %p109 = por %p107, %p108
      %s111 = sadd.s32 %s110, 1
      %p114 = scmp.eq.s32.totalorder %s20, 3
      %p115 = scmp.ne.s32.totalorder %s110, %s112
      %p116 = scmp.eq.s32.totalorder %s20, 0
      %p117 = por %p115, %p116
      %p118 = scmp.ne.s32.totalorder %s110, %s112
      %p119 = scmp.eq.s32.totalorder %s25, 3
      %p120 = por %p118, %p119
      %p121 = scmp.ne.s32.totalorder %s112, %s113
      %p122 = scmp.eq.s32.totalorder %s25, 0
      %p123 = por %p121, %p122
      %p124 = scmp.ne.s32.totalorder %s112, %s113
      %p125 = scmp.eq.s32.totalorder %s26, 3
      %p126 = por %p124, %p125
      %p128 = scmp.ne.s32.totalorder %s113, %s127
      %p129 = scmp.eq.s32.totalorder %s26, 0
      %p130 = por %p128, %p129
      %s132 = sadd.s32 %s131, 1
      %p135 = scmp.eq.s32.totalorder %s20, 3
      %p136 = scmp.ne.s32.totalorder %s131, %s133
      %p137 = scmp.eq.s32.totalorder %s20, 0
      %p138 = por %p136, %p137
      %p139 = scmp.ne.s32.totalorder %s131, %s133
      %p140 = scmp.eq.s32.totalorder %s25, 3
      %p141 = por %p139, %p140
      %p142 = scmp.ne.s32.totalorder %s133, %s134
      %p143 = scmp.eq.s32.totalorder %s25, 0
      %p144 = por %p142, %p143
      %p145 = scmp.ne.s32.totalorder %s133, %s134
      %p146 = scmp.eq.s32.totalorder %s26, 3
      %p147 = por %p145, %p146
      %p149 = scmp.ne.s32.totalorder %s134, %s148
      %p150 = scmp.eq.s32.totalorder %s26, 0
      %p151 = por %p149, %p150
      %s153 = sadd.s32 %s152, 1
      %p156 = scmp.eq.s32.totalorder %s20, 3
      %p157 = scmp.ne.s32.totalorder %s152, %s154
      %p158 = scmp.eq.s32.totalorder %s20, 0
      %p159 = por %p157, %p158
      %p160 = scmp.ne.s32.totalorder %s152, %s154
      %p161 = scmp.eq.s32.totalorder %s25, 3
      %p162 = por %p160, %p161
      %p163 = scmp.ne.s32.totalorder %s154, %s155
      %p164 = scmp.eq.s32.totalorder %s25, 0
      %p165 = por %p163, %p164
      %p166 = scmp.ne.s32.totalorder %s154, %s155
      %p167 = scmp.eq.s32.totalorder %s26, 3
      %p168 = por %p166, %p167
      %p170 = scmp.ne.s32.totalorder %s155, %s169
      %p171 = scmp.eq.s32.totalorder %s26, 0
      %p172 = por %p170, %p171
      %s174 = sadd.s32 %s173, 1
      %p177 = scmp.eq.s32.totalorder %s20, 3
      %p178 = scmp.ne.s32.totalorder %s173, %s175
      %p179 = scmp.eq.s32.totalorder %s20, 0
      %p180 = por %p178, %p179
      %p181 = scmp.ne.s32.totalorder %s173, %s175
      %p182 = scmp.eq.s32.totalorder %s25, 3
      %p183 = por %p181, %p182
      %p184 = scmp.ne.s32.totalorder %s175, %s176
      %p185 = scmp.eq.s32.totalorder %s25, 0
      %p186 = por %p184, %p185
      %p187 = scmp.ne.s32.totalorder %s175, %s176
      %p188 = scmp.eq.s32.totalorder %s26, 3
      %p189 = por %p187, %p188
      %p191 = scmp.ne.s32.totalorder %s176, %s190
      %p192 = scmp.eq.s32.totalorder %s26, 0
      %p193 = por %p191, %p192
      %s194 = ssub.s32 %s27, %s39
      %s195 = ssub.s32 %s28, %s35
      %s196 = sor.u32 %s194, %s195
      %p197 = scmp.eq.s32.totalorder %s196, 0
      %s199 = sadd.s32 %s198, 1
      %s200 = scalar_select %p197, %s198, %s199
      %p203 = pneg %p197
      %p204 = scmp.eq.s32.totalorder %s20, 3
      %p205 = por %p203, %p204
      %p206 = scmp.ne.s32.totalorder %s198, %s201
      %p207 = scmp.eq.s32.totalorder %s20, 0
      %p208 = por %p206, %p207
      %p209 = scmp.ne.s32.totalorder %s198, %s201
      %p210 = scmp.eq.s32.totalorder %s25, 3
      %p211 = por %p209, %p210
      %p212 = scmp.ne.s32.totalorder %s201, %s202
      %p213 = scmp.eq.s32.totalorder %s25, 0
      %p214 = por %p212, %p213
      %p215 = scmp.ne.s32.totalorder %s201, %s202
      %p216 = scmp.eq.s32.totalorder %s26, 3
      %p217 = por %p215, %p216
      %p219 = scmp.ne.s32.totalorder %s202, %s218
      %p220 = scmp.eq.s32.totalorder %s26, 0
      %p221 = por %p219, %p220
      %s222 = ssub.s32 %s27, %s39
      %s223 = ssub.s32 %s28, %s35
      %s224 = sor.u32 %s222, %s223
      %p225 = scmp.eq.s32.totalorder %s224, 0
      %s227 = sadd.s32 %s226, 1
      %s228 = scalar_select %p225, %s226, %s227
      %p231 = pneg %p225
      %p232 = scmp.eq.s32.totalorder %s20, 3
      %p233 = por %p231, %p232
      %p234 = scmp.ne.s32.totalorder %s226, %s229
      %p235 = scmp.eq.s32.totalorder %s20, 0
      %p236 = por %p234, %p235
      %p237 = scmp.ne.s32.totalorder %s226, %s229
      %p238 = scmp.eq.s32.totalorder %s25, 3
      %p239 = por %p237, %p238
      %p240 = scmp.ne.s32.totalorder %s229, %s230
      %p241 = scmp.eq.s32.totalorder %s25, 0
      %p242 = por %p240, %p241
      %p243 = scmp.ne.s32.totalorder %s229, %s230
      %p244 = scmp.eq.s32.totalorder %s26, 3
      %p245 = por %p243, %p244
      %p247 = scmp.ne.s32.totalorder %s230, %s246
      %p248 = scmp.eq.s32.totalorder %s26, 0
      %p249 = por %p247, %p248
      %p250 = scmp.le.s32.totalorder 1, %s20
      %p251 = scmp.lt.s32.totalorder %s20, 5
      %p252 = pnand %p250, %p251
      %p253 = pneg %p252
      // Predicated region
      $region9: #{_forward.2} parent=5 // pred_check
        _
      $region10: #{_forward.2} parent=5 // pred_check_branch
        %255 = sbr.rel (%p252) target = $region12
      $region11: #{_forward.2} parent=5 // pred_region
        %s256 = ssub.s32 %s20, 1
        // Predicated region
        $region13: #{_forward.2} parent=11 // pred_check
          %p257 = pneg %p81
        $region14: #{_forward.2} parent=11 // pred_check_branch
          %259 = sbr.rel (%p257) target = $region16
        $region15: #{_forward.2} parent=11 // pred_region
          %s261 = ssub.s32 16, 16
          %262 = vsyncadd [#allocation5], %s261
          %s264 = sshll.u32 [#allocation4], 4
          %s265 = int_to_ptr.vmem [resolvable:$true] %s264
          %267 = dma.hbm_to_vmem [thread:$0]  %s1, 16, %s265, [#allocation5]
        $region16: #{_forward.2} parent=11 // pred_fallthru
          _
        // Predicated region
        $region17: #{_forward.2} parent=11 // pred_check
          %p268 = pneg %p102
        $region18: #{_forward.2} parent=11 // pred_check_branch
          %270 = sbr.rel (%p268) target = $region20
        $region19: #{_forward.2} parent=11 // pred_region
          %s272 = ssub.s32 16, 16
          %273 = vsyncadd [#allocation5], %s272
          %s275 = sshll.u32 [#allocation6], 4
          %s276 = int_to_ptr.vmem [resolvable:$true] %s275
          %278 = dma.hbm_to_vmem [thread:$0]  %s2, 16, %s276, [#allocation5]
        $region20: #{_forward.2} parent=11 // pred_fallthru
          _
        // Predicated region
        $region21: #{_forward.2} parent=11 // pred_check
          %p279 = pneg %p123
        $region22: #{_forward.2} parent=11 // pred_check_branch
          %281 = sbr.rel (%p279) target = $region24
        $region23: #{_forward.2} parent=11 // pred_region
          %s283 = ssub.s32 16, 16
          %284 = vsyncadd [#allocation8], %s283
          %s286 = sshll.u32 [#allocation7], 4
          %s287 = int_to_ptr.vmem [resolvable:$true] %s286
          %289 = dma.hbm_to_vmem [thread:$0]  %s3, 16, %s287, [#allocation8]
        $region24: #{_forward.2} parent=11 // pred_fallthru
          _
        // Predicated region
        $region25: #{_forward.2} parent=11 // pred_check
          %p290 = pneg %p144
        $region26: #{_forward.2} parent=11 // pred_check_branch
          %292 = sbr.rel (%p290) target = $region28
        $region27: #{_forward.2} parent=11 // pred_region
          %s294 = ssub.s32 16, 16
          %295 = vsyncadd [#allocation8], %s294
          %s297 = sshll.u32 [#allocation9], 4
          %s298 = int_to_ptr.vmem [resolvable:$true] %s297
          %300 = dma.hbm_to_vmem [thread:$0]  %s4, 16, %s298, [#allocation8]
        $region28: #{_forward.2} parent=11 // pred_fallthru
          _
        // Predicated region
        $region29: #{_forward.2} parent=11 // pred_check
          %p301 = pneg %p165
        $region30: #{_forward.2} parent=11 // pred_check_branch
          %303 = sbr.rel (%p301) target = $region32
        $region31: #{_forward.2} parent=11 // pred_region
          _
        $region32: #{_forward.2} parent=11 // pred_fallthru
          _
        // Predicated region
        $region33: #{_forward.2} parent=11 // pred_check
          %p304 = pneg %p186
        $region34: #{_forward.2} parent=11 // pred_check_branch
          %306 = sbr.rel (%p304) target = $region36
        $region35: #{_forward.2} parent=11 // pred_region
          _
        $region36: #{_forward.2} parent=11 // pred_fallthru
          _
      $region12: #{_forward.2} parent=5 // pred_fallthru
        _
      %p307 = scmp.lt.s32.totalorder %s20, 4
      // Predicated region
      $region37: #{_forward.2} parent=5 // pred_check
        %p308 = pneg %p307
      $region38: #{_forward.2} parent=5 // pred_check_branch
        %310 = sbr.rel (%p308) target = $region40
      $region39: #{_forward.2} parent=5 // pred_region
        // Predicated region
        $region41: #{_forward.2} parent=39 // pred_check
          %p311 = pneg %p54
        $region42: #{_forward.2} parent=39 // pred_check_branch
          %313 = sbr.rel (%p311) target = $region44
        $region43: #{_forward.2} parent=39 // pred_region
          %s314 = sand.u32 %s44, 1
          %s315 = scalar_lea.sflag [#allocation3], %s314
          %s316 = sand.u32 %s44, 1
          %s317 = smul.addr %s316, 256
          %s318 = scalar_lea.vmem [#allocation2], %s317
          %s319 = smul.u32 32, %s28
          %s321 = ssub.s32 4096, 4096
          %322 = vsyncadd %s315, %s321
          %s323 = smul.addr %s27, 64
          %s324 = sadd.s32 %s319, %s323
          %s325 = smul.addr %s324, 128
          %s326 = scalar_lea.hbm %s0, %s325
          %s327 = sshll.u32 %s318, 4
          %s328 = int_to_ptr.vmem [resolvable:$true] %s327
          %333 = dma.hbm_to_vmem [thread:$0]  %s326, 4096, %s328, %s315, 128, 128, 8
        $region44: #{_forward.2} parent=39 // pred_fallthru
          _
      $region40: #{_forward.2} parent=5 // pred_fallthru
        _
      %p334 = scmp.le.s32.totalorder 1, %s20
      %p335 = scmp.lt.s32.totalorder %s20, 5
      %p336 = pnand %p334, %p335
      %p337 = pneg %p336
      // Predicated region
      $region45: #{_forward.2} parent=5 // pred_check
        _
      $region46: #{_forward.2} parent=5 // pred_check_branch
        %339 = sbr.rel (%p336) target = $region48
      $region47: #{_forward.2} parent=5 // pred_region
        %s340 = ssub.s32 %s20, 1
        %s341 = sand.u32 %s47, 1
        %s342 = scalar_lea.sflag [#allocation3], %s341
        %s343 = sand.u32 %s47, 1
        %s344 = smul.addr %s343, 256
        %s345 = scalar_lea.vmem [#allocation2], %s344
        // Predicated region
        $region49: #{_forward.2} parent=47 // pred_check
          %p346 = pneg %p60
        $region50: #{_forward.2} parent=47 // pred_check_branch
          %348 = sbr.rel (%p346) target = $region52
        $region51: #{_forward.2} parent=47 // pred_region
          %349 = dma.done %s342, 4096
        $region52: #{_forward.2} parent=47 // pred_fallthru
          _
        // Predicated region
        $region53: #{_forward.2} parent=47 // pred_check
          %p350 = pneg %p81
        $region54: #{_forward.2} parent=47 // pred_check_branch
          %352 = sbr.rel (%p350) target = $region56
        $region55: #{_forward.2} parent=47 // pred_region
          %353 = dma.done [#allocation5], 16
        $region56: #{_forward.2} parent=47 // pred_fallthru
          _
        // Predicated region
        $region57: #{_forward.2} parent=47 // pred_check
          %p354 = pneg %p102
        $region58: #{_forward.2} parent=47 // pred_check_branch
          %356 = sbr.rel (%p354) target = $region60
        $region59: #{_forward.2} parent=47 // pred_region
          %357 = dma.done [#allocation5], 16
        $region60: #{_forward.2} parent=47 // pred_fallthru
          _
        // Predicated region
        $region61: #{_forward.2} parent=47 // pred_check
          %p358 = pneg %p123
        $region62: #{_forward.2} parent=47 // pred_check_branch
          %360 = sbr.rel (%p358) target = $region64
        $region63: #{_forward.2} parent=47 // pred_region
          %361 = dma.done [#allocation8], 16
        $region64: #{_forward.2} parent=47 // pred_fallthru
          _
        // Predicated region
        $region65: #{_forward.2} parent=47 // pred_check
          %p362 = pneg %p144
        $region66: #{_forward.2} parent=47 // pred_check_branch
          %364 = sbr.rel (%p362) target = $region68
        $region67: #{_forward.2} parent=47 // pred_region
          %365 = dma.done [#allocation8], 16
        $region68: #{_forward.2} parent=47 // pred_fallthru
          _
        %s366 = sand.u32 %s47, 1
        %s367 = scalar_lea.sflag [#allocation3], %s366
        %s368 = sand.u32 %s47, 1
        %s369 = smul.addr %s368, 256
        %s370 = scalar_lea.vmem [#allocation2], %s369
        %p371 = pneg %p60
        %p372 = pneg %p57
        %p373 = pneg %p81
        %p374 = pneg %p78
        %p375 = pneg %p102
        %p376 = pneg %p99
        %p377 = pneg %p123
        %p378 = pneg %p120
        %p379 = pneg %p144
        %p380 = pneg %p141
        %p381 = pneg %p165
        %p382 = pneg %p162
        %p383 = pneg %p186
        %p384 = pneg %p183
        %p385 = pneg %p214
        %p386 = pneg %p211
        %s387 = smul.u32 32, %s30
        %p388 = scmp.lt.s32.totalorder %s29, 1
        %s389 = scalar_select %p388, %s29, 1
        %p390 = scmp.lt.s32.totalorder %s387, 63
        %s391 = scalar_select %p390, %s387, 63
        %s392 = smul.addr %s389, 64
        %s393 = sadd.s32 %s391, %s392
        %s394 = smul.addr %s393, 4
        %s395 = scalar_lea.vmem %s7, %s394
        %p396 = pneg %p242
        %p397 = pneg %p239
        %s398 = smul.u32 32, %s30
        %p399 = scmp.lt.s32.totalorder %s29, 1
        %s400 = scalar_select %p399, %s29, 1
        %p401 = scmp.lt.s32.totalorder %s398, 63
        %s402 = scalar_select %p401, %s398, 63
        %s403 = smul.addr %s402, 2
        %s404 = smul.addr %s400, 128
        %s405 = sadd.s32 %s403, %s404
        %s406 = smul.addr %s405, 4
        %s407 = scalar_lea.vmem %s8, %s406
        %s408 = smul.u32 32, %s30
        %s409 = smul.u32 32, %s30
        %p410 = scmp.lt.s32.totalorder %s29, 1
        %s411 = scalar_select %p410, %s29, 1
        %p412 = scmp.lt.s32.totalorder %s409, 63
        %s413 = scalar_select %p412, %s409, 63
        %s414 = smul.addr %s411, 64
        %s415 = sadd.s32 %s413, %s414
        %s416 = smul.addr %s415, 4
        %s417 = scalar_lea.vmem %s7, %s416
        %s418 = smul.u32 32, %s30
        %s419 = smul.u32 32, %s30
        %p420 = scmp.lt.s32.totalorder %s29, 1
        %s421 = scalar_select %p420, %s29, 1
        %p422 = scmp.lt.s32.totalorder %s419, 63
        %s423 = scalar_select %p422, %s419, 63
        %s424 = smul.addr %s423, 2
        %s425 = smul.addr %s421, 128
        %s426 = sadd.s32 %s424, %s425
        %s427 = smul.addr %s426, 4
        %s428 = scalar_lea.vmem %s8, %s427
        %s429 = smul.u32 32, %s30
        %v431 = vld [vmem:[%s345] sm:$0xff]
        %v432 = vld [vmem:[%s345 + $0x8] sm:$0xff]
        %v433 = vld [vmem:[%s345 + $0x10] sm:$0xff]
        %v434 = vld [vmem:[%s345 + $0x18] sm:$0xff]
        %v435 = vld [vmem:[%s345 + $0x20] sm:$0xff]
        %v436 = vld [vmem:[%s345 + $0x28] sm:$0xff]
        %v437 = vld [vmem:[%s345 + $0x30] sm:$0xff]
        %v438 = vld [vmem:[%s345 + $0x38] sm:$0xff]
        %v439 = vld [vmem:[%s345 + $0x40] sm:$0xff]
        %v440 = vld [vmem:[%s345 + $0x48] sm:$0xff]
        %v441 = vld [vmem:[%s345 + $0x50] sm:$0xff]
        %v442 = vld [vmem:[%s345 + $0x58] sm:$0xff]
        %v443 = vld [vmem:[%s345 + $0x60] sm:$0xff]
        %v444 = vld [vmem:[%s345 + $0x68] sm:$0xff]
        %v445 = vld [vmem:[%s345 + $0x70] sm:$0xff]
        %v446 = vld [vmem:[%s345 + $0x78] sm:$0xff]
        %v447 = vld [vmem:[%s345 + $0x80] sm:$0xff]
        %v448 = vld [vmem:[%s345 + $0x88] sm:$0xff]
        %v449 = vld [vmem:[%s345 + $0x90] sm:$0xff]
        %v450 = vld [vmem:[%s345 + $0x98] sm:$0xff]
        %v451 = vld [vmem:[%s345 + $0xa0] sm:$0xff]
        %v452 = vld [vmem:[%s345 + $0xa8] sm:$0xff]
        %v453 = vld [vmem:[%s345 + $0xb0] sm:$0xff]
        %v454 = vld [vmem:[%s345 + $0xb8] sm:$0xff]
        %v455 = vld [vmem:[%s345 + $0xc0] sm:$0xff]
        %v456 = vld [vmem:[%s345 + $0xc8] sm:$0xff]
        %v457 = vld [vmem:[%s345 + $0xd0] sm:$0xff]
        %v458 = vld [vmem:[%s345 + $0xd8] sm:$0xff]
        %v459 = vld [vmem:[%s345 + $0xe0] sm:$0xff]
        %v460 = vld [vmem:[%s345 + $0xe8] sm:$0xff]
        %v461 = vld [vmem:[%s345 + $0xf0] sm:$0xff]
        %v462 = vld [vmem:[%s345 + $0xf8] sm:$0xff]
        %v463 = vld [vmem:[#allocation4] sm:$0x1]
        %v464 = vld [vmem:[#allocation6] sm:$0x1]
        %v465 = vld [vmem:[#allocation7] sm:$0x1]
        %v466 = vld [vmem:[#allocation9] sm:$0x1]
        %467 = vadd.xlane.f32.xlu0 %v431
        %v468 = vpop.xlane.xlu0 %467
        %469 = vadd.xlane.f32.xlu0 %v432
        %v470 = vpop.xlane.xlu0 %469
        %471 = vadd.xlane.f32.xlu0 %v433
        %v472 = vpop.xlane.xlu0 %471
        %473 = vadd.xlane.f32.xlu0 %v434
        %v474 = vpop.xlane.xlu0 %473
        %475 = vadd.xlane.f32.xlu0 %v435
        %v476 = vpop.xlane.xlu0 %475
        %477 = vadd.xlane.f32.xlu0 %v436
        %v478 = vpop.xlane.xlu0 %477
        %479 = vadd.xlane.f32.xlu0 %v437
        %v480 = vpop.xlane.xlu0 %479
        %481 = vadd.xlane.f32.xlu0 %v438
        %v482 = vpop.xlane.xlu0 %481
        %483 = vadd.xlane.f32.xlu0 %v439
        %v484 = vpop.xlane.xlu0 %483
        %485 = vadd.xlane.f32.xlu0 %v440
        %v486 = vpop.xlane.xlu0 %485
        %487 = vadd.xlane.f32.xlu0 %v441
        %v488 = vpop.xlane.xlu0 %487
        %489 = vadd.xlane.f32.xlu0 %v442
        %v490 = vpop.xlane.xlu0 %489
        %491 = vadd.xlane.f32.xlu0 %v443
        %v492 = vpop.xlane.xlu0 %491
        %493 = vadd.xlane.f32.xlu0 %v444
        %v494 = vpop.xlane.xlu0 %493
        %495 = vadd.xlane.f32.xlu0 %v445
        %v496 = vpop.xlane.xlu0 %495
        %497 = vadd.xlane.f32.xlu0 %v446
        %v498 = vpop.xlane.xlu0 %497
        %499 = vadd.xlane.f32.xlu0 %v447
        %v500 = vpop.xlane.xlu0 %499
        %501 = vadd.xlane.f32.xlu0 %v448
        %v502 = vpop.xlane.xlu0 %501
        %503 = vadd.xlane.f32.xlu0 %v449
        %v504 = vpop.xlane.xlu0 %503
        %505 = vadd.xlane.f32.xlu0 %v450
        %v506 = vpop.xlane.xlu0 %505
        %507 = vadd.xlane.f32.xlu0 %v451
        %v508 = vpop.xlane.xlu0 %507
        %509 = vadd.xlane.f32.xlu0 %v452
        %v510 = vpop.xlane.xlu0 %509
        %511 = vadd.xlane.f32.xlu0 %v453
        %v512 = vpop.xlane.xlu0 %511
        %513 = vadd.xlane.f32.xlu0 %v454
        %v514 = vpop.xlane.xlu0 %513
        %515 = vadd.xlane.f32.xlu0 %v455
        %v516 = vpop.xlane.xlu0 %515
        %517 = vadd.xlane.f32.xlu0 %v456
        %v518 = vpop.xlane.xlu0 %517
        %519 = vadd.xlane.f32.xlu0 %v457
        %v520 = vpop.xlane.xlu0 %519
        %521 = vadd.xlane.f32.xlu0 %v458
        %v522 = vpop.xlane.xlu0 %521
        %523 = vadd.xlane.f32.xlu0 %v459
        %v524 = vpop.xlane.xlu0 %523
        %525 = vadd.xlane.f32.xlu0 %v460
        %v526 = vpop.xlane.xlu0 %525
        %527 = vadd.xlane.f32.xlu0 %v461
        %v528 = vpop.xlane.xlu0 %527
        %529 = vadd.xlane.f32.xlu0 %v462
        %v530 = vpop.xlane.xlu0 %529
        %v531 = vrcp.pop 128.0
        %v532 = vmul.f32 %v468, %v531
        %v533 = vmul.f32 %v470, %v531
        %v534 = vmul.f32 %v472, %v531
        %v535 = vmul.f32 %v474, %v531
        %v536 = vmul.f32 %v476, %v531
        %v537 = vmul.f32 %v478, %v531
        %v538 = vmul.f32 %v480, %v531
        %v539 = vmul.f32 %v482, %v531
        %v540 = vmul.f32 %v484, %v531
        %v541 = vmul.f32 %v486, %v531
        %v542 = vmul.f32 %v488, %v531
        %v543 = vmul.f32 %v490, %v531
        %v544 = vmul.f32 %v492, %v531
        %v545 = vmul.f32 %v494, %v531
        %v546 = vmul.f32 %v496, %v531
        %v547 = vmul.f32 %v498, %v531
        %v548 = vmul.f32 %v500, %v531
        %v549 = vmul.f32 %v502, %v531
        %v550 = vmul.f32 %v504, %v531
        %v551 = vmul.f32 %v506, %v531
        %v552 = vmul.f32 %v508, %v531
        %v553 = vmul.f32 %v510, %v531
        %v554 = vmul.f32 %v512, %v531
        %v555 = vmul.f32 %v514, %v531
        %v556 = vmul.f32 %v516, %v531
        %v557 = vmul.f32 %v518, %v531
        %v558 = vmul.f32 %v520, %v531
        %v559 = vmul.f32 %v522, %v531
        %v560 = vmul.f32 %v524, %v531
        %v561 = vmul.f32 %v526, %v531
        %v562 = vmul.f32 %v528, %v531
        %v563 = vmul.f32 %v530, %v531
        %v564 = vsub.f32 %v431, %v532
        %v565 = vsub.f32 %v432, %v533
        %v566 = vsub.f32 %v433, %v534
        %v567 = vsub.f32 %v434, %v535
        %v568 = vsub.f32 %v435, %v536
        %v569 = vsub.f32 %v436, %v537
        %v570 = vsub.f32 %v437, %v538
        %v571 = vsub.f32 %v438, %v539
        %v572 = vsub.f32 %v439, %v540
        %v573 = vsub.f32 %v440, %v541
        %v574 = vsub.f32 %v441, %v542
        %v575 = vsub.f32 %v442, %v543
        %v576 = vsub.f32 %v443, %v544
        %v577 = vsub.f32 %v444, %v545
        %v578 = vsub.f32 %v445, %v546
        %v579 = vsub.f32 %v446, %v547
        %v580 = vsub.f32 %v447, %v548
        %v581 = vsub.f32 %v448, %v549
        %v582 = vsub.f32 %v449, %v550
        %v583 = vsub.f32 %v450, %v551
        %v584 = vsub.f32 %v451, %v552
        %v585 = vsub.f32 %v452, %v553
        %v586 = vsub.f32 %v453, %v554
        %v587 = vsub.f32 %v454, %v555
        %v588 = vsub.f32 %v455, %v556
        %v589 = vsub.f32 %v456, %v557
        %v590 = vsub.f32 %v457, %v558
        %v591 = vsub.f32 %v458, %v559
        %v592 = vsub.f32 %v459, %v560
        %v593 = vsub.f32 %v460, %v561
        %v594 = vsub.f32 %v461, %v562
        %v595 = vsub.f32 %v462, %v563
        %v596 = vmul.f32 %v564, %v564
        %v597 = vmul.f32 %v565, %v565
        %v598 = vmul.f32 %v566, %v566
        %v599 = vmul.f32 %v567, %v567
        %v600 = vmul.f32 %v568, %v568
        %v601 = vmul.f32 %v569, %v569
        %v602 = vmul.f32 %v570, %v570
        %v603 = vmul.f32 %v571, %v571
        %v604 = vmul.f32 %v572, %v572
        %v605 = vmul.f32 %v573, %v573
        %v606 = vmul.f32 %v574, %v574
        %v607 = vmul.f32 %v575, %v575
        %v608 = vmul.f32 %v576, %v576
        %v609 = vmul.f32 %v577, %v577
        %v610 = vmul.f32 %v578, %v578
        %v611 = vmul.f32 %v579, %v579
        %v612 = vmul.f32 %v580, %v580
        %v613 = vmul.f32 %v581, %v581
        %v614 = vmul.f32 %v582, %v582
        %v615 = vmul.f32 %v583, %v583
        %v616 = vmul.f32 %v584, %v584
        %v617 = vmul.f32 %v585, %v585
        %v618 = vmul.f32 %v586, %v586
        %v619 = vmul.f32 %v587, %v587
        %v620 = vmul.f32 %v588, %v588
        %v621 = vmul.f32 %v589, %v589
        %v622 = vmul.f32 %v590, %v590
        %v623 = vmul.f32 %v591, %v591
        %v624 = vmul.f32 %v592, %v592
        %v625 = vmul.f32 %v593, %v593
        %v626 = vmul.f32 %v594, %v594
        %v627 = vmul.f32 %v595, %v595
        %628 = vadd.xlane.f32.xlu0 %v596
        %v629 = vpop.xlane.xlu0 %628
        %630 = vadd.xlane.f32.xlu0 %v597
        %v631 = vpop.xlane.xlu0 %630
        %632 = vadd.xlane.f32.xlu0 %v598
        %v633 = vpop.xlane.xlu0 %632
        %634 = vadd.xlane.f32.xlu0 %v599
        %v635 = vpop.xlane.xlu0 %634
        %636 = vadd.xlane.f32.xlu0 %v600
        %v637 = vpop.xlane.xlu0 %636
        %638 = vadd.xlane.f32.xlu0 %v601
        %v639 = vpop.xlane.xlu0 %638
        %640 = vadd.xlane.f32.xlu0 %v602
        %v641 = vpop.xlane.xlu0 %640
        %642 = vadd.xlane.f32.xlu0 %v603
        %v643 = vpop.xlane.xlu0 %642
        %644 = vadd.xlane.f32.xlu0 %v604
        %v645 = vpop.xlane.xlu0 %644
        %646 = vadd.xlane.f32.xlu0 %v605
        %v647 = vpop.xlane.xlu0 %646
        %648 = vadd.xlane.f32.xlu0 %v606
        %v649 = vpop.xlane.xlu0 %648
        %650 = vadd.xlane.f32.xlu0 %v607
        %v651 = vpop.xlane.xlu0 %650
        %652 = vadd.xlane.f32.xlu0 %v608
        %v653 = vpop.xlane.xlu0 %652
        %654 = vadd.xlane.f32.xlu0 %v609
        %v655 = vpop.xlane.xlu0 %654
        %656 = vadd.xlane.f32.xlu0 %v610
        %v657 = vpop.xlane.xlu0 %656
        %658 = vadd.xlane.f32.xlu0 %v611
        %v659 = vpop.xlane.xlu0 %658
        %660 = vadd.xlane.f32.xlu0 %v612
        %v661 = vpop.xlane.xlu0 %660
        %662 = vadd.xlane.f32.xlu0 %v613
        %v663 = vpop.xlane.xlu0 %662
        %664 = vadd.xlane.f32.xlu0 %v614
        %v665 = vpop.xlane.xlu0 %664
        %666 = vadd.xlane.f32.xlu0 %v615
        %v667 = vpop.xlane.xlu0 %666
        %668 = vadd.xlane.f32.xlu0 %v616
        %v669 = vpop.xlane.xlu0 %668
        %670 = vadd.xlane.f32.xlu0 %v617
        %v671 = vpop.xlane.xlu0 %670
        %672 = vadd.xlane.f32.xlu0 %v618
        %v673 = vpop.xlane.xlu0 %672
        %674 = vadd.xlane.f32.xlu0 %v619
        %v675 = vpop.xlane.xlu0 %674
        %676 = vadd.xlane.f32.xlu0 %v620
        %v677 = vpop.xlane.xlu0 %676
        %678 = vadd.xlane.f32.xlu0 %v621
        %v679 = vpop.xlane.xlu0 %678
        %680 = vadd.xlane.f32.xlu0 %v622
        %v681 = vpop.xlane.xlu0 %680
        %682 = vadd.xlane.f32.xlu0 %v623
        %v683 = vpop.xlane.xlu0 %682
        %684 = vadd.xlane.f32.xlu0 %v624
        %v685 = vpop.xlane.xlu0 %684
        %686 = vadd.xlane.f32.xlu0 %v625
        %v687 = vpop.xlane.xlu0 %686
        %688 = vadd.xlane.f32.xlu0 %v626
        %v689 = vpop.xlane.xlu0 %688
        %690 = vadd.xlane.f32.xlu0 %v627
        %v691 = vpop.xlane.xlu0 %690
        %v692 = vmul.f32 %v629, %v531
        %v693 = vmul.f32 %v631, %v531
        %v694 = vmul.f32 %v633, %v531
        %v695 = vmul.f32 %v635, %v531
        %v696 = vmul.f32 %v637, %v531
        %v697 = vmul.f32 %v639, %v531
        %v698 = vmul.f32 %v641, %v531
        %v699 = vmul.f32 %v643, %v531
        %v700 = vmul.f32 %v645, %v531
        %v701 = vmul.f32 %v647, %v531
        %v702 = vmul.f32 %v649, %v531
        %v703 = vmul.f32 %v651, %v531
        %v704 = vmul.f32 %v653, %v531
        %v705 = vmul.f32 %v655, %v531
        %v706 = vmul.f32 %v657, %v531
        %v707 = vmul.f32 %v659, %v531
        %v708 = vmul.f32 %v661, %v531
        %v709 = vmul.f32 %v663, %v531
        %v710 = vmul.f32 %v665, %v531
        %v711 = vmul.f32 %v667, %v531
        %v712 = vmul.f32 %v669, %v531
        %v713 = vmul.f32 %v671, %v531
        %v714 = vmul.f32 %v673, %v531
        %v715 = vmul.f32 %v675, %v531
        %v716 = vmul.f32 %v677, %v531
        %v717 = vmul.f32 %v679, %v531
        %v718 = vmul.f32 %v681, %v531
        %v719 = vmul.f32 %v683, %v531
        %v720 = vmul.f32 %v685, %v531
        %v721 = vmul.f32 %v687, %v531
        %v722 = vmul.f32 %v689, %v531
        %v723 = vmul.f32 %v691, %v531
        %v724 = vadd.f32 %v692, 1e-05
        %v725 = vadd.f32 %v693, 1e-05
        %v726 = vadd.f32 %v694, 1e-05
        %v727 = vadd.f32 %v695, 1e-05
        %v728 = vadd.f32 %v696, 1e-05
        %v729 = vadd.f32 %v697, 1e-05
        %v730 = vadd.f32 %v698, 1e-05
        %v731 = vadd.f32 %v699, 1e-05
        %v732 = vadd.f32 %v700, 1e-05
        %v733 = vadd.f32 %v701, 1e-05
        %v734 = vadd.f32 %v702, 1e-05
        %v735 = vadd.f32 %v703, 1e-05
        %v736 = vadd.f32 %v704, 1e-05
        %v737 = vadd.f32 %v705, 1e-05
        %v738 = vadd.f32 %v706, 1e-05
        %v739 = vadd.f32 %v707, 1e-05
        %v740 = vadd.f32 %v708, 1e-05
        %v741 = vadd.f32 %v709, 1e-05
        %v742 = vadd.f32 %v710, 1e-05
        %v743 = vadd.f32 %v711, 1e-05
        %v744 = vadd.f32 %v712, 1e-05
        %v745 = vadd.f32 %v713, 1e-05
        %v746 = vadd.f32 %v714, 1e-05
        %v747 = vadd.f32 %v715, 1e-05
        %v748 = vadd.f32 %v716, 1e-05
        %v749 = vadd.f32 %v717, 1e-05
        %v750 = vadd.f32 %v718, 1e-05
        %v751 = vadd.f32 %v719, 1e-05
        %v752 = vadd.f32 %v720, 1e-05
        %v753 = vadd.f32 %v721, 1e-05
        %v754 = vadd.f32 %v722, 1e-05
        %v755 = vadd.f32 %v723, 1e-05
        %v756 = vrsqrt.pop %v724
        %v757 = vrsqrt.pop %v725
        %v758 = vrsqrt.pop %v726
        %v759 = vrsqrt.pop %v727
        %v760 = vrsqrt.pop %v728
        %v761 = vrsqrt.pop %v729
        %v762 = vrsqrt.pop %v730
        %v763 = vrsqrt.pop %v731
        %v764 = vrsqrt.pop %v732
        %v765 = vrsqrt.pop %v733
        %v766 = vrsqrt.pop %v734
        %v767 = vrsqrt.pop %v735
        %v768 = vrsqrt.pop %v736
        %v769 = vrsqrt.pop %v737
        %v770 = vrsqrt.pop %v738
        %v771 = vrsqrt.pop %v739
        %v772 = vrsqrt.pop %v740
        %v773 = vrsqrt.pop %v741
        %v774 = vrsqrt.pop %v742
        %v775 = vrsqrt.pop %v743
        %v776 = vrsqrt.pop %v744
        %v777 = vrsqrt.pop %v745
        %v778 = vrsqrt.pop %v746
        %v779 = vrsqrt.pop %v747
        %v780 = vrsqrt.pop %v748
        %v781 = vrsqrt.pop %v749
        %v782 = vrsqrt.pop %v750
        %v783 = vrsqrt.pop %v751
        %v784 = vrsqrt.pop %v752
        %v785 = vrsqrt.pop %v753
        %v786 = vrsqrt.pop %v754
        %v787 = vrsqrt.pop %v755
        %v788 = vmul.f32 %v564, %v756
        %v789 = vmul.f32 %v565, %v757
        %v790 = vmul.f32 %v566, %v758
        %v791 = vmul.f32 %v567, %v759
        %v792 = vmul.f32 %v568, %v760
        %v793 = vmul.f32 %v569, %v761
        %v794 = vmul.f32 %v570, %v762
        %v795 = vmul.f32 %v571, %v763
        %v796 = vmul.f32 %v572, %v764
        %v797 = vmul.f32 %v573, %v765
        %v798 = vmul.f32 %v574, %v766
        %v799 = vmul.f32 %v575, %v767
        %v800 = vmul.f32 %v576, %v768
        %v801 = vmul.f32 %v577, %v769
        %v802 = vmul.f32 %v578, %v770
        %v803 = vmul.f32 %v579, %v771
        %v804 = vmul.f32 %v580, %v772
        %v805 = vmul.f32 %v581, %v773
        %v806 = vmul.f32 %v582, %v774
        %v807 = vmul.f32 %v583, %v775
        %v808 = vmul.f32 %v584, %v776
        %v809 = vmul.f32 %v585, %v777
        %v810 = vmul.f32 %v586, %v778
        %v811 = vmul.f32 %v587, %v779
        %v812 = vmul.f32 %v588, %v780
        %v813 = vmul.f32 %v589, %v781
        %v814 = vmul.f32 %v590, %v782
        %v815 = vmul.f32 %v591, %v783
        %v816 = vmul.f32 %v592, %v784
        %v817 = vmul.f32 %v593, %v785
        %v818 = vmul.f32 %v594, %v786
        %v819 = vmul.f32 %v595, %v787
        %v821 = vlaneseq
        %v822 = vshrl.u32 %v821, 7
        %v823 = vsub.s32 0, %v822
        %v824 = vrot.slane %v463, %v823
        %v826 = vmul.f32 %v788, %v824
        %v827 = vmul.f32 %v789, %v824
        %v828 = vmul.f32 %v790, %v824
        %v829 = vmul.f32 %v791, %v824
        %v830 = vmul.f32 %v792, %v824
        %v831 = vmul.f32 %v793, %v824
        %v832 = vmul.f32 %v794, %v824
        %v833 = vmul.f32 %v795, %v824
        %v834 = vmul.f32 %v796, %v824
        %v835 = vmul.f32 %v797, %v824
        %v836 = vmul.f32 %v798, %v824
        %v837 = vmul.f32 %v799, %v824
        %v838 = vmul.f32 %v800, %v824
        %v839 = vmul.f32 %v801, %v824
        %v840 = vmul.f32 %v802, %v824
        %v841 = vmul.f32 %v803, %v824
        %v842 = vmul.f32 %v804, %v824
        %v843 = vmul.f32 %v805, %v824
        %v844 = vmul.f32 %v806, %v824
        %v845 = vmul.f32 %v807, %v824
        %v846 = vmul.f32 %v808, %v824
        %v847 = vmul.f32 %v809, %v824
        %v848 = vmul.f32 %v810, %v824
        %v849 = vmul.f32 %v811, %v824
        %v850 = vmul.f32 %v812, %v824
        %v851 = vmul.f32 %v813, %v824
        %v852 = vmul.f32 %v814, %v824
        %v853 = vmul.f32 %v815, %v824
        %v854 = vmul.f32 %v816, %v824
        %v855 = vmul.f32 %v817, %v824
        %v856 = vmul.f32 %v818, %v824
        %v857 = vmul.f32 %v819, %v824
        %858 = vadd.xlane.f32.xlu0 %v826
        %v859 = vpop.xlane.xlu0 %858
        %860 = vadd.xlane.f32.xlu0 %v827
        %v861 = vpop.xlane.xlu0 %860
        %862 = vadd.xlane.f32.xlu0 %v828
        %v863 = vpop.xlane.xlu0 %862
        %864 = vadd.xlane.f32.xlu0 %v829
        %v865 = vpop.xlane.xlu0 %864
        %866 = vadd.xlane.f32.xlu0 %v830
        %v867 = vpop.xlane.xlu0 %866
        %868 = vadd.xlane.f32.xlu0 %v831
        %v869 = vpop.xlane.xlu0 %868
        %870 = vadd.xlane.f32.xlu0 %v832
        %v871 = vpop.xlane.xlu0 %870
        %872 = vadd.xlane.f32.xlu0 %v833
        %v873 = vpop.xlane.xlu0 %872
        %874 = vadd.xlane.f32.xlu0 %v834
        %v875 = vpop.xlane.xlu0 %874
        %876 = vadd.xlane.f32.xlu0 %v835
        %v877 = vpop.xlane.xlu0 %876
        %878 = vadd.xlane.f32.xlu0 %v836
        %v879 = vpop.xlane.xlu0 %878
        %880 = vadd.xlane.f32.xlu0 %v837
        %v881 = vpop.xlane.xlu0 %880
        %882 = vadd.xlane.f32.xlu0 %v838
        %v883 = vpop.xlane.xlu0 %882
        %884 = vadd.xlane.f32.xlu0 %v839
        %v885 = vpop.xlane.xlu0 %884
        %886 = vadd.xlane.f32.xlu0 %v840
        %v887 = vpop.xlane.xlu0 %886
        %888 = vadd.xlane.f32.xlu0 %v841
        %v889 = vpop.xlane.xlu0 %888
        %890 = vadd.xlane.f32.xlu0 %v842
        %v891 = vpop.xlane.xlu0 %890
        %892 = vadd.xlane.f32.xlu0 %v843
        %v893 = vpop.xlane.xlu0 %892
        %894 = vadd.xlane.f32.xlu0 %v844
        %v895 = vpop.xlane.xlu0 %894
        %896 = vadd.xlane.f32.xlu0 %v845
        %v897 = vpop.xlane.xlu0 %896
        %898 = vadd.xlane.f32.xlu0 %v846
        %v899 = vpop.xlane.xlu0 %898
        %900 = vadd.xlane.f32.xlu0 %v847
        %v901 = vpop.xlane.xlu0 %900
        %902 = vadd.xlane.f32.xlu0 %v848
        %v903 = vpop.xlane.xlu0 %902
        %904 = vadd.xlane.f32.xlu0 %v849
        %v905 = vpop.xlane.xlu0 %904
        %906 = vadd.xlane.f32.xlu0 %v850
        %v907 = vpop.xlane.xlu0 %906
        %908 = vadd.xlane.f32.xlu0 %v851
        %v909 = vpop.xlane.xlu0 %908
        %910 = vadd.xlane.f32.xlu0 %v852
        %v911 = vpop.xlane.xlu0 %910
        %912 = vadd.xlane.f32.xlu0 %v853
        %v913 = vpop.xlane.xlu0 %912
        %914 = vadd.xlane.f32.xlu0 %v854
        %v915 = vpop.xlane.xlu0 %914
        %916 = vadd.xlane.f32.xlu0 %v855
        %v917 = vpop.xlane.xlu0 %916
        %918 = vadd.xlane.f32.xlu0 %v856
        %v919 = vpop.xlane.xlu0 %918
        %920 = vadd.xlane.f32.xlu0 %v857
        %v921 = vpop.xlane.xlu0 %920
        %v922 = vmul.f32 %v859, %v531
        %v923 = vmul.f32 %v861, %v531
        %v924 = vmul.f32 %v863, %v531
        %v925 = vmul.f32 %v865, %v531
        %v926 = vmul.f32 %v867, %v531
        %v927 = vmul.f32 %v869, %v531
        %v928 = vmul.f32 %v871, %v531
        %v929 = vmul.f32 %v873, %v531
        %v930 = vmul.f32 %v875, %v531
        %v931 = vmul.f32 %v877, %v531
        %v932 = vmul.f32 %v879, %v531
        %v933 = vmul.f32 %v881, %v531
        %v934 = vmul.f32 %v883, %v531
        %v935 = vmul.f32 %v885, %v531
        %v936 = vmul.f32 %v887, %v531
        %v937 = vmul.f32 %v889, %v531
        %v938 = vmul.f32 %v891, %v531
        %v939 = vmul.f32 %v893, %v531
        %v940 = vmul.f32 %v895, %v531
        %v941 = vmul.f32 %v897, %v531
        %v942 = vmul.f32 %v899, %v531
        %v943 = vmul.f32 %v901, %v531
        %v944 = vmul.f32 %v903, %v531
        %v945 = vmul.f32 %v905, %v531
        %v946 = vmul.f32 %v907, %v531
        %v947 = vmul.f32 %v909, %v531
        %v948 = vmul.f32 %v911, %v531
        %v949 = vmul.f32 %v913, %v531
        %v950 = vmul.f32 %v915, %v531
        %v951 = vmul.f32 %v917, %v531
        %v952 = vmul.f32 %v919, %v531
        %v953 = vmul.f32 %v921, %v531
        %vm954 = vcmask 1040384
        %v955 = vsel %vm954, %v464, 0.0
        %956 = vadd.xlane.f32.xlu0 %v955
        %v957 = vpop.xlane.xlu0 %956
        %v958 = vmul.f32 %v957, %v531
        %v959 = vlaneseq
        %v960 = vshrl.u32 %v959, 7
        %v961 = vsub.s32 0, %v960
        %v962 = vrot.slane %v958, %v961
        %v963 = vadd.f32 %v922, %v962
        %v964 = vadd.f32 %v923, %v962
        %v965 = vadd.f32 %v924, %v962
        %v966 = vadd.f32 %v925, %v962
        %v967 = vadd.f32 %v926, %v962
        %v968 = vadd.f32 %v927, %v962
        %v969 = vadd.f32 %v928, %v962
        %v970 = vadd.f32 %v929, %v962
        %v971 = vadd.f32 %v930, %v962
        %v972 = vadd.f32 %v931, %v962
        %v973 = vadd.f32 %v932, %v962
        %v974 = vadd.f32 %v933, %v962
        %v975 = vadd.f32 %v934, %v962
        %v976 = vadd.f32 %v935, %v962
        %v977 = vadd.f32 %v936, %v962
        %v978 = vadd.f32 %v937, %v962
        %v979 = vadd.f32 %v938, %v962
        %v980 = vadd.f32 %v939, %v962
        %v981 = vadd.f32 %v940, %v962
        %v982 = vadd.f32 %v941, %v962
        %v983 = vadd.f32 %v942, %v962
        %v984 = vadd.f32 %v943, %v962
        %v985 = vadd.f32 %v944, %v962
        %v986 = vadd.f32 %v945, %v962
        %v987 = vadd.f32 %v946, %v962
        %v988 = vadd.f32 %v947, %v962
        %v989 = vadd.f32 %v948, %v962
        %v990 = vadd.f32 %v949, %v962
        %v991 = vadd.f32 %v950, %v962
        %v992 = vadd.f32 %v951, %v962
        %v993 = vadd.f32 %v952, %v962
        %v994 = vadd.f32 %v953, %v962
        %v996 = vlaneseq
        %v997 = vshrl.u32 %v996, 7
        %v998 = vsub.s32 0, %v997
        %v999 = vrot.slane %v464, %v998
        %v1001 = vadd.f32 %v826, %v999
        %v1002 = vadd.f32 %v827, %v999
        %v1003 = vadd.f32 %v828, %v999
        %v1004 = vadd.f32 %v829, %v999
        %v1005 = vadd.f32 %v830, %v999
        %v1006 = vadd.f32 %v831, %v999
        %v1007 = vadd.f32 %v832, %v999
        %v1008 = vadd.f32 %v833, %v999
        %v1009 = vadd.f32 %v834, %v999
        %v1010 = vadd.f32 %v835, %v999
        %v1011 = vadd.f32 %v836, %v999
        %v1012 = vadd.f32 %v837, %v999
        %v1013 = vadd.f32 %v838, %v999
        %v1014 = vadd.f32 %v839, %v999
        %v1015 = vadd.f32 %v840, %v999
        %v1016 = vadd.f32 %v841, %v999
        %v1017 = vadd.f32 %v842, %v999
        %v1018 = vadd.f32 %v843, %v999
        %v1019 = vadd.f32 %v844, %v999
        %v1020 = vadd.f32 %v845, %v999
        %v1021 = vadd.f32 %v846, %v999
        %v1022 = vadd.f32 %v847, %v999
        %v1023 = vadd.f32 %v848, %v999
        %v1024 = vadd.f32 %v849, %v999
        %v1025 = vadd.f32 %v850, %v999
        %v1026 = vadd.f32 %v851, %v999
        %v1027 = vadd.f32 %v852, %v999
        %v1028 = vadd.f32 %v853, %v999
        %v1029 = vadd.f32 %v854, %v999
        %v1030 = vadd.f32 %v855, %v999
        %v1031 = vadd.f32 %v856, %v999
        %v1032 = vadd.f32 %v857, %v999
        %v1033 = vsub.f32 %v1001, %v963
        %v1034 = vsub.f32 %v1002, %v964
        %v1035 = vsub.f32 %v1003, %v965
        %v1036 = vsub.f32 %v1004, %v966
        %v1037 = vsub.f32 %v1005, %v967
        %v1038 = vsub.f32 %v1006, %v968
        %v1039 = vsub.f32 %v1007, %v969
        %v1040 = vsub.f32 %v1008, %v970
        %v1041 = vsub.f32 %v1009, %v971
        %v1042 = vsub.f32 %v1010, %v972
        %v1043 = vsub.f32 %v1011, %v973
        %v1044 = vsub.f32 %v1012, %v974
        %v1045 = vsub.f32 %v1013, %v975
        %v1046 = vsub.f32 %v1014, %v976
        %v1047 = vsub.f32 %v1015, %v977
        %v1048 = vsub.f32 %v1016, %v978
        %v1049 = vsub.f32 %v1017, %v979
        %v1050 = vsub.f32 %v1018, %v980
        %v1051 = vsub.f32 %v1019, %v981
        %v1052 = vsub.f32 %v1020, %v982
        %v1053 = vsub.f32 %v1021, %v983
        %v1054 = vsub.f32 %v1022, %v984
        %v1055 = vsub.f32 %v1023, %v985
        %v1056 = vsub.f32 %v1024, %v986
        %v1057 = vsub.f32 %v1025, %v987
        %v1058 = vsub.f32 %v1026, %v988
        %v1059 = vsub.f32 %v1027, %v989
        %v1060 = vsub.f32 %v1028, %v990
        %v1061 = vsub.f32 %v1029, %v991
        %v1062 = vsub.f32 %v1030, %v992
        %v1063 = vsub.f32 %v1031, %v993
        %v1064 = vsub.f32 %v1032, %v994
        %v1065 = vmul.f32 %v1033, %v1033
        %v1066 = vmul.f32 %v1034, %v1034
        %v1067 = vmul.f32 %v1035, %v1035
        %v1068 = vmul.f32 %v1036, %v1036
        %v1069 = vmul.f32 %v1037, %v1037
        %v1070 = vmul.f32 %v1038, %v1038
        %v1071 = vmul.f32 %v1039, %v1039
        %v1072 = vmul.f32 %v1040, %v1040
        %v1073 = vmul.f32 %v1041, %v1041
        %v1074 = vmul.f32 %v1042, %v1042
        %v1075 = vmul.f32 %v1043, %v1043
        %v1076 = vmul.f32 %v1044, %v1044
        %v1077 = vmul.f32 %v1045, %v1045
        %v1078 = vmul.f32 %v1046, %v1046
        %v1079 = vmul.f32 %v1047, %v1047
        %v1080 = vmul.f32 %v1048, %v1048
        %v1081 = vmul.f32 %v1049, %v1049
        %v1082 = vmul.f32 %v1050, %v1050
        %v1083 = vmul.f32 %v1051, %v1051
        %v1084 = vmul.f32 %v1052, %v1052
        %v1085 = vmul.f32 %v1053, %v1053
        %v1086 = vmul.f32 %v1054, %v1054
        %v1087 = vmul.f32 %v1055, %v1055
        %v1088 = vmul.f32 %v1056, %v1056
        %v1089 = vmul.f32 %v1057, %v1057
        %v1090 = vmul.f32 %v1058, %v1058
        %v1091 = vmul.f32 %v1059, %v1059
        %v1092 = vmul.f32 %v1060, %v1060
        %v1093 = vmul.f32 %v1061, %v1061
        %v1094 = vmul.f32 %v1062, %v1062
        %v1095 = vmul.f32 %v1063, %v1063
        %v1096 = vmul.f32 %v1064, %v1064
        %1097 = vadd.xlane.f32.xlu0 %v1065
        %v1098 = vpop.xlane.xlu0 %1097
        %1099 = vadd.xlane.f32.xlu0 %v1066
        %v1100 = vpop.xlane.xlu0 %1099
        %1101 = vadd.xlane.f32.xlu0 %v1067
        %v1102 = vpop.xlane.xlu0 %1101
        %1103 = vadd.xlane.f32.xlu0 %v1068
        %v1104 = vpop.xlane.xlu0 %1103
        %1105 = vadd.xlane.f32.xlu0 %v1069
        %v1106 = vpop.xlane.xlu0 %1105
        %1107 = vadd.xlane.f32.xlu0 %v1070
        %v1108 = vpop.xlane.xlu0 %1107
        %1109 = vadd.xlane.f32.xlu0 %v1071
        %v1110 = vpop.xlane.xlu0 %1109
        %1111 = vadd.xlane.f32.xlu0 %v1072
        %v1112 = vpop.xlane.xlu0 %1111
        %1113 = vadd.xlane.f32.xlu0 %v1073
        %v1114 = vpop.xlane.xlu0 %1113
        %1115 = vadd.xlane.f32.xlu0 %v1074
        %v1116 = vpop.xlane.xlu0 %1115
        %1117 = vadd.xlane.f32.xlu0 %v1075
        %v1118 = vpop.xlane.xlu0 %1117
        %1119 = vadd.xlane.f32.xlu0 %v1076
        %v1120 = vpop.xlane.xlu0 %1119
        %1121 = vadd.xlane.f32.xlu0 %v1077
        %v1122 = vpop.xlane.xlu0 %1121
        %1123 = vadd.xlane.f32.xlu0 %v1078
        %v1124 = vpop.xlane.xlu0 %1123
        %1125 = vadd.xlane.f32.xlu0 %v1079
        %v1126 = vpop.xlane.xlu0 %1125
        %1127 = vadd.xlane.f32.xlu0 %v1080
        %v1128 = vpop.xlane.xlu0 %1127
        %1129 = vadd.xlane.f32.xlu0 %v1081
        %v1130 = vpop.xlane.xlu0 %1129
        %1131 = vadd.xlane.f32.xlu0 %v1082
        %v1132 = vpop.xlane.xlu0 %1131
        %1133 = vadd.xlane.f32.xlu0 %v1083
        %v1134 = vpop.xlane.xlu0 %1133
        %1135 = vadd.xlane.f32.xlu0 %v1084
        %v1136 = vpop.xlane.xlu0 %1135
        %1137 = vadd.xlane.f32.xlu0 %v1085
        %v1138 = vpop.xlane.xlu0 %1137
        %1139 = vadd.xlane.f32.xlu0 %v1086
        %v1140 = vpop.xlane.xlu0 %1139
        %1141 = vadd.xlane.f32.xlu0 %v1087
        %v1142 = vpop.xlane.xlu0 %1141
        %1143 = vadd.xlane.f32.xlu0 %v1088
        %v1144 = vpop.xlane.xlu0 %1143
        %1145 = vadd.xlane.f32.xlu0 %v1089
        %v1146 = vpop.xlane.xlu0 %1145
        %1147 = vadd.xlane.f32.xlu0 %v1090
        %v1148 = vpop.xlane.xlu0 %1147
        %1149 = vadd.xlane.f32.xlu0 %v1091
        %v1150 = vpop.xlane.xlu0 %1149
        %1151 = vadd.xlane.f32.xlu0 %v1092
        %v1152 = vpop.xlane.xlu0 %1151
        %1153 = vadd.xlane.f32.xlu0 %v1093
        %v1154 = vpop.xlane.xlu0 %1153
        %1155 = vadd.xlane.f32.xlu0 %v1094
        %v1156 = vpop.xlane.xlu0 %1155
        %1157 = vadd.xlane.f32.xlu0 %v1095
        %v1158 = vpop.xlane.xlu0 %1157
        %1159 = vadd.xlane.f32.xlu0 %v1096
        %v1160 = vpop.xlane.xlu0 %1159
        %v1161 = vmul.f32 %v1098, %v531
        %v1162 = vmul.f32 %v1100, %v531
        %v1163 = vmul.f32 %v1102, %v531
        %v1164 = vmul.f32 %v1104, %v531
        %v1165 = vmul.f32 %v1106, %v531
        %v1166 = vmul.f32 %v1108, %v531
        %v1167 = vmul.f32 %v1110, %v531
        %v1168 = vmul.f32 %v1112, %v531
        %v1169 = vmul.f32 %v1114, %v531
        %v1170 = vmul.f32 %v1116, %v531
        %v1171 = vmul.f32 %v1118, %v531
        %v1172 = vmul.f32 %v1120, %v531
        %v1173 = vmul.f32 %v1122, %v531
        %v1174 = vmul.f32 %v1124, %v531
        %v1175 = vmul.f32 %v1126, %v531
        %v1176 = vmul.f32 %v1128, %v531
        %v1177 = vmul.f32 %v1130, %v531
        %v1178 = vmul.f32 %v1132, %v531
        %v1179 = vmul.f32 %v1134, %v531
        %v1180 = vmul.f32 %v1136, %v531
        %v1181 = vmul.f32 %v1138, %v531
        %v1182 = vmul.f32 %v1140, %v531
        %v1183 = vmul.f32 %v1142, %v531
        %v1184 = vmul.f32 %v1144, %v531
        %v1185 = vmul.f32 %v1146, %v531
        %v1186 = vmul.f32 %v1148, %v531
        %v1187 = vmul.f32 %v1150, %v531
        %v1188 = vmul.f32 %v1152, %v531
        %v1189 = vmul.f32 %v1154, %v531
        %v1190 = vmul.f32 %v1156, %v531
        %v1191 = vmul.f32 %v1158, %v531
        %v1192 = vmul.f32 %v1160, %v531
        %v1193 = vadd.f32 %v1161, 1e-05
        %v1194 = vadd.f32 %v1162, 1e-05
        %v1195 = vadd.f32 %v1163, 1e-05
        %v1196 = vadd.f32 %v1164, 1e-05
        %v1197 = vadd.f32 %v1165, 1e-05
        %v1198 = vadd.f32 %v1166, 1e-05
        %v1199 = vadd.f32 %v1167, 1e-05
        %v1200 = vadd.f32 %v1168, 1e-05
        %v1201 = vadd.f32 %v1169, 1e-05
        %v1202 = vadd.f32 %v1170, 1e-05
        %v1203 = vadd.f32 %v1171, 1e-05
        %v1204 = vadd.f32 %v1172, 1e-05
        %v1205 = vadd.f32 %v1173, 1e-05
        %v1206 = vadd.f32 %v1174, 1e-05
        %v1207 = vadd.f32 %v1175, 1e-05
        %v1208 = vadd.f32 %v1176, 1e-05
        %v1209 = vadd.f32 %v1177, 1e-05
        %v1210 = vadd.f32 %v1178, 1e-05
        %v1211 = vadd.f32 %v1179, 1e-05
        %v1212 = vadd.f32 %v1180, 1e-05
        %v1213 = vadd.f32 %v1181, 1e-05
        %v1214 = vadd.f32 %v1182, 1e-05
        %v1215 = vadd.f32 %v1183, 1e-05
        %v1216 = vadd.f32 %v1184, 1e-05
        %v1217 = vadd.f32 %v1185, 1e-05
        %v1218 = vadd.f32 %v1186, 1e-05
        %v1219 = vadd.f32 %v1187, 1e-05
        %v1220 = vadd.f32 %v1188, 1e-05
        %v1221 = vadd.f32 %v1189, 1e-05
        %v1222 = vadd.f32 %v1190, 1e-05
        %v1223 = vadd.f32 %v1191, 1e-05
        %v1224 = vadd.f32 %v1192, 1e-05
        %v1225 = vrsqrt.pop %v1193
        %v1226 = vrsqrt.pop %v1194
        %v1227 = vrsqrt.pop %v1195
        %v1228 = vrsqrt.pop %v1196
        %v1229 = vrsqrt.pop %v1197
        %v1230 = vrsqrt.pop %v1198
        %v1231 = vrsqrt.pop %v1199
        %v1232 = vrsqrt.pop %v1200
        %v1233 = vrsqrt.pop %v1201
        %v1234 = vrsqrt.pop %v1202
        %v1235 = vrsqrt.pop %v1203
        %v1236 = vrsqrt.pop %v1204
        %v1237 = vrsqrt.pop %v1205
        %v1238 = vrsqrt.pop %v1206
        %v1239 = vrsqrt.pop %v1207
        %v1240 = vrsqrt.pop %v1208
        %v1241 = vrsqrt.pop %v1209
        %v1242 = vrsqrt.pop %v1210
        %v1243 = vrsqrt.pop %v1211
        %v1244 = vrsqrt.pop %v1212
        %v1245 = vrsqrt.pop %v1213
        %v1246 = vrsqrt.pop %v1214
        %v1247 = vrsqrt.pop %v1215
        %v1248 = vrsqrt.pop %v1216
        %v1249 = vrsqrt.pop %v1217
        %v1250 = vrsqrt.pop %v1218
        %v1251 = vrsqrt.pop %v1219
        %v1252 = vrsqrt.pop %v1220
        %v1253 = vrsqrt.pop %v1221
        %v1254 = vrsqrt.pop %v1222
        %v1255 = vrsqrt.pop %v1223
        %v1256 = vrsqrt.pop %v1224
        %v1257 = vmul.f32 %v1033, %v1225
        %v1258 = vmul.f32 %v1034, %v1226
        %v1259 = vmul.f32 %v1035, %v1227
        %v1260 = vmul.f32 %v1036, %v1228
        %v1261 = vmul.f32 %v1037, %v1229
        %v1262 = vmul.f32 %v1038, %v1230
        %v1263 = vmul.f32 %v1039, %v1231
        %v1264 = vmul.f32 %v1040, %v1232
        %v1265 = vmul.f32 %v1041, %v1233
        %v1266 = vmul.f32 %v1042, %v1234
        %v1267 = vmul.f32 %v1043, %v1235
        %v1268 = vmul.f32 %v1044, %v1236
        %v1269 = vmul.f32 %v1045, %v1237
        %v1270 = vmul.f32 %v1046, %v1238
        %v1271 = vmul.f32 %v1047, %v1239
        %v1272 = vmul.f32 %v1048, %v1240
        %v1273 = vmul.f32 %v1049, %v1241
        %v1274 = vmul.f32 %v1050, %v1242
        %v1275 = vmul.f32 %v1051, %v1243
        %v1276 = vmul.f32 %v1052, %v1244
        %v1277 = vmul.f32 %v1053, %v1245
        %v1278 = vmul.f32 %v1054, %v1246
        %v1279 = vmul.f32 %v1055, %v1247
        %v1280 = vmul.f32 %v1056, %v1248
        %v1281 = vmul.f32 %v1057, %v1249
        %v1282 = vmul.f32 %v1058, %v1250
        %v1283 = vmul.f32 %v1059, %v1251
        %v1284 = vmul.f32 %v1060, %v1252
        %v1285 = vmul.f32 %v1061, %v1253
        %v1286 = vmul.f32 %v1062, %v1254
        %v1287 = vmul.f32 %v1063, %v1255
        %v1288 = vmul.f32 %v1064, %v1256
        %v1290 = vlaneseq
        %v1291 = vshrl.u32 %v1290, 7
        %v1292 = vsub.s32 0, %v1291
        %v1293 = vrot.slane %v465, %v1292
        %v1295 = vmul.f32 %v1257, %v1293
        %v1296 = vmul.f32 %v1258, %v1293
        %v1297 = vmul.f32 %v1259, %v1293
        %v1298 = vmul.f32 %v1260, %v1293
        %v1299 = vmul.f32 %v1261, %v1293
        %v1300 = vmul.f32 %v1262, %v1293
        %v1301 = vmul.f32 %v1263, %v1293
        %v1302 = vmul.f32 %v1264, %v1293
        %v1303 = vmul.f32 %v1265, %v1293
        %v1304 = vmul.f32 %v1266, %v1293
        %v1305 = vmul.f32 %v1267, %v1293
        %v1306 = vmul.f32 %v1268, %v1293
        %v1307 = vmul.f32 %v1269, %v1293
        %v1308 = vmul.f32 %v1270, %v1293
        %v1309 = vmul.f32 %v1271, %v1293
        %v1310 = vmul.f32 %v1272, %v1293
        %v1311 = vmul.f32 %v1273, %v1293
        %v1312 = vmul.f32 %v1274, %v1293
        %v1313 = vmul.f32 %v1275, %v1293
        %v1314 = vmul.f32 %v1276, %v1293
        %v1315 = vmul.f32 %v1277, %v1293
        %v1316 = vmul.f32 %v1278, %v1293
        %v1317 = vmul.f32 %v1279, %v1293
        %v1318 = vmul.f32 %v1280, %v1293
        %v1319 = vmul.f32 %v1281, %v1293
        %v1320 = vmul.f32 %v1282, %v1293
        %v1321 = vmul.f32 %v1283, %v1293
        %v1322 = vmul.f32 %v1284, %v1293
        %v1323 = vmul.f32 %v1285, %v1293
        %v1324 = vmul.f32 %v1286, %v1293
        %v1325 = vmul.f32 %v1287, %v1293
        %v1326 = vmul.f32 %v1288, %v1293
        %v1328 = vlaneseq
        %v1329 = vshrl.u32 %v1328, 7
        %v1330 = vsub.s32 0, %v1329
        %v1331 = vrot.slane %v466, %v1330
        %v1333 = vadd.f32 %v1295, %v1331
        %v1334 = vadd.f32 %v1296, %v1331
        %v1335 = vadd.f32 %v1297, %v1331
        %v1336 = vadd.f32 %v1298, %v1331
        %v1337 = vadd.f32 %v1299, %v1331
        %v1338 = vadd.f32 %v1300, %v1331
        %v1339 = vadd.f32 %v1301, %v1331
        %v1340 = vadd.f32 %v1302, %v1331
        %v1341 = vadd.f32 %v1303, %v1331
        %v1342 = vadd.f32 %v1304, %v1331
        %v1343 = vadd.f32 %v1305, %v1331
        %v1344 = vadd.f32 %v1306, %v1331
        %v1345 = vadd.f32 %v1307, %v1331
        %v1346 = vadd.f32 %v1308, %v1331
        %v1347 = vadd.f32 %v1309, %v1331
        %v1348 = vadd.f32 %v1310, %v1331
        %v1349 = vadd.f32 %v1311, %v1331
        %v1350 = vadd.f32 %v1312, %v1331
        %v1351 = vadd.f32 %v1313, %v1331
        %v1352 = vadd.f32 %v1314, %v1331
        %v1353 = vadd.f32 %v1315, %v1331
        %v1354 = vadd.f32 %v1316, %v1331
        %v1355 = vadd.f32 %v1317, %v1331
        %v1356 = vadd.f32 %v1318, %v1331
        %v1357 = vadd.f32 %v1319, %v1331
        %v1358 = vadd.f32 %v1320, %v1331
        %v1359 = vadd.f32 %v1321, %v1331
        %v1360 = vadd.f32 %v1322, %v1331
        %v1361 = vadd.f32 %v1323, %v1331
        %v1362 = vadd.f32 %v1324, %v1331
        %v1363 = vadd.f32 %v1325, %v1331
        %v1364 = vadd.f32 %v1326, %v1331
        %v1365 = vpack.c.bf16 %v1334, %v1333
        %v1366 = vpack.c.bf16 %v1336, %v1335
        %v1367 = vpack.c.bf16 %v1338, %v1337
        %v1368 = vpack.c.bf16 %v1340, %v1339
        %v1369 = vpack.c.bf16 %v1342, %v1341
        %v1370 = vpack.c.bf16 %v1344, %v1343
        %v1371 = vpack.c.bf16 %v1346, %v1345
        %v1372 = vpack.c.bf16 %v1348, %v1347
        %v1373 = vpack.c.bf16 %v1350, %v1349
        %v1374 = vpack.c.bf16 %v1352, %v1351
        %v1375 = vpack.c.bf16 %v1354, %v1353
        %v1376 = vpack.c.bf16 %v1356, %v1355
        %v1377 = vpack.c.bf16 %v1358, %v1357
        %v1378 = vpack.c.bf16 %v1360, %v1359
        %v1379 = vpack.c.bf16 %v1362, %v1361
        %v1380 = vpack.c.bf16 %v1364, %v1363
        %v1381 = vld [vmem:[%s5] sm:$0xff]
        %v1382 = vld [vmem:[%s5 + $0x8] sm:$0xf]
        %v1383 = vld [vmem:[%s5 + $0xc] sm:$0xff]
        %v1384 = vld [vmem:[%s5 + $0x14] sm:$0xf]
        %v1385 = vld [vmem:[%s5 + $0x18] sm:$0xff]
        %v1386 = vld [vmem:[%s5 + $0x20] sm:$0xf]
        %v1387 = vld [vmem:[%s5 + $0x24] sm:$0xff]
        %v1388 = vld [vmem:[%s5 + $0x2c] sm:$0xf]
        %v1389 = vld [vmem:[%s5 + $0x30] sm:$0xff]
        %v1390 = vld [vmem:[%s5 + $0x38] sm:$0xf]
        %v1391 = vld [vmem:[%s5 + $0x3c] sm:$0xff]
        %v1392 = vld [vmem:[%s5 + $0x44] sm:$0xf]
        %v1393 = vld [vmem:[%s5 + $0x48] sm:$0xff]
        %v1394 = vld [vmem:[%s5 + $0x50] sm:$0xf]
        %v1395 = vld [vmem:[%s5 + $0x54] sm:$0xff]
        %v1396 = vld [vmem:[%s5 + $0x5c] sm:$0xf]
        %v1397 = vld [vmem:[%s5 + $0x60] sm:$0xff]
        %v1398 = vld [vmem:[%s5 + $0x68] sm:$0xf]
        %v1399 = vld [vmem:[%s5 + $0x6c] sm:$0xff]
        %v1400 = vld [vmem:[%s5 + $0x74] sm:$0xf]
        %v1401 = vld [vmem:[%s5 + $0x78] sm:$0xff]
        %v1402 = vld [vmem:[%s5 + $0x80] sm:$0xf]
        %v1403 = vld [vmem:[%s5 + $0x84] sm:$0xff]
        %v1404 = vld [vmem:[%s5 + $0x8c] sm:$0xf]
        %v1405 = vld [vmem:[%s5 + $0x90] sm:$0xff]
        %v1406 = vld [vmem:[%s5 + $0x98] sm:$0xf]
        %v1407 = vld [vmem:[%s5 + $0x9c] sm:$0xff]
        %v1408 = vld [vmem:[%s5 + $0xa4] sm:$0xf]
        %v1409 = vld [vmem:[%s5 + $0xa8] sm:$0xff]
        %v1410 = vld [vmem:[%s5 + $0xb0] sm:$0xf]
        %v1411 = vld [vmem:[%s5 + $0xb4] sm:$0xff]
        %v1412 = vld [vmem:[%s5 + $0xbc] sm:$0xf]
        %v1413 = vld [vmem:[%s6] sm:$0x7]
        %v1415 = vlaneseq
        %v1416 = vshrl.u32 %v1415, 7
        %v1417 = vsub.s32 0, %v1416
        %v1418 = vrot.slane %v1413, %v1417
        %v1419 = vlaneseq
        %v1420 = vshrl.u32 %v1419, 7
        %v1421 = vsub.s32 1, %v1420
        %v1422 = vrot.slane %v1413, %v1421
        %v1423 = vlaneseq
        %v1424 = vshrl.u32 %v1423, 7
        %v1425 = vsub.s32 2, %v1424
        %v1426 = vrot.slane %v1413, %v1425
        %v1462 = vunpack.c.l.b16 %v1381
        %v1463 = vunpack.c.h.b16 %v1381
        %v1464 = vunpack.c.l.b16 %v1382
        %v1465 = vunpack.c.l.b16 %v1383
        %v1466 = vunpack.c.h.b16 %v1383
        %v1467 = vunpack.c.l.b16 %v1384
        %v1468 = vunpack.c.l.b16 %v1385
        %v1469 = vunpack.c.h.b16 %v1385
        %v1470 = vunpack.c.l.b16 %v1386
        %v1471 = vunpack.c.l.b16 %v1387
        %v1472 = vunpack.c.h.b16 %v1387
        %v1473 = vunpack.c.l.b16 %v1388
        %v1474 = vunpack.c.l.b16 %v1389
        %v1475 = vunpack.c.h.b16 %v1389
        %v1476 = vunpack.c.l.b16 %v1390
        %v1477 = vunpack.c.l.b16 %v1391
        %v1478 = vunpack.c.h.b16 %v1391
        %v1479 = vunpack.c.l.b16 %v1392
        %v1480 = vunpack.c.l.b16 %v1393
        %v1481 = vunpack.c.h.b16 %v1393
        %v1482 = vunpack.c.l.b16 %v1394
        %v1483 = vunpack.c.l.b16 %v1395
        %v1484 = vunpack.c.h.b16 %v1395
        %v1485 = vunpack.c.l.b16 %v1396
        %v1486 = vunpack.c.l.b16 %v1397
        %v1487 = vunpack.c.h.b16 %v1397
        %v1488 = vunpack.c.l.b16 %v1398
        %v1489 = vunpack.c.l.b16 %v1399
        %v1490 = vunpack.c.h.b16 %v1399
        %v1491 = vunpack.c.l.b16 %v1400
        %v1492 = vunpack.c.l.b16 %v1401
        %v1493 = vunpack.c.h.b16 %v1401
        %v1494 = vunpack.c.l.b16 %v1402
        %v1495 = vunpack.c.l.b16 %v1403
        %v1496 = vunpack.c.h.b16 %v1403
        %v1497 = vunpack.c.l.b16 %v1404
        %v1498 = vunpack.c.l.b16 %v1405
        %v1499 = vunpack.c.h.b16 %v1405
        %v1500 = vunpack.c.l.b16 %v1406
        %v1501 = vunpack.c.l.b16 %v1407
        %v1502 = vunpack.c.h.b16 %v1407
        %v1503 = vunpack.c.l.b16 %v1408
        %v1504 = vunpack.c.l.b16 %v1409
        %v1505 = vunpack.c.h.b16 %v1409
        %v1506 = vunpack.c.l.b16 %v1410
        %v1507 = vunpack.c.l.b16 %v1411
        %v1508 = vunpack.c.h.b16 %v1411
        %v1509 = vunpack.c.l.b16 %v1412
        %v1510 = vpack.c.b16 %v1465, %v1462
        %v1511 = vpack.c.b16 %v1466, %v1463
        %v1512 = vpack.c.b16 %v1467, %v1464
        %v1513 = vpack.c.b16 %v1471, %v1468
        %v1514 = vpack.c.b16 %v1472, %v1469
        %v1515 = vpack.c.b16 %v1473, %v1470
        %v1516 = vpack.c.b16 %v1477, %v1474
        %v1517 = vpack.c.b16 %v1478, %v1475
        %v1518 = vpack.c.b16 %v1479, %v1476
        %v1519 = vpack.c.b16 %v1483, %v1480
        %v1520 = vpack.c.b16 %v1484, %v1481
        %v1521 = vpack.c.b16 %v1485, %v1482
        %v1522 = vpack.c.b16 %v1489, %v1486
        %v1523 = vpack.c.b16 %v1490, %v1487
        %v1524 = vpack.c.b16 %v1491, %v1488
        %v1525 = vpack.c.b16 %v1495, %v1492
        %v1526 = vpack.c.b16 %v1496, %v1493
        %v1527 = vpack.c.b16 %v1497, %v1494
        %v1528 = vpack.c.b16 %v1501, %v1498
        %v1529 = vpack.c.b16 %v1502, %v1499
        %v1530 = vpack.c.b16 %v1503, %v1500
        %v1531 = vpack.c.b16 %v1507, %v1504
        %v1532 = vpack.c.b16 %v1508, %v1505
        %v1533 = vpack.c.b16 %v1509, %v1506
        %1558 = vmatprep.subr.bf16.mxu0 %v1532
        %1559 = vmatpush1.bf16.msra.mxu0 %v1531
        %1560 = vmatprep.subr.bf16.mxu0 %v1529
        %1561 = vmatpush1.bf16.msra.mxu0 %v1528
        %1562 = vmatprep.subr.bf16.mxu0 %v1526
        %1563 = vmatpush1.bf16.msra.mxu0 %v1525
        %1564 = vmatprep.subr.bf16.mxu0 %v1523
        %1565 = vmatpush1.bf16.msra.mxu0 %v1522
        %1566 = vmatprep.subr.bf16.mxu0 %v1520
        %1567 = vmatpush1.bf16.msra.mxu0 %v1519
        %1568 = vmatprep.subr.bf16.mxu0 %v1517
        %1569 = vmatpush1.bf16.msra.mxu0 %v1516
        %1570 = vmatprep.subr.bf16.mxu0 %v1514
        %1571 = vmatpush1.bf16.msra.mxu0 %v1513
        %1572 = vmatprep.subr.bf16.mxu0 %v1511
        %1573 = vmatpush1.bf16.msra.mxu0 %v1510
        %1574 = vmatprep.subr.bf16.mxu0 0
        %1575 = vmatpush2.bf16.msra.mxu0 0
        %1576 = vmatprep.subr.bf16.mxu0 0
        %1577 = vmatpush2.bf16.msra.mxu0 0
        %1578 = vmatprep.subr.bf16.mxu0 0
        %1579 = vmatpush2.bf16.msra.mxu0 0
        %1580 = vmatprep.subr.bf16.mxu0 0
        %1581 = vmatpush2.bf16.msra.mxu0 0
        %1582 = vmatprep.subr.bf16.mxu0 0
        %1583 = vmatpush2.bf16.msra.mxu0 0
        %1584 = vmatprep.subr.bf16.mxu0 0
        %1585 = vmatpush2.bf16.msra.mxu0 0
        %1586 = vmatprep.subr.bf16.mxu0 0
        %1587 = vmatpush2.bf16.msra.mxu0 0
        %1588 = vmatprep.subr.bf16.mxu0 0
        %1589 = vmatpush2.bf16.msra.mxu0 0
        %1590 = vmatprep.mubr.bf16.mxu0 0
        %1591 = vmatmul.mubr.bf16.gmra.mxu0 %v1365
        %v1592 = vpop.f32.mrf.mxu0
        %v1593 = vadd.f32 %v1418, %v1592
        %v1594 = vpop.f32.mrf.mxu0
        %v1595 = vadd.f32 %v1422, %v1594
        %v1596 = vpop.f32.mrf.mxu0
        %v1597 = vadd.f32 %v1418, %v1596
        %v1598 = vpop.f32.mrf.mxu0
        %v1599 = vadd.f32 %v1422, %v1598
        %1600 = vmatprep.mubr.bf16.mxu0 0
        %1601 = vmatmul.mubr.bf16.gmra.mxu0 %v1366
        %v1602 = vpop.f32.mrf.mxu0
        %v1603 = vadd.f32 %v1418, %v1602
        %v1604 = vpop.f32.mrf.mxu0
        %v1605 = vadd.f32 %v1422, %v1604
        %v1606 = vpop.f32.mrf.mxu0
        %v1607 = vadd.f32 %v1418, %v1606
        %v1608 = vpop.f32.mrf.mxu0
        %v1609 = vadd.f32 %v1422, %v1608
        %1610 = vmatprep.mubr.bf16.mxu0 0
        %1611 = vmatmul.mubr.bf16.gmra.mxu0 %v1367
        %v1612 = vpop.f32.mrf.mxu0
        %v1613 = vadd.f32 %v1418, %v1612
        %v1614 = vpop.f32.mrf.mxu0
        %v1615 = vadd.f32 %v1422, %v1614
        %v1616 = vpop.f32.mrf.mxu0
        %v1617 = vadd.f32 %v1418, %v1616
        %v1618 = vpop.f32.mrf.mxu0
        %v1619 = vadd.f32 %v1422, %v1618
        %1620 = vmatprep.mubr.bf16.mxu0 0
        %1621 = vmatmul.mubr.bf16.gmra.mxu0 %v1368
        %v1622 = vpop.f32.mrf.mxu0
        %v1623 = vadd.f32 %v1418, %v1622
        %v1624 = vpop.f32.mrf.mxu0
        %v1625 = vadd.f32 %v1422, %v1624
        %v1626 = vpop.f32.mrf.mxu0
        %v1627 = vadd.f32 %v1418, %v1626
        %v1628 = vpop.f32.mrf.mxu0
        %v1629 = vadd.f32 %v1422, %v1628
        %1630 = vmatprep.mubr.bf16.mxu0 0
        %1631 = vmatmul.mubr.bf16.gmra.mxu0 %v1369
        %v1632 = vpop.f32.mrf.mxu0
        %v1633 = vadd.f32 %v1418, %v1632
        %v1634 = vpop.f32.mrf.mxu0
        %v1635 = vadd.f32 %v1422, %v1634
        %v1636 = vpop.f32.mrf.mxu0
        %v1637 = vadd.f32 %v1418, %v1636
        %v1638 = vpop.f32.mrf.mxu0
        %v1639 = vadd.f32 %v1422, %v1638
        %1640 = vmatprep.mubr.bf16.mxu0 0
        %1641 = vmatmul.mubr.bf16.gmra.mxu0 %v1370
        %v1642 = vpop.f32.mrf.mxu0
        %v1643 = vadd.f32 %v1418, %v1642
        %v1644 = vpop.f32.mrf.mxu0
        %v1645 = vadd.f32 %v1422, %v1644
        %v1646 = vpop.f32.mrf.mxu0
        %v1647 = vadd.f32 %v1418, %v1646
        %v1648 = vpop.f32.mrf.mxu0
        %v1649 = vadd.f32 %v1422, %v1648
        %1650 = vmatprep.mubr.bf16.mxu0 0
        %1651 = vmatmul.mubr.bf16.gmra.mxu0 %v1371
        %v1652 = vpop.f32.mrf.mxu0
        %v1653 = vadd.f32 %v1418, %v1652
        %v1654 = vpop.f32.mrf.mxu0
        %v1655 = vadd.f32 %v1422, %v1654
        %v1656 = vpop.f32.mrf.mxu0
        %v1657 = vadd.f32 %v1418, %v1656
        %v1658 = vpop.f32.mrf.mxu0
        %v1659 = vadd.f32 %v1422, %v1658
        %1660 = vmatprep.mubr.bf16.mxu0 0
        %1661 = vmatmul.mubr.bf16.gmra.mxu0 %v1372
        %v1662 = vpop.f32.mrf.mxu0
        %v1663 = vadd.f32 %v1418, %v1662
        %v1664 = vpop.f32.mrf.mxu0
        %v1665 = vadd.f32 %v1422, %v1664
        %v1666 = vpop.f32.mrf.mxu0
        %v1667 = vadd.f32 %v1418, %v1666
        %v1668 = vpop.f32.mrf.mxu0
        %v1669 = vadd.f32 %v1422, %v1668
        %1670 = vmatprep.mubr.bf16.mxu0 0
        %1671 = vmatmul.mubr.bf16.gmra.mxu0 %v1373
        %v1672 = vpop.f32.mrf.mxu0
        %v1673 = vadd.f32 %v1418, %v1672
        %v1674 = vpop.f32.mrf.mxu0
        %v1675 = vadd.f32 %v1422, %v1674
        %v1676 = vpop.f32.mrf.mxu0
        %v1677 = vadd.f32 %v1418, %v1676
        %v1678 = vpop.f32.mrf.mxu0
        %v1679 = vadd.f32 %v1422, %v1678
        %1680 = vmatprep.mubr.bf16.mxu0 0
        %1681 = vmatmul.mubr.bf16.gmra.mxu0 %v1374
        %v1682 = vpop.f32.mrf.mxu0
        %v1683 = vadd.f32 %v1418, %v1682
        %v1684 = vpop.f32.mrf.mxu0
        %v1685 = vadd.f32 %v1422, %v1684
        %v1686 = vpop.f32.mrf.mxu0
        %v1687 = vadd.f32 %v1418, %v1686
        %v1688 = vpop.f32.mrf.mxu0
        %v1689 = vadd.f32 %v1422, %v1688
        %1690 = vmatprep.mubr.bf16.mxu0 0
        %1691 = vmatmul.mubr.bf16.gmra.mxu0 %v1375
        %v1692 = vpop.f32.mrf.mxu0
        %v1693 = vadd.f32 %v1418, %v1692
        %v1694 = vpop.f32.mrf.mxu0
        %v1695 = vadd.f32 %v1422, %v1694
        %v1696 = vpop.f32.mrf.mxu0
        %v1697 = vadd.f32 %v1418, %v1696
        %v1698 = vpop.f32.mrf.mxu0
        %v1699 = vadd.f32 %v1422, %v1698
        %1700 = vmatprep.mubr.bf16.mxu0 0
        %1701 = vmatmul.mubr.bf16.gmra.mxu0 %v1376
        %v1702 = vpop.f32.mrf.mxu0
        %v1703 = vadd.f32 %v1418, %v1702
        %v1704 = vpop.f32.mrf.mxu0
        %v1705 = vadd.f32 %v1422, %v1704
        %v1706 = vpop.f32.mrf.mxu0
        %v1707 = vadd.f32 %v1418, %v1706
        %v1708 = vpop.f32.mrf.mxu0
        %v1709 = vadd.f32 %v1422, %v1708
        %1710 = vmatprep.mubr.bf16.mxu0 0
        %1711 = vmatmul.mubr.bf16.gmra.mxu0 %v1377
        %v1712 = vpop.f32.mrf.mxu0
        %v1713 = vadd.f32 %v1418, %v1712
        %v1714 = vpop.f32.mrf.mxu0
        %v1715 = vadd.f32 %v1422, %v1714
        %v1716 = vpop.f32.mrf.mxu0
        %v1717 = vadd.f32 %v1418, %v1716
        %v1718 = vpop.f32.mrf.mxu0
        %v1719 = vadd.f32 %v1422, %v1718
        %1720 = vmatprep.mubr.bf16.mxu0 0
        %1721 = vmatmul.mubr.bf16.gmra.mxu0 %v1378
        %v1722 = vpop.f32.mrf.mxu0
        %v1723 = vadd.f32 %v1418, %v1722
        %v1724 = vpop.f32.mrf.mxu0
        %v1725 = vadd.f32 %v1422, %v1724
        %v1726 = vpop.f32.mrf.mxu0
        %v1727 = vadd.f32 %v1418, %v1726
        %v1728 = vpop.f32.mrf.mxu0
        %v1729 = vadd.f32 %v1422, %v1728
        %1730 = vmatprep.mubr.bf16.mxu0 0
        %1731 = vmatmul.mubr.bf16.gmra.mxu0 %v1379
        %v1732 = vpop.f32.mrf.mxu0
        %v1733 = vadd.f32 %v1418, %v1732
        %v1734 = vpop.f32.mrf.mxu0
        %v1735 = vadd.f32 %v1422, %v1734
        %v1736 = vpop.f32.mrf.mxu0
        %v1737 = vadd.f32 %v1418, %v1736
        %v1738 = vpop.f32.mrf.mxu0
        %v1739 = vadd.f32 %v1422, %v1738
        %1740 = vmatprep.mubr.bf16.mxu0 0
        %1741 = vmatmul.mubr.bf16.gmra.mxu0 %v1380
        %v1742 = vpop.f32.mrf.mxu0
        %v1743 = vadd.f32 %v1418, %v1742
        %v1744 = vpop.f32.mrf.mxu0
        %v1745 = vadd.f32 %v1422, %v1744
        %v1746 = vpop.f32.mrf.mxu0
        %v1747 = vadd.f32 %v1418, %v1746
        %v1748 = vpop.f32.mrf.mxu0
        %v1749 = vadd.f32 %v1422, %v1748
        %1750 = vdwg.mxu0
        %1751 = vmatprep.subr.bf16.mxu0 0
        %1752 = vmatpush1.bf16.msra.mxu0 %v1533
        %1753 = vmatprep.subr.bf16.mxu0 0
        %1754 = vmatpush1.bf16.msra.mxu0 %v1530
        %1755 = vmatprep.subr.bf16.mxu0 0
        %1756 = vmatpush1.bf16.msra.mxu0 %v1527
        %1757 = vmatprep.subr.bf16.mxu0 0
        %1758 = vmatpush1.bf16.msra.mxu0 %v1524
        %1759 = vmatprep.subr.bf16.mxu0 0
        %1760 = vmatpush1.bf16.msra.mxu0 %v1521
        %1761 = vmatprep.subr.bf16.mxu0 0
        %1762 = vmatpush1.bf16.msra.mxu0 %v1518
        %1763 = vmatprep.subr.bf16.mxu0 0
        %1764 = vmatpush1.bf16.msra.mxu0 %v1515
        %1765 = vmatprep.subr.bf16.mxu0 0
        %1766 = vmatpush1.bf16.msra.mxu0 %v1512
        %1767 = vmatprep.subr.bf16.mxu0 0
        %1768 = vmatpush2.bf16.msra.mxu0 0
        %1769 = vmatprep.subr.bf16.mxu0 0
        %1770 = vmatpush2.bf16.msra.mxu0 0
        %1771 = vmatprep.subr.bf16.mxu0 0
        %1772 = vmatpush2.bf16.msra.mxu0 0
        %1773 = vmatprep.subr.bf16.mxu0 0
        %1774 = vmatpush2.bf16.msra.mxu0 0
        %1775 = vmatprep.subr.bf16.mxu0 0
        %1776 = vmatpush2.bf16.msra.mxu0 0
        %1777 = vmatprep.subr.bf16.mxu0 0
        %1778 = vmatpush2.bf16.msra.mxu0 0
        %1779 = vmatprep.subr.bf16.mxu0 0
        %1780 = vmatpush2.bf16.msra.mxu0 0
        %1781 = vmatprep.subr.bf16.mxu0 0
        %1782 = vmatpush2.bf16.msra.mxu0 0
        %1783 = vmatprep.mubr.bf16.mxu0 0
        %1784 = vmatmul.mubr.bf16.gmra.mxu0 %v1365
        %v1785 = vpop.f32.mrf.mxu0
        %v1786 = vadd.f32 %v1426, %v1785
        %v1787 = vpop.f32.mrf.mxu0
        %v1788 = vpop.f32.mrf.mxu0
        %v1789 = vadd.f32 %v1426, %v1788
        %v1790 = vpop.f32.mrf.mxu0
        %1791 = vmatprep.mubr.bf16.mxu0 0
        %1792 = vmatmul.mubr.bf16.gmra.mxu0 %v1366
        %v1793 = vpop.f32.mrf.mxu0
        %v1794 = vadd.f32 %v1426, %v1793
        %v1795 = vpop.f32.mrf.mxu0
        %v1796 = vpop.f32.mrf.mxu0
        %v1797 = vadd.f32 %v1426, %v1796
        %v1798 = vpop.f32.mrf.mxu0
        %1799 = vmatprep.mubr.bf16.mxu0 0
        %1800 = vmatmul.mubr.bf16.gmra.mxu0 %v1367
        %v1801 = vpop.f32.mrf.mxu0
        %v1802 = vadd.f32 %v1426, %v1801
        %v1803 = vpop.f32.mrf.mxu0
        %v1804 = vpop.f32.mrf.mxu0
        %v1805 = vadd.f32 %v1426, %v1804
        %v1806 = vpop.f32.mrf.mxu0
        %1807 = vmatprep.mubr.bf16.mxu0 0
        %1808 = vmatmul.mubr.bf16.gmra.mxu0 %v1368
        %v1809 = vpop.f32.mrf.mxu0
        %v1810 = vadd.f32 %v1426, %v1809
        %v1811 = vpop.f32.mrf.mxu0
        %v1812 = vpop.f32.mrf.mxu0
        %v1813 = vadd.f32 %v1426, %v1812
        %v1814 = vpop.f32.mrf.mxu0
        %1815 = vmatprep.mubr.bf16.mxu0 0
        %1816 = vmatmul.mubr.bf16.gmra.mxu0 %v1369
        %v1817 = vpop.f32.mrf.mxu0
        %v1818 = vadd.f32 %v1426, %v1817
        %v1819 = vpop.f32.mrf.mxu0
        %v1820 = vpop.f32.mrf.mxu0
        %v1821 = vadd.f32 %v1426, %v1820
        %v1822 = vpop.f32.mrf.mxu0
        %1823 = vmatprep.mubr.bf16.mxu0 0
        %1824 = vmatmul.mubr.bf16.gmra.mxu0 %v1370
        %v1825 = vpop.f32.mrf.mxu0
        %v1826 = vadd.f32 %v1426, %v1825
        %v1827 = vpop.f32.mrf.mxu0
        %v1828 = vpop.f32.mrf.mxu0
        %v1829 = vadd.f32 %v1426, %v1828
        %v1830 = vpop.f32.mrf.mxu0
        %1831 = vmatprep.mubr.bf16.mxu0 0
        %1832 = vmatmul.mubr.bf16.gmra.mxu0 %v1371
        %v1833 = vpop.f32.mrf.mxu0
        %v1834 = vadd.f32 %v1426, %v1833
        %v1835 = vpop.f32.mrf.mxu0
        %v1836 = vpop.f32.mrf.mxu0
        %v1837 = vadd.f32 %v1426, %v1836
        %v1838 = vpop.f32.mrf.mxu0
        %1839 = vmatprep.mubr.bf16.mxu0 0
        %1840 = vmatmul.mubr.bf16.gmra.mxu0 %v1372
        %v1841 = vpop.f32.mrf.mxu0
        %v1842 = vadd.f32 %v1426, %v1841
        %v1843 = vpop.f32.mrf.mxu0
        %v1844 = vpop.f32.mrf.mxu0
        %v1845 = vadd.f32 %v1426, %v1844
        %v1846 = vpop.f32.mrf.mxu0
        %1847 = vmatprep.mubr.bf16.mxu0 0
        %1848 = vmatmul.mubr.bf16.gmra.mxu0 %v1373
        %v1849 = vpop.f32.mrf.mxu0
        %v1850 = vadd.f32 %v1426, %v1849
        %v1851 = vpop.f32.mrf.mxu0
        %v1852 = vpop.f32.mrf.mxu0
        %v1853 = vadd.f32 %v1426, %v1852
        %v1854 = vpop.f32.mrf.mxu0
        %1855 = vmatprep.mubr.bf16.mxu0 0
        %1856 = vmatmul.mubr.bf16.gmra.mxu0 %v1374
        %v1857 = vpop.f32.mrf.mxu0
        %v1858 = vadd.f32 %v1426, %v1857
        %v1859 = vpop.f32.mrf.mxu0
        %v1860 = vpop.f32.mrf.mxu0
        %v1861 = vadd.f32 %v1426, %v1860
        %v1862 = vpop.f32.mrf.mxu0
        %1863 = vmatprep.mubr.bf16.mxu0 0
        %1864 = vmatmul.mubr.bf16.gmra.mxu0 %v1375
        %v1865 = vpop.f32.mrf.mxu0
        %v1866 = vadd.f32 %v1426, %v1865
        %v1867 = vpop.f32.mrf.mxu0
        %v1868 = vpop.f32.mrf.mxu0
        %v1869 = vadd.f32 %v1426, %v1868
        %v1870 = vpop.f32.mrf.mxu0
        %1871 = vmatprep.mubr.bf16.mxu0 0
        %1872 = vmatmul.mubr.bf16.gmra.mxu0 %v1376
        %v1873 = vpop.f32.mrf.mxu0
        %v1874 = vadd.f32 %v1426, %v1873
        %v1875 = vpop.f32.mrf.mxu0
        %v1876 = vpop.f32.mrf.mxu0
        %v1877 = vadd.f32 %v1426, %v1876
        %v1878 = vpop.f32.mrf.mxu0
        %1879 = vmatprep.mubr.bf16.mxu0 0
        %1880 = vmatmul.mubr.bf16.gmra.mxu0 %v1377
        %v1881 = vpop.f32.mrf.mxu0
        %v1882 = vadd.f32 %v1426, %v1881
        %v1883 = vpop.f32.mrf.mxu0
        %v1884 = vpop.f32.mrf.mxu0
        %v1885 = vadd.f32 %v1426, %v1884
        %v1886 = vpop.f32.mrf.mxu0
        %1887 = vmatprep.mubr.bf16.mxu0 0
        %1888 = vmatmul.mubr.bf16.gmra.mxu0 %v1378
        %v1889 = vpop.f32.mrf.mxu0
        %v1890 = vadd.f32 %v1426, %v1889
        %v1891 = vpop.f32.mrf.mxu0
        %v1892 = vpop.f32.mrf.mxu0
        %v1893 = vadd.f32 %v1426, %v1892
        %v1894 = vpop.f32.mrf.mxu0
        %1895 = vmatprep.mubr.bf16.mxu0 0
        %1896 = vmatmul.mubr.bf16.gmra.mxu0 %v1379
        %v1897 = vpop.f32.mrf.mxu0
        %v1898 = vadd.f32 %v1426, %v1897
        %v1899 = vpop.f32.mrf.mxu0
        %v1900 = vpop.f32.mrf.mxu0
        %v1901 = vadd.f32 %v1426, %v1900
        %v1902 = vpop.f32.mrf.mxu0
        %1903 = vmatprep.mubr.bf16.mxu0 0
        %1904 = vmatmul.mubr.bf16.gmra.mxu0 %v1380
        %v1905 = vpop.f32.mrf.mxu0
        %v1906 = vadd.f32 %v1426, %v1905
        %v1907 = vpop.f32.mrf.mxu0
        %v1908 = vpop.f32.mrf.mxu0
        %v1909 = vadd.f32 %v1426, %v1908
        %v1910 = vpop.f32.mrf.mxu0
        %1911 = vdwg.mxu0
        %v1912 = vmul.f32 %v1593, 0.088388346
        %v1913 = vmul.f32 %v1597, 0.088388346
        %v1914 = vmul.f32 %v1603, 0.088388346
        %v1915 = vmul.f32 %v1607, 0.088388346
        %v1916 = vmul.f32 %v1613, 0.088388346
        %v1917 = vmul.f32 %v1617, 0.088388346
        %v1918 = vmul.f32 %v1623, 0.088388346
        %v1919 = vmul.f32 %v1627, 0.088388346
        %v1920 = vmul.f32 %v1633, 0.088388346
        %v1921 = vmul.f32 %v1637, 0.088388346
        %v1922 = vmul.f32 %v1643, 0.088388346
        %v1923 = vmul.f32 %v1647, 0.088388346
        %v1924 = vmul.f32 %v1653, 0.088388346
        %v1925 = vmul.f32 %v1657, 0.088388346
        %v1926 = vmul.f32 %v1663, 0.088388346
        %v1927 = vmul.f32 %v1667, 0.088388346
        %v1928 = vmul.f32 %v1673, 0.088388346
        %v1929 = vmul.f32 %v1677, 0.088388346
        %v1930 = vmul.f32 %v1683, 0.088388346
        %v1931 = vmul.f32 %v1687, 0.088388346
        %v1932 = vmul.f32 %v1693, 0.088388346
        %v1933 = vmul.f32 %v1697, 0.088388346
        %v1934 = vmul.f32 %v1703, 0.088388346
        %v1935 = vmul.f32 %v1707, 0.088388346
        %v1936 = vmul.f32 %v1713, 0.088388346
        %v1937 = vmul.f32 %v1717, 0.088388346
        %v1938 = vmul.f32 %v1723, 0.088388346
        %v1939 = vmul.f32 %v1727, 0.088388346
        %v1940 = vmul.f32 %v1733, 0.088388346
        %v1941 = vmul.f32 %v1737, 0.088388346
        %v1942 = vmul.f32 %v1743, 0.088388346
        %v1943 = vmul.f32 %v1747, 0.088388346
        %v1944 = vpack.c.bf16 %v1913, %v1912
        %v1945 = vpack.c.bf16 %v1915, %v1914
        %v1946 = vpack.c.bf16 %v1917, %v1916
        %v1947 = vpack.c.bf16 %v1919, %v1918
        %v1948 = vpack.c.bf16 %v1921, %v1920
        %v1949 = vpack.c.bf16 %v1923, %v1922
        %v1950 = vpack.c.bf16 %v1925, %v1924
        %v1951 = vpack.c.bf16 %v1927, %v1926
        %v1952 = vpack.c.bf16 %v1929, %v1928
        %v1953 = vpack.c.bf16 %v1931, %v1930
        %v1954 = vpack.c.bf16 %v1933, %v1932
        %v1955 = vpack.c.bf16 %v1935, %v1934
        %v1956 = vpack.c.bf16 %v1937, %v1936
        %v1957 = vpack.c.bf16 %v1939, %v1938
        %v1958 = vpack.c.bf16 %v1941, %v1940
        %v1959 = vpack.c.bf16 %v1943, %v1942
        %v1976 = vunpack.c.l.b16 %v1944
        %v1977 = vunpack.c.h.b16 %v1944
        %v1978 = vunpack.c.l.b16 %v1945
        %v1979 = vunpack.c.h.b16 %v1945
        %v1980 = vunpack.c.l.b16 %v1946
        %v1981 = vunpack.c.h.b16 %v1946
        %v1982 = vunpack.c.l.b16 %v1947
        %v1983 = vunpack.c.h.b16 %v1947
        %v1984 = vunpack.c.l.b16 %v1948
        %v1985 = vunpack.c.h.b16 %v1948
        %v1986 = vunpack.c.l.b16 %v1949
        %v1987 = vunpack.c.h.b16 %v1949
        %v1988 = vunpack.c.l.b16 %v1950
        %v1989 = vunpack.c.h.b16 %v1950
        %v1990 = vunpack.c.l.b16 %v1951
        %v1991 = vunpack.c.h.b16 %v1951
        %v1992 = vunpack.c.l.b16 %v1952
        %v1993 = vunpack.c.h.b16 %v1952
        %v1994 = vunpack.c.l.b16 %v1953
        %v1995 = vunpack.c.h.b16 %v1953
        %v1996 = vunpack.c.l.b16 %v1954
        %v1997 = vunpack.c.h.b16 %v1954
        %v1998 = vunpack.c.l.b16 %v1955
        %v1999 = vunpack.c.h.b16 %v1955
        %v2000 = vunpack.c.l.b16 %v1956
        %v2001 = vunpack.c.h.b16 %v1956
        %v2002 = vunpack.c.l.b16 %v1957
        %v2003 = vunpack.c.h.b16 %v1957
        %v2004 = vunpack.c.l.b16 %v1958
        %v2005 = vunpack.c.h.b16 %v1958
        %v2006 = vunpack.c.l.b16 %v1959
        %v2007 = vunpack.c.h.b16 %v1959
        %v2008 = vpack.c.b16 %v1976, %v1976
        %v2009 = vpack.c.b16 %v1977, %v1977
        %v2010 = vpack.c.b16 %v1978, %v1978
        %v2011 = vpack.c.b16 %v1979, %v1979
        %v2012 = vpack.c.b16 %v1980, %v1980
        %v2013 = vpack.c.b16 %v1981, %v1981
        %v2014 = vpack.c.b16 %v1982, %v1982
        %v2015 = vpack.c.b16 %v1983, %v1983
        %v2016 = vpack.c.b16 %v1984, %v1984
        %v2017 = vpack.c.b16 %v1985, %v1985
        %v2018 = vpack.c.b16 %v1986, %v1986
        %v2019 = vpack.c.b16 %v1987, %v1987
        %v2020 = vpack.c.b16 %v1988, %v1988
        %v2021 = vpack.c.b16 %v1989, %v1989
        %v2022 = vpack.c.b16 %v1990, %v1990
        %v2023 = vpack.c.b16 %v1991, %v1991
        %v2024 = vpack.c.b16 %v1992, %v1992
        %v2025 = vpack.c.b16 %v1993, %v1993
        %v2026 = vpack.c.b16 %v1994, %v1994
        %v2027 = vpack.c.b16 %v1995, %v1995
        %v2028 = vpack.c.b16 %v1996, %v1996
        %v2029 = vpack.c.b16 %v1997, %v1997
        %v2030 = vpack.c.b16 %v1998, %v1998
        %v2031 = vpack.c.b16 %v1999, %v1999
        %v2032 = vpack.c.b16 %v2000, %v2000
        %v2033 = vpack.c.b16 %v2001, %v2001
        %v2034 = vpack.c.b16 %v2002, %v2002
        %v2035 = vpack.c.b16 %v2003, %v2003
        %v2036 = vpack.c.b16 %v2004, %v2004
        %v2037 = vpack.c.b16 %v2005, %v2005
        %v2038 = vpack.c.b16 %v2006, %v2006
        %v2039 = vpack.c.b16 %v2007, %v2007
        %2072 = vst [vmem:[%s417] sm:$0xf] %v2008
        %2073 = vst [vmem:[%s417 + $0x4] sm:$0xf] %v2009
        %2074 = vst [vmem:[%s417 + $0x8] sm:$0xf] %v2010
        %2075 = vst [vmem:[%s417 + $0xc] sm:$0xf] %v2011
        %2076 = vst [vmem:[%s417 + $0x10] sm:$0xf] %v2012
        %2077 = vst [vmem:[%s417 + $0x14] sm:$0xf] %v2013
        %2078 = vst [vmem:[%s417 + $0x18] sm:$0xf] %v2014
        %2079 = vst [vmem:[%s417 + $0x1c] sm:$0xf] %v2015
        %2080 = vst [vmem:[%s417 + $0x20] sm:$0xf] %v2016
        %2081 = vst [vmem:[%s417 + $0x24] sm:$0xf] %v2017
        %2082 = vst [vmem:[%s417 + $0x28] sm:$0xf] %v2018
        %2083 = vst [vmem:[%s417 + $0x2c] sm:$0xf] %v2019
        %2084 = vst [vmem:[%s417 + $0x30] sm:$0xf] %v2020
        %2085 = vst [vmem:[%s417 + $0x34] sm:$0xf] %v2021
        %2086 = vst [vmem:[%s417 + $0x38] sm:$0xf] %v2022
        %2087 = vst [vmem:[%s417 + $0x3c] sm:$0xf] %v2023
        %2088 = vst [vmem:[%s417 + $0x40] sm:$0xf] %v2024
        %2089 = vst [vmem:[%s417 + $0x44] sm:$0xf] %v2025
        %2090 = vst [vmem:[%s417 + $0x48] sm:$0xf] %v2026
        %2091 = vst [vmem:[%s417 + $0x4c] sm:$0xf] %v2027
        %2092 = vst [vmem:[%s417 + $0x50] sm:$0xf] %v2028
        %2093 = vst [vmem:[%s417 + $0x54] sm:$0xf] %v2029
        %2094 = vst [vmem:[%s417 + $0x58] sm:$0xf] %v2030
        %2095 = vst [vmem:[%s417 + $0x5c] sm:$0xf] %v2031
        %2096 = vst [vmem:[%s417 + $0x60] sm:$0xf] %v2032
        %2097 = vst [vmem:[%s417 + $0x64] sm:$0xf] %v2033
        %2098 = vst [vmem:[%s417 + $0x68] sm:$0xf] %v2034
        %2099 = vst [vmem:[%s417 + $0x6c] sm:$0xf] %v2035
        %2100 = vst [vmem:[%s417 + $0x70] sm:$0xf] %v2036
        %2101 = vst [vmem:[%s417 + $0x74] sm:$0xf] %v2037
        %2102 = vst [vmem:[%s417 + $0x78] sm:$0xf] %v2038
        %2103 = vst [vmem:[%s417 + $0x7c] sm:$0xf] %v2039
        %v2104 = vpack.c.bf16 %v1599, %v1595
        %v2105 = vpack.c.bf16 %v1789, %v1786
        %v2106 = vpack.c.bf16 %v1609, %v1605
        %v2107 = vpack.c.bf16 %v1797, %v1794
        %v2108 = vpack.c.bf16 %v1619, %v1615
        %v2109 = vpack.c.bf16 %v1805, %v1802
        %v2110 = vpack.c.bf16 %v1629, %v1625
        %v2111 = vpack.c.bf16 %v1813, %v1810
        %v2112 = vpack.c.bf16 %v1639, %v1635
        %v2113 = vpack.c.bf16 %v1821, %v1818
        %v2114 = vpack.c.bf16 %v1649, %v1645
        %v2115 = vpack.c.bf16 %v1829, %v1826
        %v2116 = vpack.c.bf16 %v1659, %v1655
        %v2117 = vpack.c.bf16 %v1837, %v1834
        %v2118 = vpack.c.bf16 %v1669, %v1665
        %v2119 = vpack.c.bf16 %v1845, %v1842
        %v2120 = vpack.c.bf16 %v1679, %v1675
        %v2121 = vpack.c.bf16 %v1853, %v1850
        %v2122 = vpack.c.bf16 %v1689, %v1685
        %v2123 = vpack.c.bf16 %v1861, %v1858
        %v2124 = vpack.c.bf16 %v1699, %v1695
        %v2125 = vpack.c.bf16 %v1869, %v1866
        %v2126 = vpack.c.bf16 %v1709, %v1705
        %v2127 = vpack.c.bf16 %v1877, %v1874
        %v2128 = vpack.c.bf16 %v1719, %v1715
        %v2129 = vpack.c.bf16 %v1885, %v1882
        %v2130 = vpack.c.bf16 %v1729, %v1725
        %v2131 = vpack.c.bf16 %v1893, %v1890
        %v2132 = vpack.c.bf16 %v1739, %v1735
        %v2133 = vpack.c.bf16 %v1901, %v1898
        %v2134 = vpack.c.bf16 %v1749, %v1745
        %v2135 = vpack.c.bf16 %v1909, %v1906
        %v2168 = vunpack.c.l.b16 %v2104
        %v2169 = vunpack.c.l.b16 %v2105
        %v2170 = vunpack.c.h.b16 %v2104
        %v2171 = vunpack.c.h.b16 %v2105
        %v2172 = vunpack.c.l.b16 %v2106
        %v2173 = vunpack.c.l.b16 %v2107
        %v2174 = vunpack.c.h.b16 %v2106
        %v2175 = vunpack.c.h.b16 %v2107
        %v2176 = vunpack.c.l.b16 %v2108
        %v2177 = vunpack.c.l.b16 %v2109
        %v2178 = vunpack.c.h.b16 %v2108
        %v2179 = vunpack.c.h.b16 %v2109
        %v2180 = vunpack.c.l.b16 %v2110
        %v2181 = vunpack.c.l.b16 %v2111
        %v2182 = vunpack.c.h.b16 %v2110
        %v2183 = vunpack.c.h.b16 %v2111
        %v2184 = vunpack.c.l.b16 %v2112
        %v2185 = vunpack.c.l.b16 %v2113
        %v2186 = vunpack.c.h.b16 %v2112
        %v2187 = vunpack.c.h.b16 %v2113
        %v2188 = vunpack.c.l.b16 %v2114
        %v2189 = vunpack.c.l.b16 %v2115
        %v2190 = vunpack.c.h.b16 %v2114
        %v2191 = vunpack.c.h.b16 %v2115
        %v2192 = vunpack.c.l.b16 %v2116
        %v2193 = vunpack.c.l.b16 %v2117
        %v2194 = vunpack.c.h.b16 %v2116
        %v2195 = vunpack.c.h.b16 %v2117
        %v2196 = vunpack.c.l.b16 %v2118
        %v2197 = vunpack.c.l.b16 %v2119
        %v2198 = vunpack.c.h.b16 %v2118
        %v2199 = vunpack.c.h.b16 %v2119
        %v2200 = vunpack.c.l.b16 %v2120
        %v2201 = vunpack.c.l.b16 %v2121
        %v2202 = vunpack.c.h.b16 %v2120
        %v2203 = vunpack.c.h.b16 %v2121
        %v2204 = vunpack.c.l.b16 %v2122
        %v2205 = vunpack.c.l.b16 %v2123
        %v2206 = vunpack.c.h.b16 %v2122
        %v2207 = vunpack.c.h.b16 %v2123
        %v2208 = vunpack.c.l.b16 %v2124
        %v2209 = vunpack.c.l.b16 %v2125
        %v2210 = vunpack.c.h.b16 %v2124
        %v2211 = vunpack.c.h.b16 %v2125
        %v2212 = vunpack.c.l.b16 %v2126
        %v2213 = vunpack.c.l.b16 %v2127
        %v2214 = vunpack.c.h.b16 %v2126
        %v2215 = vunpack.c.h.b16 %v2127
        %v2216 = vunpack.c.l.b16 %v2128
        %v2217 = vunpack.c.l.b16 %v2129
        %v2218 = vunpack.c.h.b16 %v2128
        %v2219 = vunpack.c.h.b16 %v2129
        %v2220 = vunpack.c.l.b16 %v2130
        %v2221 = vunpack.c.l.b16 %v2131
        %v2222 = vunpack.c.h.b16 %v2130
        %v2223 = vunpack.c.h.b16 %v2131
        %v2224 = vunpack.c.l.b16 %v2132
        %v2225 = vunpack.c.l.b16 %v2133
        %v2226 = vunpack.c.h.b16 %v2132
        %v2227 = vunpack.c.h.b16 %v2133
        %v2228 = vunpack.c.l.b16 %v2134
        %v2229 = vunpack.c.l.b16 %v2135
        %v2230 = vunpack.c.h.b16 %v2134
        %v2231 = vunpack.c.h.b16 %v2135
        %v2232 = vpack.c.b16 %v2169, %v2168
        %v2233 = vpack.c.b16 %v2171, %v2170
        %v2234 = vpack.c.b16 %v2173, %v2172
        %v2235 = vpack.c.b16 %v2175, %v2174
        %v2236 = vpack.c.b16 %v2177, %v2176
        %v2237 = vpack.c.b16 %v2179, %v2178
        %v2238 = vpack.c.b16 %v2181, %v2180
        %v2239 = vpack.c.b16 %v2183, %v2182
        %v2240 = vpack.c.b16 %v2185, %v2184
        %v2241 = vpack.c.b16 %v2187, %v2186
        %v2242 = vpack.c.b16 %v2189, %v2188
        %v2243 = vpack.c.b16 %v2191, %v2190
        %v2244 = vpack.c.b16 %v2193, %v2192
        %v2245 = vpack.c.b16 %v2195, %v2194
        %v2246 = vpack.c.b16 %v2197, %v2196
        %v2247 = vpack.c.b16 %v2199, %v2198
        %v2248 = vpack.c.b16 %v2201, %v2200
        %v2249 = vpack.c.b16 %v2203, %v2202
        %v2250 = vpack.c.b16 %v2205, %v2204
        %v2251 = vpack.c.b16 %v2207, %v2206
        %v2252 = vpack.c.b16 %v2209, %v2208
        %v2253 = vpack.c.b16 %v2211, %v2210
        %v2254 = vpack.c.b16 %v2213, %v2212
        %v2255 = vpack.c.b16 %v2215, %v2214
        %v2256 = vpack.c.b16 %v2217, %v2216
        %v2257 = vpack.c.b16 %v2219, %v2218
        %v2258 = vpack.c.b16 %v2221, %v2220
        %v2259 = vpack.c.b16 %v2223, %v2222
        %v2260 = vpack.c.b16 %v2225, %v2224
        %v2261 = vpack.c.b16 %v2227, %v2226
        %v2262 = vpack.c.b16 %v2229, %v2228
        %v2263 = vpack.c.b16 %v2231, %v2230
        %2296 = vst [vmem:[%s428] sm:$0xff] %v2232
        %2297 = vst [vmem:[%s428 + $0x8] sm:$0xff] %v2233
        %2298 = vst [vmem:[%s428 + $0x10] sm:$0xff] %v2234
        %2299 = vst [vmem:[%s428 + $0x18] sm:$0xff] %v2235
        %2300 = vst [vmem:[%s428 + $0x20] sm:$0xff] %v2236
        %2301 = vst [vmem:[%s428 + $0x28] sm:$0xff] %v2237
        %2302 = vst [vmem:[%s428 + $0x30] sm:$0xff] %v2238
        %2303 = vst [vmem:[%s428 + $0x38] sm:$0xff] %v2239
        %2304 = vst [vmem:[%s428 + $0x40] sm:$0xff] %v2240
        %2305 = vst [vmem:[%s428 + $0x48] sm:$0xff] %v2241
        %2306 = vst [vmem:[%s428 + $0x50] sm:$0xff] %v2242
        %2307 = vst [vmem:[%s428 + $0x58] sm:$0xff] %v2243
        %2308 = vst [vmem:[%s428 + $0x60] sm:$0xff] %v2244
        %2309 = vst [vmem:[%s428 + $0x68] sm:$0xff] %v2245
        %2310 = vst [vmem:[%s428 + $0x70] sm:$0xff] %v2246
        %2311 = vst [vmem:[%s428 + $0x78] sm:$0xff] %v2247
        %2312 = vst [vmem:[%s428 + $0x80] sm:$0xff] %v2248
        %2313 = vst [vmem:[%s428 + $0x88] sm:$0xff] %v2249
        %2314 = vst [vmem:[%s428 + $0x90] sm:$0xff] %v2250
        %2315 = vst [vmem:[%s428 + $0x98] sm:$0xff] %v2251
        %2316 = vst [vmem:[%s428 + $0xa0] sm:$0xff] %v2252
        %2317 = vst [vmem:[%s428 + $0xa8] sm:$0xff] %v2253
        %2318 = vst [vmem:[%s428 + $0xb0] sm:$0xff] %v2254
        %2319 = vst [vmem:[%s428 + $0xb8] sm:$0xff] %v2255
        %2320 = vst [vmem:[%s428 + $0xc0] sm:$0xff] %v2256
        %2321 = vst [vmem:[%s428 + $0xc8] sm:$0xff] %v2257
        %2322 = vst [vmem:[%s428 + $0xd0] sm:$0xff] %v2258
        %2323 = vst [vmem:[%s428 + $0xd8] sm:$0xff] %v2259
        %2324 = vst [vmem:[%s428 + $0xe0] sm:$0xff] %v2260
        %2325 = vst [vmem:[%s428 + $0xe8] sm:$0xff] %v2261
        %2326 = vst [vmem:[%s428 + $0xf0] sm:$0xff] %v2262
        %2327 = vst [vmem:[%s428 + $0xf8] sm:$0xff] %v2263
        %s2328 = smul.u32 32, %s30
        %p2329 = scmp.lt.s32.totalorder %s29, 1
        %s2330 = scalar_select %p2329, %s29, 1
        %p2331 = scmp.lt.s32.totalorder %s2328, 63
        %s2332 = scalar_select %p2331, %s2328, 63
        %s2333 = smul.addr %s2330, 64
        %s2334 = sadd.s32 %s2332, %s2333
        %s2335 = smul.addr %s2334, 4
        %s2336 = scalar_lea.vmem %s7, %s2335
        %s2337 = smul.u32 32, %s30
        %p2338 = scmp.lt.s32.totalorder %s29, 1
        %s2339 = scalar_select %p2338, %s29, 1
        %p2340 = scmp.lt.s32.totalorder %s2337, 63
        %s2341 = scalar_select %p2340, %s2337, 63
        %s2342 = smul.addr %s2341, 2
        %s2343 = smul.addr %s2339, 128
        %s2344 = sadd.s32 %s2342, %s2343
        %s2345 = smul.addr %s2344, 4
        %s2346 = scalar_lea.vmem %s8, %s2345
        // Predicated region
        $region69: #{_forward.2} parent=47 // pred_check
          %p2347 = pneg %p211
        $region70: #{_forward.2} parent=47 // pred_check_branch
          %2349 = sbr.rel (%p2347) target = $region72
        $region71: #{_forward.2} parent=47 // pred_region
          %s2350 = smul.u32 32, %s30
        $region72: #{_forward.2} parent=47 // pred_fallthru
          _
        // Predicated region
        $region73: #{_forward.2} parent=47 // pred_check
          %p2351 = pneg %p239
        $region74: #{_forward.2} parent=47 // pred_check_branch
          %2353 = sbr.rel (%p2351) target = $region76
        $region75: #{_forward.2} parent=47 // pred_region
          %s2354 = smul.u32 32, %s30
        $region76: #{_forward.2} parent=47 // pred_fallthru
          _
      $region48: #{_forward.2} parent=5 // pred_fallthru
        _
      %p2355 = scmp.le.s32.totalorder 2, %s20
      // Predicated region
      $region77: #{_forward.2} parent=5 // pred_check
        %p2356 = pneg %p2355
      $region78: #{_forward.2} parent=5 // pred_check_branch
        %2358 = sbr.rel (%p2356) target = $region80
      $region79: #{_forward.2} parent=5 // pred_region
        %s2359 = ssub.s32 %s20, 2
        // Predicated region
        $region81: #{_forward.2} parent=79 // pred_check
          %p2360 = pneg %p217
        $region82: #{_forward.2} parent=79 // pred_check_branch
          %2362 = sbr.rel (%p2360) target = $region84
        $region83: #{_forward.2} parent=79 // pred_region
          %s2363 = smul.u32 32, %s32
          %p2364 = scmp.lt.s32.totalorder %s31, 1
          %s2365 = scalar_select %p2364, %s31, 1
          %p2366 = scmp.lt.s32.totalorder %s2363, 63
          %s2367 = scalar_select %p2366, %s2363, 63
          %s2368 = smul.addr %s2365, 64
          %s2369 = sadd.s32 %s2367, %s2368
          %s2370 = smul.addr %s2369, 4
          %s2371 = scalar_lea.vmem %s7, %s2370
        $region84: #{_forward.2} parent=79 // pred_fallthru
          _
        // Predicated region
        $region85: #{_forward.2} parent=79 // pred_check
          %p2372 = pneg %p245
        $region86: #{_forward.2} parent=79 // pred_check_branch
          %2374 = sbr.rel (%p2372) target = $region88
        $region87: #{_forward.2} parent=79 // pred_region
          %s2375 = smul.u32 32, %s32
          %p2376 = scmp.lt.s32.totalorder %s31, 1
          %s2377 = scalar_select %p2376, %s31, 1
          %p2378 = scmp.lt.s32.totalorder %s2375, 63
          %s2379 = scalar_select %p2378, %s2375, 63
          %s2380 = smul.addr %s2379, 2
          %s2381 = smul.addr %s2377, 128
          %s2382 = sadd.s32 %s2380, %s2381
          %s2383 = smul.addr %s2382, 4
          %s2384 = scalar_lea.vmem %s8, %s2383
        $region88: #{_forward.2} parent=79 // pred_fallthru
          _
      $region80: #{_forward.2} parent=5 // pred_fallthru
        _
    $region6: #{_forward.2} parent=1 // loop_footer
      %s24 = sadd.s32 1, %s20
    $region7: #{_forward.2} parent=1 // loop_footer_branch
      %19 = sbr.rel target = $region3
    $region8: #{_forward.2} parent=1 // loop_exit
      _
    %2385 = vsyncpa [#allocation3], 1
    %s2386 = scalar_lea.sflag [#allocation3], 1
    %2387 = vsyncpa %s2386, 1
    %2388 = vsyncpa [#allocation5], 1
    %2389 = vsyncpa [#allocation8], 1

// kernel: _forward.3
$region0: #{_forward.3}
  #allocation0 [shape = 'u32[]', space=smem, size = 0x4, offset = 0x4, fixed_abs, tag = 'smem constant byte address 0x4 - core index']
  #allocation1 [shape = 'u32[144,128]{1,0:T(1,128)}', space=vmem, size = 0x12000, scoped, tag = 'internal scratch']
  #allocation2 [shape = 'f32[128,1]{1,0:T(8,128)}', space=vmem, size = 0x10000, scoped, tag = 'scratch operand']
  #allocation3 [shape = 'f32[128,1]{1,0:T(8,128)}', space=vmem, size = 0x10000, scoped, tag = 'scratch operand']
  #allocation4 [shape = 'f32[128,128]{1,0:T(8,128)}', space=vmem, size = 0x10000, scoped, tag = 'scratch operand']
  %s0 = inlined_call_operand.vmem [shape: bf16[2,512,128], index: 0, kind: input, shape index: {}]
  %s1 = inlined_call_operand.vmem [shape: bf16[2,512,256], index: 1, kind: input, shape index: {}]
  %s2 = inlined_call_operand.vmem [shape: f32[2,512,128], index: 2, kind: input, shape index: {}]
  %s3 = inlined_call_operand.vmem [shape: f32[1,128], index: 3, kind: input, shape index: {}]
  %s4 = inlined_call_operand.vmem [shape: f32[1,128], index: 4, kind: input, shape index: {}]
  %s5 = inlined_call_operand.vmem [shape: bf16[128,128], index: 5, kind: input, shape index: {}]
  %s6 = inlined_call_operand.vmem [shape: f32[1,128], index: 6, kind: input, shape index: {}]
  %s7 = inlined_call_operand.vmem [shape: bf16[128,256], index: 7, kind: input, shape index: {}]
  %s8 = inlined_call_operand.vmem [shape: f32[1,256], index: 8, kind: input, shape index: {}]
  %s9 = inlined_call_operand.vmem [shape: bf16[256,128], index: 9, kind: input, shape index: {}]
  %s10 = inlined_call_operand.vmem [shape: f32[1,128], index: 10, kind: input, shape index: {}]
  %s11 = inlined_call_operand.hbm [shape: f32[2,512,128], index: 11, kind: output, shape index: {}]
  %s12 = sld [smem:[#allocation0]]
  $region85: #{_forward.3} parent=0
    _
  %s14 = ssub.s32 1, %s12
  %s15 = scalar_select 0, %s14, %s12
  $region1: #{_forward.3} parent=0
    #allocation5 [shape = 'u8[131072]{0}', space=vmem, size = 0x20000, scoped, tag = 'output window, operand 0']
    #allocation6 [shape = 's32[2]{0}', space=sflag, size = 0x8, scoped, tag = 'scoped memory for _forward.3']
    %16 = vsyncpa [#allocation6], 0
    %s17 = scalar_lea.sflag [#allocation6], 1
    %18 = vsyncpa %s17, 0
    loop: start=0, step=1, limit=18
    $region2: #{_forward.3} parent=1 // loop_pre_header
      _
    $region3: #{_forward.3} parent=1 // loop_header
      %s20 = sphi 0, %s24
      %p21 = scmp.ge.s32.totalorder %s20, 18
      %s27 = sphi 0, %s46
      %s28 = sphi 0, %s42
      %s29 = sphi 0, %s38
      %s30 = sphi 0, %s27
      %s31 = sphi 0, %s28
      %s32 = sphi 0, %s29
      %s33 = sphi 0, %s30
      %s34 = sphi 0, %s31
      %s35 = sphi 0, %s32
      %s51 = sphi 0, %s53
      %s54 = sphi 0, %s51
      %s55 = sphi 0, %s54
      %s71 = sphi 0, %s55
      %s79 = sphi 0, %s81
      %s82 = sphi 0, %s79
      %s83 = sphi 0, %s82
      %s99 = sphi 0, %s83
      %s107 = sphi 0, %s109
      %s110 = sphi 0, %s107
      %s111 = sphi 0, %s110
      %s127 = sphi 0, %s111
      %s131 = sphi 0, %s131
      %s133 = sphi 0, %s131
      %s134 = sphi 0, %s133
      %s148 = sphi 0, %s134
      %s152 = sphi 0, %s152
      %s154 = sphi 0, %s152
      %s155 = sphi 0, %s154
      %s169 = sphi 0, %s155
      %s173 = sphi 0, %s173
      %s175 = sphi 0, %s173
      %s176 = sphi 0, %s175
      %s190 = sphi 0, %s176
      %s194 = sphi 0, %s194
      %s196 = sphi 0, %s194
      %s197 = sphi 0, %s196
      %s211 = sphi 0, %s197
      %s215 = sphi 0, %s215
      %s217 = sphi 0, %s215
      %s218 = sphi 0, %s217
      %s232 = sphi 0, %s218
      %s236 = sphi 0, %s236
      %s238 = sphi 0, %s236
      %s239 = sphi 0, %s238
      %s253 = sphi 0, %s239
      %s257 = sphi 0, %s257
      %s259 = sphi 0, %s257
      %s260 = sphi 0, %s259
      %s274 = sphi 0, %s260
      %s278 = sphi 0, %s278
      %s280 = sphi 0, %s278
      %s281 = sphi 0, %s280
      %s295 = sphi 0, %s281
      %s303 = sphi 0, %s305
      %s306 = sphi 0, %s303
      %s307 = sphi 0, %s306
      %s323 = sphi 0, %s307
    $region4: #{_forward.3} parent=1 // loop_header_branch
      %23 = sbr.rel (%p21) target = $region8
    $region5: #{_forward.3} parent=1 // loop_body
      %s25 = ssub.s32 %s20, 1
      %s26 = ssub.s32 %s20, 2
      %s36 = sadd.s32 1, %s29
      %p37 = scmp.ge.s32.totalorder %s36, 2
      %s38 = scalar_select %p37, 0, %s36
      %s39 = sadd.s32 1, %s28
      %s40 = scalar_select %p37, %s39, %s28
      %p41 = scmp.ge.s32.totalorder %s40, 4
      %s42 = scalar_select %p41, 0, %s40
      %s43 = sadd.s32 1, %s27
      %s44 = scalar_select %p41, %s43, %s27
      %p45 = scmp.ge.s32.totalorder %s44, 2
      %s46 = scalar_select %p45, 0, %s44
      %s47 = ssub.s32 %s27, %s46
      %s48 = ssub.s32 %s28, %s42
      %s49 = sor.u32 %s47, %s48
      %p50 = scmp.eq.s32.totalorder %s49, 0
      %s52 = sadd.s32 %s51, 1
      %s53 = scalar_select %p50, %s51, %s52
      %p56 = pneg %p50
      %p57 = scmp.eq.s32.totalorder %s20, 15
      %p58 = por %p56, %p57
      %p59 = scmp.ne.s32.totalorder %s51, %s54
      %p60 = scmp.eq.s32.totalorder %s20, 0
      %p61 = por %p59, %p60
      %p62 = scmp.ne.s32.totalorder %s51, %s54
      %p63 = scmp.eq.s32.totalorder %s25, 15
      %p64 = por %p62, %p63
      %p65 = scmp.ne.s32.totalorder %s54, %s55
      %p66 = scmp.eq.s32.totalorder %s25, 0
      %p67 = por %p65, %p66
      %p68 = scmp.ne.s32.totalorder %s54, %s55
      %p69 = scmp.eq.s32.totalorder %s26, 15
      %p70 = por %p68, %p69
      %p72 = scmp.ne.s32.totalorder %s55, %s71
      %p73 = scmp.eq.s32.totalorder %s26, 0
      %p74 = por %p72, %p73
      %s75 = ssub.s32 %s27, %s46
      %s76 = ssub.s32 %s29, %s38
      %s77 = sor.u32 %s75, %s76
      %p78 = scmp.eq.s32.totalorder %s77, 0
      %s80 = sadd.s32 %s79, 1
      %s81 = scalar_select %p78, %s79, %s80
      %p84 = pneg %p78
      %p85 = scmp.eq.s32.totalorder %s20, 15
      %p86 = por %p84, %p85
      %p87 = scmp.ne.s32.totalorder %s79, %s82
      %p88 = scmp.eq.s32.totalorder %s20, 0
      %p89 = por %p87, %p88
      %p90 = scmp.ne.s32.totalorder %s79, %s82
      %p91 = scmp.eq.s32.totalorder %s25, 15
      %p92 = por %p90, %p91
      %p93 = scmp.ne.s32.totalorder %s82, %s83
      %p94 = scmp.eq.s32.totalorder %s25, 0
      %p95 = por %p93, %p94
      %p96 = scmp.ne.s32.totalorder %s82, %s83
      %p97 = scmp.eq.s32.totalorder %s26, 15
      %p98 = por %p96, %p97
      %p100 = scmp.ne.s32.totalorder %s83, %s99
      %p101 = scmp.eq.s32.totalorder %s26, 0
      %p102 = por %p100, %p101
      %s103 = ssub.s32 %s27, %s46
      %s104 = ssub.s32 %s28, %s42
      %s105 = sor.u32 %s103, %s104
      %p106 = scmp.eq.s32.totalorder %s105, 0
      %s108 = sadd.s32 %s107, 1
      %s109 = scalar_select %p106, %s107, %s108
      %p112 = pneg %p106
      %p113 = scmp.eq.s32.totalorder %s20, 15
      %p114 = por %p112, %p113
      %p115 = scmp.ne.s32.totalorder %s107, %s110
      %p116 = scmp.eq.s32.totalorder %s20, 0
      %p117 = por %p115, %p116
      %p118 = scmp.ne.s32.totalorder %s107, %s110
      %p119 = scmp.eq.s32.totalorder %s25, 15
      %p120 = por %p118, %p119
      %p121 = scmp.ne.s32.totalorder %s110, %s111
      %p122 = scmp.eq.s32.totalorder %s25, 0
      %p123 = por %p121, %p122
      %p124 = scmp.ne.s32.totalorder %s110, %s111
      %p125 = scmp.eq.s32.totalorder %s26, 15
      %p126 = por %p124, %p125
      %p128 = scmp.ne.s32.totalorder %s111, %s127
      %p129 = scmp.eq.s32.totalorder %s26, 0
      %p130 = por %p128, %p129
      %s132 = sadd.s32 %s131, 1
      %p135 = scmp.eq.s32.totalorder %s20, 15
      %p136 = scmp.ne.s32.totalorder %s131, %s133
      %p137 = scmp.eq.s32.totalorder %s20, 0
      %p138 = por %p136, %p137
      %p139 = scmp.ne.s32.totalorder %s131, %s133
      %p140 = scmp.eq.s32.totalorder %s25, 15
      %p141 = por %p139, %p140
      %p142 = scmp.ne.s32.totalorder %s133, %s134
      %p143 = scmp.eq.s32.totalorder %s25, 0
      %p144 = por %p142, %p143
      %p145 = scmp.ne.s32.totalorder %s133, %s134
      %p146 = scmp.eq.s32.totalorder %s26, 15
      %p147 = por %p145, %p146
      %p149 = scmp.ne.s32.totalorder %s134, %s148
      %p150 = scmp.eq.s32.totalorder %s26, 0
      %p151 = por %p149, %p150
      %s153 = sadd.s32 %s152, 1
      %p156 = scmp.eq.s32.totalorder %s20, 15
      %p157 = scmp.ne.s32.totalorder %s152, %s154
      %p158 = scmp.eq.s32.totalorder %s20, 0
      %p159 = por %p157, %p158
      %p160 = scmp.ne.s32.totalorder %s152, %s154
      %p161 = scmp.eq.s32.totalorder %s25, 15
      %p162 = por %p160, %p161
      %p163 = scmp.ne.s32.totalorder %s154, %s155
      %p164 = scmp.eq.s32.totalorder %s25, 0
      %p165 = por %p163, %p164
      %p166 = scmp.ne.s32.totalorder %s154, %s155
      %p167 = scmp.eq.s32.totalorder %s26, 15
      %p168 = por %p166, %p167
      %p170 = scmp.ne.s32.totalorder %s155, %s169
      %p171 = scmp.eq.s32.totalorder %s26, 0
      %p172 = por %p170, %p171
      %s174 = sadd.s32 %s173, 1
      %p177 = scmp.eq.s32.totalorder %s20, 15
      %p178 = scmp.ne.s32.totalorder %s173, %s175
      %p179 = scmp.eq.s32.totalorder %s20, 0
      %p180 = por %p178, %p179
      %p181 = scmp.ne.s32.totalorder %s173, %s175
      %p182 = scmp.eq.s32.totalorder %s25, 15
      %p183 = por %p181, %p182
      %p184 = scmp.ne.s32.totalorder %s175, %s176
      %p185 = scmp.eq.s32.totalorder %s25, 0
      %p186 = por %p184, %p185
      %p187 = scmp.ne.s32.totalorder %s175, %s176
      %p188 = scmp.eq.s32.totalorder %s26, 15
      %p189 = por %p187, %p188
      %p191 = scmp.ne.s32.totalorder %s176, %s190
      %p192 = scmp.eq.s32.totalorder %s26, 0
      %p193 = por %p191, %p192
      %s195 = sadd.s32 %s194, 1
      %p198 = scmp.eq.s32.totalorder %s20, 15
      %p199 = scmp.ne.s32.totalorder %s194, %s196
      %p200 = scmp.eq.s32.totalorder %s20, 0
      %p201 = por %p199, %p200
      %p202 = scmp.ne.s32.totalorder %s194, %s196
      %p203 = scmp.eq.s32.totalorder %s25, 15
      %p204 = por %p202, %p203
      %p205 = scmp.ne.s32.totalorder %s196, %s197
      %p206 = scmp.eq.s32.totalorder %s25, 0
      %p207 = por %p205, %p206
      %p208 = scmp.ne.s32.totalorder %s196, %s197
      %p209 = scmp.eq.s32.totalorder %s26, 15
      %p210 = por %p208, %p209
      %p212 = scmp.ne.s32.totalorder %s197, %s211
      %p213 = scmp.eq.s32.totalorder %s26, 0
      %p214 = por %p212, %p213
      %s216 = sadd.s32 %s215, 1
      %p219 = scmp.eq.s32.totalorder %s20, 15
      %p220 = scmp.ne.s32.totalorder %s215, %s217
      %p221 = scmp.eq.s32.totalorder %s20, 0
      %p222 = por %p220, %p221
      %p223 = scmp.ne.s32.totalorder %s215, %s217
      %p224 = scmp.eq.s32.totalorder %s25, 15
      %p225 = por %p223, %p224
      %p226 = scmp.ne.s32.totalorder %s217, %s218
      %p227 = scmp.eq.s32.totalorder %s25, 0
      %p228 = por %p226, %p227
      %p229 = scmp.ne.s32.totalorder %s217, %s218
      %p230 = scmp.eq.s32.totalorder %s26, 15
      %p231 = por %p229, %p230
      %p233 = scmp.ne.s32.totalorder %s218, %s232
      %p234 = scmp.eq.s32.totalorder %s26, 0
      %p235 = por %p233, %p234
      %s237 = sadd.s32 %s236, 1
      %p240 = scmp.eq.s32.totalorder %s20, 15
      %p241 = scmp.ne.s32.totalorder %s236, %s238
      %p242 = scmp.eq.s32.totalorder %s20, 0
      %p243 = por %p241, %p242
      %p244 = scmp.ne.s32.totalorder %s236, %s238
      %p245 = scmp.eq.s32.totalorder %s25, 15
      %p246 = por %p244, %p245
      %p247 = scmp.ne.s32.totalorder %s238, %s239
      %p248 = scmp.eq.s32.totalorder %s25, 0
      %p249 = por %p247, %p248
      %p250 = scmp.ne.s32.totalorder %s238, %s239
      %p251 = scmp.eq.s32.totalorder %s26, 15
      %p252 = por %p250, %p251
      %p254 = scmp.ne.s32.totalorder %s239, %s253
      %p255 = scmp.eq.s32.totalorder %s26, 0
      %p256 = por %p254, %p255
      %s258 = sadd.s32 %s257, 1
      %p261 = scmp.eq.s32.totalorder %s20, 15
      %p262 = scmp.ne.s32.totalorder %s257, %s259
      %p263 = scmp.eq.s32.totalorder %s20, 0
      %p264 = por %p262, %p263
      %p265 = scmp.ne.s32.totalorder %s257, %s259
      %p266 = scmp.eq.s32.totalorder %s25, 15
      %p267 = por %p265, %p266
      %p268 = scmp.ne.s32.totalorder %s259, %s260
      %p269 = scmp.eq.s32.totalorder %s25, 0
      %p270 = por %p268, %p269
      %p271 = scmp.ne.s32.totalorder %s259, %s260
      %p272 = scmp.eq.s32.totalorder %s26, 15
      %p273 = por %p271, %p272
      %p275 = scmp.ne.s32.totalorder %s260, %s274
      %p276 = scmp.eq.s32.totalorder %s26, 0
      %p277 = por %p275, %p276
      %s279 = sadd.s32 %s278, 1
      %p282 = scmp.eq.s32.totalorder %s20, 15
      %p283 = scmp.ne.s32.totalorder %s278, %s280
      %p284 = scmp.eq.s32.totalorder %s20, 0
      %p285 = por %p283, %p284
      %p286 = scmp.ne.s32.totalorder %s278, %s280
      %p287 = scmp.eq.s32.totalorder %s25, 15
      %p288 = por %p286, %p287
      %p289 = scmp.ne.s32.totalorder %s280, %s281
      %p290 = scmp.eq.s32.totalorder %s25, 0
      %p291 = por %p289, %p290
      %p292 = scmp.ne.s32.totalorder %s280, %s281
      %p293 = scmp.eq.s32.totalorder %s26, 15
      %p294 = por %p292, %p293
      %p296 = scmp.ne.s32.totalorder %s281, %s295
      %p297 = scmp.eq.s32.totalorder %s26, 0
      %p298 = por %p296, %p297
      %s299 = ssub.s32 %s27, %s46
      %s300 = ssub.s32 %s28, %s42
      %s301 = sor.u32 %s299, %s300
      %p302 = scmp.eq.s32.totalorder %s301, 0
      %s304 = sadd.s32 %s303, 1
      %s305 = scalar_select %p302, %s303, %s304
      %p308 = pneg %p302
      %p309 = scmp.eq.s32.totalorder %s20, 15
      %p310 = por %p308, %p309
      %p311 = scmp.ne.s32.totalorder %s303, %s306
      %p312 = scmp.eq.s32.totalorder %s20, 0
      %p313 = por %p311, %p312
      %p314 = scmp.ne.s32.totalorder %s303, %s306
      %p315 = scmp.eq.s32.totalorder %s25, 15
      %p316 = por %p314, %p315
      %p317 = scmp.ne.s32.totalorder %s306, %s307
      %p318 = scmp.eq.s32.totalorder %s25, 0
      %p319 = por %p317, %p318
      %p320 = scmp.ne.s32.totalorder %s306, %s307
      %p321 = scmp.eq.s32.totalorder %s26, 15
      %p322 = por %p320, %p321
      %p324 = scmp.ne.s32.totalorder %s307, %s323
      %p325 = scmp.eq.s32.totalorder %s26, 0
      %p326 = por %p324, %p325
      %p327 = scmp.le.s32.totalorder 1, %s20
      %p328 = scmp.lt.s32.totalorder %s20, 17
      %p329 = pnand %p327, %p328
      %p330 = pneg %p329
      // Predicated region
      $region9: #{_forward.3} parent=5 // pred_check
        _
      $region10: #{_forward.3} parent=5 // pred_check_branch
        %332 = sbr.rel (%p329) target = $region12
      $region11: #{_forward.3} parent=5 // pred_region
        %s333 = ssub.s32 %s20, 1
        // Predicated region
        $region13: #{_forward.3} parent=11 // pred_check
          %p334 = pneg %p144
        $region14: #{_forward.3} parent=11 // pred_check_branch
          %336 = sbr.rel (%p334) target = $region16
        $region15: #{_forward.3} parent=11 // pred_region
          _
        $region16: #{_forward.3} parent=11 // pred_fallthru
          _
        // Predicated region
        $region17: #{_forward.3} parent=11 // pred_check
          %p337 = pneg %p165
        $region18: #{_forward.3} parent=11 // pred_check_branch
          %339 = sbr.rel (%p337) target = $region20
        $region19: #{_forward.3} parent=11 // pred_region
          _
        $region20: #{_forward.3} parent=11 // pred_fallthru
          _
        // Predicated region
        $region21: #{_forward.3} parent=11 // pred_check
          %p340 = pneg %p186
        $region22: #{_forward.3} parent=11 // pred_check_branch
          %342 = sbr.rel (%p340) target = $region24
        $region23: #{_forward.3} parent=11 // pred_region
          _
        $region24: #{_forward.3} parent=11 // pred_fallthru
          _
        // Predicated region
        $region25: #{_forward.3} parent=11 // pred_check
          %p343 = pneg %p207
        $region26: #{_forward.3} parent=11 // pred_check_branch
          %345 = sbr.rel (%p343) target = $region28
        $region27: #{_forward.3} parent=11 // pred_region
          _
        $region28: #{_forward.3} parent=11 // pred_fallthru
          _
        // Predicated region
        $region29: #{_forward.3} parent=11 // pred_check
          %p346 = pneg %p228
        $region30: #{_forward.3} parent=11 // pred_check_branch
          %348 = sbr.rel (%p346) target = $region32
        $region31: #{_forward.3} parent=11 // pred_region
          _
        $region32: #{_forward.3} parent=11 // pred_fallthru
          _
        // Predicated region
        $region33: #{_forward.3} parent=11 // pred_check
          %p349 = pneg %p249
        $region34: #{_forward.3} parent=11 // pred_check_branch
          %351 = sbr.rel (%p349) target = $region36
        $region35: #{_forward.3} parent=11 // pred_region
          _
        $region36: #{_forward.3} parent=11 // pred_fallthru
          _
        // Predicated region
        $region37: #{_forward.3} parent=11 // pred_check
          %p352 = pneg %p270
        $region38: #{_forward.3} parent=11 // pred_check_branch
          %354 = sbr.rel (%p352) target = $region40
        $region39: #{_forward.3} parent=11 // pred_region
          _
        $region40: #{_forward.3} parent=11 // pred_fallthru
          _
        // Predicated region
        $region41: #{_forward.3} parent=11 // pred_check
          %p355 = pneg %p291
        $region42: #{_forward.3} parent=11 // pred_check_branch
          %357 = sbr.rel (%p355) target = $region44
        $region43: #{_forward.3} parent=11 // pred_region
          _
        $region44: #{_forward.3} parent=11 // pred_fallthru
          _
      $region12: #{_forward.3} parent=5 // pred_fallthru
        _
      %p358 = scmp.lt.s32.totalorder %s20, 16
      // Predicated region
      $region45: #{_forward.3} parent=5 // pred_check
        %p359 = pneg %p358
      $region46: #{_forward.3} parent=5 // pred_check_branch
        %361 = sbr.rel (%p359) target = $region48
      $region47: #{_forward.3} parent=5 // pred_region
        // Predicated region
        $region49: #{_forward.3} parent=47 // pred_check
          %p362 = pneg %p61
        $region50: #{_forward.3} parent=47 // pred_check_branch
          %364 = sbr.rel (%p362) target = $region52
        $region51: #{_forward.3} parent=47 // pred_region
          %s365 = smul.u32 16, %s28
          %p366 = scmp.lt.s32.totalorder %s27, 1
          %s367 = scalar_select %p366, %s27, 1
          %p368 = scmp.lt.s32.totalorder %s365, 63
          %s369 = scalar_select %p368, %s365, 63
          %s370 = smul.addr %s367, 64
          %s371 = sadd.s32 %s369, %s370
          %s372 = smul.addr %s371, 4
          %s373 = scalar_lea.vmem %s0, %s372
          %s374 = smul.u32 16, %s28
        $region52: #{_forward.3} parent=47 // pred_fallthru
          _
        // Predicated region
        $region53: #{_forward.3} parent=47 // pred_check
          %p375 = pneg %p89
        $region54: #{_forward.3} parent=47 // pred_check_branch
          %377 = sbr.rel (%p375) target = $region56
        $region55: #{_forward.3} parent=47 // pred_region
          %s378 = smul.u32 32, %s29
          %p379 = scmp.lt.s32.totalorder %s27, 1
          %s380 = scalar_select %p379, %s27, 1
          %p381 = scmp.lt.s32.totalorder %s378, 63
          %s382 = scalar_select %p381, %s378, 63
          %s383 = smul.addr %s382, 2
          %s384 = smul.addr %s380, 128
          %s385 = sadd.s32 %s383, %s384
          %s386 = smul.addr %s385, 4
          %s387 = scalar_lea.vmem %s1, %s386
          %s388 = smul.u32 32, %s29
        $region56: #{_forward.3} parent=47 // pred_fallthru
          _
        // Predicated region
        $region57: #{_forward.3} parent=47 // pred_check
          %p389 = pneg %p117
        $region58: #{_forward.3} parent=47 // pred_check_branch
          %391 = sbr.rel (%p389) target = $region60
        $region59: #{_forward.3} parent=47 // pred_region
          %s392 = smul.u32 16, %s28
          %p393 = scmp.lt.s32.totalorder %s27, 1
          %s394 = scalar_select %p393, %s27, 1
          %p395 = scmp.lt.s32.totalorder %s392, 63
          %s396 = scalar_select %p395, %s392, 63
          %s397 = smul.addr %s394, 64
          %s398 = sadd.s32 %s396, %s397
          %s399 = smul.addr %s398, 8
          %s400 = scalar_lea.vmem %s2, %s399
          %s401 = smul.u32 16, %s28
        $region60: #{_forward.3} parent=47 // pred_fallthru
          _
      $region48: #{_forward.3} parent=5 // pred_fallthru
        _
      %p402 = scmp.le.s32.totalorder 1, %s20
      %p403 = scmp.lt.s32.totalorder %s20, 17
      %p404 = pnand %p402, %p403
      %p405 = pneg %p404
      // Predicated region
      $region61: #{_forward.3} parent=5 // pred_check
        _
      $region62: #{_forward.3} parent=5 // pred_check_branch
        %407 = sbr.rel (%p404) target = $region64
      $region63: #{_forward.3} parent=5 // pred_region
        %s408 = ssub.s32 %s20, 1
        %s409 = smul.u32 16, %s31
        %p410 = scmp.lt.s32.totalorder %s30, 1
        %s411 = scalar_select %p410, %s30, 1
        %p412 = scmp.lt.s32.totalorder %s409, 63
        %s413 = scalar_select %p412, %s409, 63
        %s414 = smul.addr %s411, 64
        %s415 = sadd.s32 %s413, %s414
        %s416 = smul.addr %s415, 4
        %s417 = scalar_lea.vmem %s0, %s416
        %p418 = pneg %p67
        %p419 = pneg %p64
        %s420 = smul.u32 32, %s32
        %p421 = scmp.lt.s32.totalorder %s30, 1
        %s422 = scalar_select %p421, %s30, 1
        %p423 = scmp.lt.s32.totalorder %s420, 63
        %s424 = scalar_select %p423, %s420, 63
        %s425 = smul.addr %s424, 2
        %s426 = smul.addr %s422, 128
        %s427 = sadd.s32 %s425, %s426
        %s428 = smul.addr %s427, 4
        %s429 = scalar_lea.vmem %s1, %s428
        %p430 = pneg %p95
        %p431 = pneg %p92
        %s432 = smul.u32 16, %s31
        %p433 = scmp.lt.s32.totalorder %s30, 1
        %s434 = scalar_select %p433, %s30, 1
        %p435 = scmp.lt.s32.totalorder %s432, 63
        %s436 = scalar_select %p435, %s432, 63
        %s437 = smul.addr %s434, 64
        %s438 = sadd.s32 %s436, %s437
        %s439 = smul.addr %s438, 8
        %s440 = scalar_lea.vmem %s2, %s439
        %p441 = pneg %p123
        %p442 = pneg %p120
        %p443 = pneg %p144
        %p444 = pneg %p141
        %p445 = pneg %p165
        %p446 = pneg %p162
        %p447 = pneg %p186
        %p448 = pneg %p183
        %p449 = pneg %p207
        %p450 = pneg %p204
        %p451 = pneg %p228
        %p452 = pneg %p225
        %p453 = pneg %p249
        %p454 = pneg %p246
        %p455 = pneg %p270
        %p456 = pneg %p267
        %p457 = pneg %p291
        %p458 = pneg %p288
        %p459 = pneg %p319
        %p460 = pneg %p316
        %s461 = sand.u32 %s306, 1
        %s462 = scalar_lea.sflag [#allocation6], %s461
        %s463 = sand.u32 %s306, 1
        %s464 = smul.addr %s463, 128
        %s465 = scalar_lea.vmem [#allocation5], %s464
        %s466 = smul.u32 16, %s31
        %p467 = scmp.lt.s32.totalorder %s30, 1
        %s468 = scalar_select %p467, %s30, 1
        %p469 = scmp.lt.s32.totalorder %s466, 63
        %s470 = scalar_select %p469, %s466, 63
        %s471 = smul.addr %s468, 64
        %s472 = sadd.s32 %s470, %s471
        %s473 = smul.addr %s472, 4
        %s474 = scalar_lea.vmem %s0, %s473
        %s475 = smul.u32 16, %s31
        %s476 = smul.u32 32, %s32
        %p477 = scmp.lt.s32.totalorder %s30, 1
        %s478 = scalar_select %p477, %s30, 1
        %p479 = scmp.lt.s32.totalorder %s476, 63
        %s480 = scalar_select %p479, %s476, 63
        %s481 = smul.addr %s480, 2
        %s482 = smul.addr %s478, 128
        %s483 = sadd.s32 %s481, %s482
        %s484 = smul.addr %s483, 4
        %s485 = scalar_lea.vmem %s1, %s484
        %s486 = smul.u32 32, %s32
        %s487 = smul.u32 16, %s31
        %p488 = scmp.lt.s32.totalorder %s30, 1
        %s489 = scalar_select %p488, %s30, 1
        %p490 = scmp.lt.s32.totalorder %s487, 63
        %s491 = scalar_select %p490, %s487, 63
        %s492 = smul.addr %s489, 64
        %s493 = sadd.s32 %s491, %s492
        %s494 = smul.addr %s493, 8
        %s495 = scalar_lea.vmem %s2, %s494
        %s496 = smul.u32 16, %s31
        %s497 = smul.u32 16, %s31
        %p499 = scmp.eq.s32.totalorder %s32, 0
        // Predicated region
        $region65: #{_forward.3} parent=63 // pred_check
          %p500 = pneg %p499
        $region66: #{_forward.3} parent=63 // pred_check_branch
          %502 = sbr.rel (%p500) target = $region68
        $region67: #{_forward.3} parent=63 // pred_region
          %vm503 = vcmask 7168
          %504 = vst.msk [vmem:[#allocation2] sm:$0xff] %vm503, -inf
          %505 = vst.msk [vmem:[#allocation2 + $0x8] sm:$0xff] %vm503, -inf
          %506 = vst.msk [vmem:[#allocation2 + $0x10] sm:$0xff] %vm503, -inf
          %507 = vst.msk [vmem:[#allocation2 + $0x18] sm:$0xff] %vm503, -inf
          %508 = vst.msk [vmem:[#allocation2 + $0x20] sm:$0xff] %vm503, -inf
          %509 = vst.msk [vmem:[#allocation2 + $0x28] sm:$0xff] %vm503, -inf
          %510 = vst.msk [vmem:[#allocation2 + $0x30] sm:$0xff] %vm503, -inf
          %511 = vst.msk [vmem:[#allocation2 + $0x38] sm:$0xff] %vm503, -inf
          %512 = vst.msk [vmem:[#allocation2 + $0x40] sm:$0xff] %vm503, -inf
          %513 = vst.msk [vmem:[#allocation2 + $0x48] sm:$0xff] %vm503, -inf
          %514 = vst.msk [vmem:[#allocation2 + $0x50] sm:$0xff] %vm503, -inf
          %515 = vst.msk [vmem:[#allocation2 + $0x58] sm:$0xff] %vm503, -inf
          %516 = vst.msk [vmem:[#allocation2 + $0x60] sm:$0xff] %vm503, -inf
          %517 = vst.msk [vmem:[#allocation2 + $0x68] sm:$0xff] %vm503, -inf
          %518 = vst.msk [vmem:[#allocation2 + $0x70] sm:$0xff] %vm503, -inf
          %519 = vst.msk [vmem:[#allocation2 + $0x78] sm:$0xff] %vm503, -inf
          %520 = vst.msk [vmem:[#allocation3] sm:$0xff] %vm503, 0.0
          %521 = vst.msk [vmem:[#allocation3 + $0x8] sm:$0xff] %vm503, 0.0
          %522 = vst.msk [vmem:[#allocation3 + $0x10] sm:$0xff] %vm503, 0.0
          %523 = vst.msk [vmem:[#allocation3 + $0x18] sm:$0xff] %vm503, 0.0
          %524 = vst.msk [vmem:[#allocation3 + $0x20] sm:$0xff] %vm503, 0.0
          %525 = vst.msk [vmem:[#allocation3 + $0x28] sm:$0xff] %vm503, 0.0
          %526 = vst.msk [vmem:[#allocation3 + $0x30] sm:$0xff] %vm503, 0.0
          %527 = vst.msk [vmem:[#allocation3 + $0x38] sm:$0xff] %vm503, 0.0
          %528 = vst.msk [vmem:[#allocation3 + $0x40] sm:$0xff] %vm503, 0.0
          %529 = vst.msk [vmem:[#allocation3 + $0x48] sm:$0xff] %vm503, 0.0
          %530 = vst.msk [vmem:[#allocation3 + $0x50] sm:$0xff] %vm503, 0.0
          %531 = vst.msk [vmem:[#allocation3 + $0x58] sm:$0xff] %vm503, 0.0
          %532 = vst.msk [vmem:[#allocation3 + $0x60] sm:$0xff] %vm503, 0.0
          %533 = vst.msk [vmem:[#allocation3 + $0x68] sm:$0xff] %vm503, 0.0
          %534 = vst.msk [vmem:[#allocation3 + $0x70] sm:$0xff] %vm503, 0.0
          %535 = vst.msk [vmem:[#allocation3 + $0x78] sm:$0xff] %vm503, 0.0
          %536 = vst [vmem:[#allocation4] sm:$0xff] 0.0
          %537 = vst [vmem:[#allocation4 + $0x8] sm:$0xff] 0.0
          %538 = vst [vmem:[#allocation4 + $0x10] sm:$0xff] 0.0
          %539 = vst [vmem:[#allocation4 + $0x18] sm:$0xff] 0.0
          %540 = vst [vmem:[#allocation4 + $0x20] sm:$0xff] 0.0
          %541 = vst [vmem:[#allocation4 + $0x28] sm:$0xff] 0.0
          %542 = vst [vmem:[#allocation4 + $0x30] sm:$0xff] 0.0
          %543 = vst [vmem:[#allocation4 + $0x38] sm:$0xff] 0.0
          %544 = vst [vmem:[#allocation4 + $0x40] sm:$0xff] 0.0
          %545 = vst [vmem:[#allocation4 + $0x48] sm:$0xff] 0.0
          %546 = vst [vmem:[#allocation4 + $0x50] sm:$0xff] 0.0
          %547 = vst [vmem:[#allocation4 + $0x58] sm:$0xff] 0.0
          %548 = vst [vmem:[#allocation4 + $0x60] sm:$0xff] 0.0
          %549 = vst [vmem:[#allocation4 + $0x68] sm:$0xff] 0.0
          %550 = vst [vmem:[#allocation4 + $0x70] sm:$0xff] 0.0
          %551 = vst [vmem:[#allocation4 + $0x78] sm:$0xff] 0.0
        $region68: #{_forward.3} parent=63 // pred_fallthru
          _
        %v552 = vld [vmem:[%s485] sm:$0xff]
        %v553 = vld [vmem:[%s485 + $0x8] sm:$0xff]
        %v554 = vld [vmem:[%s485 + $0x10] sm:$0xff]
        %v555 = vld [vmem:[%s485 + $0x18] sm:$0xff]
        %v556 = vld [vmem:[%s485 + $0x20] sm:$0xff]
        %v557 = vld [vmem:[%s485 + $0x28] sm:$0xff]
        %v558 = vld [vmem:[%s485 + $0x30] sm:$0xff]
        %v559 = vld [vmem:[%s485 + $0x38] sm:$0xff]
        %v560 = vld [vmem:[%s485 + $0x40] sm:$0xff]
        %v561 = vld [vmem:[%s485 + $0x48] sm:$0xff]
        %v562 = vld [vmem:[%s485 + $0x50] sm:$0xff]
        %v563 = vld [vmem:[%s485 + $0x58] sm:$0xff]
        %v564 = vld [vmem:[%s485 + $0x60] sm:$0xff]
        %v565 = vld [vmem:[%s485 + $0x68] sm:$0xff]
        %v566 = vld [vmem:[%s485 + $0x70] sm:$0xff]
        %v567 = vld [vmem:[%s485 + $0x78] sm:$0xff]
        %v568 = vld [vmem:[%s485 + $0x80] sm:$0xff]
        %v569 = vld [vmem:[%s485 + $0x88] sm:$0xff]
        %v570 = vld [vmem:[%s485 + $0x90] sm:$0xff]
        %v571 = vld [vmem:[%s485 + $0x98] sm:$0xff]
        %v572 = vld [vmem:[%s485 + $0xa0] sm:$0xff]
        %v573 = vld [vmem:[%s485 + $0xa8] sm:$0xff]
        %v574 = vld [vmem:[%s485 + $0xb0] sm:$0xff]
        %v575 = vld [vmem:[%s485 + $0xb8] sm:$0xff]
        %v576 = vld [vmem:[%s485 + $0xc0] sm:$0xff]
        %v577 = vld [vmem:[%s485 + $0xc8] sm:$0xff]
        %v578 = vld [vmem:[%s485 + $0xd0] sm:$0xff]
        %v579 = vld [vmem:[%s485 + $0xd8] sm:$0xff]
        %v580 = vld [vmem:[%s485 + $0xe0] sm:$0xff]
        %v581 = vld [vmem:[%s485 + $0xe8] sm:$0xff]
        %v582 = vld [vmem:[%s485 + $0xf0] sm:$0xff]
        %v583 = vld [vmem:[%s485 + $0xf8] sm:$0xff]
        %v584 = vld [vmem:[%s474] sm:$0xf]
        %v585 = vld [vmem:[%s474 + $0x4] sm:$0xf]
        %v586 = vld [vmem:[%s474 + $0x8] sm:$0xf]
        %v587 = vld [vmem:[%s474 + $0xc] sm:$0xf]
        %v588 = vld [vmem:[%s474 + $0x10] sm:$0xf]
        %v589 = vld [vmem:[%s474 + $0x14] sm:$0xf]
        %v590 = vld [vmem:[%s474 + $0x18] sm:$0xf]
        %v591 = vld [vmem:[%s474 + $0x1c] sm:$0xf]
        %v592 = vld [vmem:[%s474 + $0x20] sm:$0xf]
        %v593 = vld [vmem:[%s474 + $0x24] sm:$0xf]
        %v594 = vld [vmem:[%s474 + $0x28] sm:$0xf]
        %v595 = vld [vmem:[%s474 + $0x2c] sm:$0xf]
        %v596 = vld [vmem:[%s474 + $0x30] sm:$0xf]
        %v597 = vld [vmem:[%s474 + $0x34] sm:$0xf]
        %v598 = vld [vmem:[%s474 + $0x38] sm:$0xf]
        %v599 = vld [vmem:[%s474 + $0x3c] sm:$0xf]
        %v616 = vunpack.c.l.b16 %v584
        %v617 = vunpack.c.l.b16 %v585
        %v618 = vunpack.c.l.b16 %v586
        %v619 = vunpack.c.l.b16 %v587
        %v620 = vunpack.c.l.b16 %v588
        %v621 = vunpack.c.l.b16 %v589
        %v622 = vunpack.c.l.b16 %v590
        %v623 = vunpack.c.l.b16 %v591
        %v624 = vunpack.c.l.b16 %v592
        %v625 = vunpack.c.l.b16 %v593
        %v626 = vunpack.c.l.b16 %v594
        %v627 = vunpack.c.l.b16 %v595
        %v628 = vunpack.c.l.b16 %v596
        %v629 = vunpack.c.l.b16 %v597
        %v630 = vunpack.c.l.b16 %v598
        %v631 = vunpack.c.l.b16 %v599
        %v632 = vpack.c.b16 %v617, %v616
        %v633 = vpack.c.b16 %v619, %v618
        %v634 = vpack.c.b16 %v621, %v620
        %v635 = vpack.c.b16 %v623, %v622
        %v636 = vpack.c.b16 %v625, %v624
        %v637 = vpack.c.b16 %v627, %v626
        %v638 = vpack.c.b16 %v629, %v628
        %v639 = vpack.c.b16 %v631, %v630
        %v680 = vunpack.c.l.b16 %v552
        %v681 = vunpack.c.l.b16 %v553
        %v682 = vunpack.c.l.b16 %v554
        %v683 = vunpack.c.l.b16 %v555
        %v684 = vunpack.c.l.b16 %v556
        %v685 = vunpack.c.l.b16 %v557
        %v686 = vunpack.c.l.b16 %v558
        %v687 = vunpack.c.l.b16 %v559
        %v688 = vunpack.c.l.b16 %v560
        %v689 = vunpack.c.l.b16 %v561
        %v690 = vunpack.c.l.b16 %v562
        %v691 = vunpack.c.l.b16 %v563
        %v692 = vunpack.c.l.b16 %v564
        %v693 = vunpack.c.l.b16 %v565
        %v694 = vunpack.c.l.b16 %v566
        %v695 = vunpack.c.l.b16 %v567
        %v696 = vunpack.c.l.b16 %v568
        %v697 = vunpack.c.l.b16 %v569
        %v698 = vunpack.c.l.b16 %v570
        %v699 = vunpack.c.l.b16 %v571
        %v700 = vunpack.c.l.b16 %v572
        %v701 = vunpack.c.l.b16 %v573
        %v702 = vunpack.c.l.b16 %v574
        %v703 = vunpack.c.l.b16 %v575
        %v704 = vunpack.c.l.b16 %v576
        %v705 = vunpack.c.l.b16 %v577
        %v706 = vunpack.c.l.b16 %v578
        %v707 = vunpack.c.l.b16 %v579
        %v708 = vunpack.c.l.b16 %v580
        %v709 = vunpack.c.l.b16 %v581
        %v710 = vunpack.c.l.b16 %v582
        %v711 = vunpack.c.l.b16 %v583
        %v712 = vpack.c.b16 %v681, %v680
        %v713 = vpack.c.b16 %v683, %v682
        %v714 = vpack.c.b16 %v685, %v684
        %v715 = vpack.c.b16 %v687, %v686
        %v716 = vpack.c.b16 %v689, %v688
        %v717 = vpack.c.b16 %v691, %v690
        %v718 = vpack.c.b16 %v693, %v692
        %v719 = vpack.c.b16 %v695, %v694
        %v720 = vpack.c.b16 %v697, %v696
        %v721 = vpack.c.b16 %v699, %v698
        %v722 = vpack.c.b16 %v701, %v700
        %v723 = vpack.c.b16 %v703, %v702
        %v724 = vpack.c.b16 %v705, %v704
        %v725 = vpack.c.b16 %v707, %v706
        %v726 = vpack.c.b16 %v709, %v708
        %v727 = vpack.c.b16 %v711, %v710
        %744 = vmatprep.subr.bf16.mxu0 0
        %745 = vmatpush1.bf16.xpose.msra.mxu0 %v719
        %746 = vmatprep.subr.bf16.mxu0 0
        %747 = vmatpush1.bf16.xpose.msra.mxu0 %v718
        %748 = vmatprep.subr.bf16.mxu0 0
        %749 = vmatpush1.bf16.xpose.msra.mxu0 %v717
        %750 = vmatprep.subr.bf16.mxu0 0
        %751 = vmatpush1.bf16.xpose.msra.mxu0 %v716
        %752 = vmatprep.subr.bf16.mxu0 0
        %753 = vmatpush1.bf16.xpose.msra.mxu0 %v715
        %754 = vmatprep.subr.bf16.mxu0 0
        %755 = vmatpush1.bf16.xpose.msra.mxu0 %v714
        %756 = vmatprep.subr.bf16.mxu0 0
        %757 = vmatpush1.bf16.xpose.msra.mxu0 %v713
        %758 = vmatprep.subr.bf16.mxu0 0
        %759 = vmatpush1.bf16.xpose.msra.mxu0 %v712
        %760 = vmatprep.subr.bf16.mxu0 0
        %761 = vmatpush2.bf16.xpose.msra.mxu0 %v727
        %762 = vmatprep.subr.bf16.mxu0 0
        %763 = vmatpush2.bf16.xpose.msra.mxu0 %v726
        %764 = vmatprep.subr.bf16.mxu0 0
        %765 = vmatpush2.bf16.xpose.msra.mxu0 %v725
        %766 = vmatprep.subr.bf16.mxu0 0
        %767 = vmatpush2.bf16.xpose.msra.mxu0 %v724
        %768 = vmatprep.subr.bf16.mxu0 0
        %769 = vmatpush2.bf16.xpose.msra.mxu0 %v723
        %770 = vmatprep.subr.bf16.mxu0 0
        %771 = vmatpush2.bf16.xpose.msra.mxu0 %v722
        %772 = vmatprep.subr.bf16.mxu0 0
        %773 = vmatpush2.bf16.xpose.msra.mxu0 %v721
        %774 = vmatprep.subr.bf16.mxu0 0
        %775 = vmatpush2.bf16.xpose.msra.mxu0 %v720
        %776 = vmatprep.mubr.bf16.mxu0 0
        %777 = vmatmul.mubr.bf16.gmra.mxu0 %v632
        %v778 = vpop.f32.mrf.mxu0
        %v779 = vadd.f32 0.0, %v778
        %v780 = vpop.f32.mrf.mxu0
        %v781 = vadd.f32 0.0, %v780
        %v782 = vpop.f32.mrf.mxu0
        %v783 = vadd.f32 0.0, %v782
        %v784 = vpop.f32.mrf.mxu0
        %v785 = vadd.f32 0.0, %v784
        %786 = vmatprep.mubr.bf16.mxu0 0
        %787 = vmatmul.mubr.bf16.gmra.mxu0 %v633
        %v788 = vpop.f32.mrf.mxu0
        %v789 = vadd.f32 0.0, %v788
        %v790 = vpop.f32.mrf.mxu0
        %v791 = vadd.f32 0.0, %v790
        %v792 = vpop.f32.mrf.mxu0
        %v793 = vadd.f32 0.0, %v792
        %v794 = vpop.f32.mrf.mxu0
        %v795 = vadd.f32 0.0, %v794
        %796 = vmatprep.mubr.bf16.mxu0 0
        %797 = vmatmul.mubr.bf16.gmra.mxu0 %v634
        %v798 = vpop.f32.mrf.mxu0
        %v799 = vadd.f32 0.0, %v798
        %v800 = vpop.f32.mrf.mxu0
        %v801 = vadd.f32 0.0, %v800
        %v802 = vpop.f32.mrf.mxu0
        %v803 = vadd.f32 0.0, %v802
        %v804 = vpop.f32.mrf.mxu0
        %v805 = vadd.f32 0.0, %v804
        %806 = vmatprep.mubr.bf16.mxu0 0
        %807 = vmatmul.mubr.bf16.gmra.mxu0 %v635
        %v808 = vpop.f32.mrf.mxu0
        %v809 = vadd.f32 0.0, %v808
        %v810 = vpop.f32.mrf.mxu0
        %v811 = vadd.f32 0.0, %v810
        %v812 = vpop.f32.mrf.mxu0
        %v813 = vadd.f32 0.0, %v812
        %v814 = vpop.f32.mrf.mxu0
        %v815 = vadd.f32 0.0, %v814
        %816 = vmatprep.mubr.bf16.mxu0 0
        %817 = vmatmul.mubr.bf16.gmra.mxu0 %v636
        %v818 = vpop.f32.mrf.mxu0
        %v819 = vadd.f32 0.0, %v818
        %v820 = vpop.f32.mrf.mxu0
        %v821 = vadd.f32 0.0, %v820
        %v822 = vpop.f32.mrf.mxu0
        %v823 = vadd.f32 0.0, %v822
        %v824 = vpop.f32.mrf.mxu0
        %v825 = vadd.f32 0.0, %v824
        %826 = vmatprep.mubr.bf16.mxu0 0
        %827 = vmatmul.mubr.bf16.gmra.mxu0 %v637
        %v828 = vpop.f32.mrf.mxu0
        %v829 = vadd.f32 0.0, %v828
        %v830 = vpop.f32.mrf.mxu0
        %v831 = vadd.f32 0.0, %v830
        %v832 = vpop.f32.mrf.mxu0
        %v833 = vadd.f32 0.0, %v832
        %v834 = vpop.f32.mrf.mxu0
        %v835 = vadd.f32 0.0, %v834
        %836 = vmatprep.mubr.bf16.mxu0 0
        %837 = vmatmul.mubr.bf16.gmra.mxu0 %v638
        %v838 = vpop.f32.mrf.mxu0
        %v839 = vadd.f32 0.0, %v838
        %v840 = vpop.f32.mrf.mxu0
        %v841 = vadd.f32 0.0, %v840
        %v842 = vpop.f32.mrf.mxu0
        %v843 = vadd.f32 0.0, %v842
        %v844 = vpop.f32.mrf.mxu0
        %v845 = vadd.f32 0.0, %v844
        %846 = vmatprep.mubr.bf16.mxu0 0
        %847 = vmatmul.mubr.bf16.gmra.mxu0 %v639
        %v848 = vpop.f32.mrf.mxu0
        %v849 = vadd.f32 0.0, %v848
        %v850 = vpop.f32.mrf.mxu0
        %v851 = vadd.f32 0.0, %v850
        %v852 = vpop.f32.mrf.mxu0
        %v853 = vadd.f32 0.0, %v852
        %v854 = vpop.f32.mrf.mxu0
        %v855 = vadd.f32 0.0, %v854
        %856 = vdwg.mxu0
        %v857 = vld [vmem:[#allocation2] sm:$0xff]
        %v858 = vld [vmem:[#allocation2 + $0x8] sm:$0xff]
        %v859 = vld [vmem:[#allocation2 + $0x10] sm:$0xff]
        %v860 = vld [vmem:[#allocation2 + $0x18] sm:$0xff]
        %v861 = vld [vmem:[#allocation2 + $0x20] sm:$0xff]
        %v862 = vld [vmem:[#allocation2 + $0x28] sm:$0xff]
        %v863 = vld [vmem:[#allocation2 + $0x30] sm:$0xff]
        %v864 = vld [vmem:[#allocation2 + $0x38] sm:$0xff]
        %v865 = vld [vmem:[#allocation2 + $0x40] sm:$0xff]
        %v866 = vld [vmem:[#allocation2 + $0x48] sm:$0xff]
        %v867 = vld [vmem:[#allocation2 + $0x50] sm:$0xff]
        %v868 = vld [vmem:[#allocation2 + $0x58] sm:$0xff]
        %v869 = vld [vmem:[#allocation2 + $0x60] sm:$0xff]
        %v870 = vld [vmem:[#allocation2 + $0x68] sm:$0xff]
        %v871 = vld [vmem:[#allocation2 + $0x70] sm:$0xff]
        %v872 = vld [vmem:[#allocation2 + $0x78] sm:$0xff]
        %v873 = vmax.f32 %v779, %v781
        %874 = vmax.xlane.f32.xlu0 %v873
        %v875 = vpop.xlane.xlu0 %874
        %v876 = vmax.f32 %v783, %v785
        %877 = vmax.xlane.f32.xlu0 %v876
        %v878 = vpop.xlane.xlu0 %877
        %v879 = vmax.f32 %v789, %v791
        %880 = vmax.xlane.f32.xlu0 %v879
        %v881 = vpop.xlane.xlu0 %880
        %v882 = vmax.f32 %v793, %v795
        %883 = vmax.xlane.f32.xlu0 %v882
        %v884 = vpop.xlane.xlu0 %883
        %v885 = vmax.f32 %v799, %v801
        %886 = vmax.xlane.f32.xlu0 %v885
        %v887 = vpop.xlane.xlu0 %886
        %v888 = vmax.f32 %v803, %v805
        %889 = vmax.xlane.f32.xlu0 %v888
        %v890 = vpop.xlane.xlu0 %889
        %v891 = vmax.f32 %v809, %v811
        %892 = vmax.xlane.f32.xlu0 %v891
        %v893 = vpop.xlane.xlu0 %892
        %v894 = vmax.f32 %v813, %v815
        %895 = vmax.xlane.f32.xlu0 %v894
        %v896 = vpop.xlane.xlu0 %895
        %v897 = vmax.f32 %v819, %v821
        %898 = vmax.xlane.f32.xlu0 %v897
        %v899 = vpop.xlane.xlu0 %898
        %v900 = vmax.f32 %v823, %v825
        %901 = vmax.xlane.f32.xlu0 %v900
        %v902 = vpop.xlane.xlu0 %901
        %v903 = vmax.f32 %v829, %v831
        %904 = vmax.xlane.f32.xlu0 %v903
        %v905 = vpop.xlane.xlu0 %904
        %v906 = vmax.f32 %v833, %v835
        %907 = vmax.xlane.f32.xlu0 %v906
        %v908 = vpop.xlane.xlu0 %907
        %v909 = vmax.f32 %v839, %v841
        %910 = vmax.xlane.f32.xlu0 %v909
        %v911 = vpop.xlane.xlu0 %910
        %v912 = vmax.f32 %v843, %v845
        %913 = vmax.xlane.f32.xlu0 %v912
        %v914 = vpop.xlane.xlu0 %913
        %v915 = vmax.f32 %v849, %v851
        %916 = vmax.xlane.f32.xlu0 %v915
        %v917 = vpop.xlane.xlu0 %916
        %v918 = vmax.f32 %v853, %v855
        %919 = vmax.xlane.f32.xlu0 %v918
        %v920 = vpop.xlane.xlu0 %919
        %v921 = vmax.f32 %v857, %v875
        %v922 = vmax.f32 %v858, %v878
        %v923 = vmax.f32 %v859, %v881
        %v924 = vmax.f32 %v860, %v884
        %v925 = vmax.f32 %v861, %v887
        %v926 = vmax.f32 %v862, %v890
        %v927 = vmax.f32 %v863, %v893
        %v928 = vmax.f32 %v864, %v896
        %v929 = vmax.f32 %v865, %v899
        %v930 = vmax.f32 %v866, %v902
        %v931 = vmax.f32 %v867, %v905
        %v932 = vmax.f32 %v868, %v908
        %v933 = vmax.f32 %v869, %v911
        %v934 = vmax.f32 %v870, %v914
        %v935 = vmax.f32 %v871, %v917
        %v936 = vmax.f32 %v872, %v920
        %v937 = vsub.f32 %v857, %v921
        %v938 = vsub.f32 %v858, %v922
        %v939 = vsub.f32 %v859, %v923
        %v940 = vsub.f32 %v860, %v924
        %v941 = vsub.f32 %v861, %v925
        %v942 = vsub.f32 %v862, %v926
        %v943 = vsub.f32 %v863, %v927
        %v944 = vsub.f32 %v864, %v928
        %v945 = vsub.f32 %v865, %v929
        %v946 = vsub.f32 %v866, %v930
        %v947 = vsub.f32 %v867, %v931
        %v948 = vsub.f32 %v868, %v932
        %v949 = vsub.f32 %v869, %v933
        %v950 = vsub.f32 %v870, %v934
        %v951 = vsub.f32 %v871, %v935
        %v952 = vsub.f32 %v872, %v936
        %v953 = vmul.f32 %v937, 1.442695
        %v954 = vpow.pop %v953
        %v955 = vmul.f32 %v938, 1.442695
        %v956 = vpow.pop %v955
        %v957 = vmul.f32 %v939, 1.442695
        %v958 = vpow.pop %v957
        %v959 = vmul.f32 %v940, 1.442695
        %v960 = vpow.pop %v959
        %v961 = vmul.f32 %v941, 1.442695
        %v962 = vpow.pop %v961
        %v963 = vmul.f32 %v942, 1.442695
        %v964 = vpow.pop %v963
        %v965 = vmul.f32 %v943, 1.442695
        %v966 = vpow.pop %v965
        %v967 = vmul.f32 %v944, 1.442695
        %v968 = vpow.pop %v967
        %v969 = vmul.f32 %v945, 1.442695
        %v970 = vpow.pop %v969
        %v971 = vmul.f32 %v946, 1.442695
        %v972 = vpow.pop %v971
        %v973 = vmul.f32 %v947, 1.442695
        %v974 = vpow.pop %v973
        %v975 = vmul.f32 %v948, 1.442695
        %v976 = vpow.pop %v975
        %v977 = vmul.f32 %v949, 1.442695
        %v978 = vpow.pop %v977
        %v979 = vmul.f32 %v950, 1.442695
        %v980 = vpow.pop %v979
        %v981 = vmul.f32 %v951, 1.442695
        %v982 = vpow.pop %v981
        %v983 = vmul.f32 %v952, 1.442695
        %v984 = vpow.pop %v983
        %986 = vset.pattern.permute.xlu0 0
        %987 = vperm.xlu0 %986, %v921
        %v988 = vpop.permute.xlu0 %987
        %991 = vset.pattern.permute.xlu0 0
        %992 = vperm.xlu0 %991, %v922
        %v993 = vpop.permute.xlu0 %992
        %996 = vset.pattern.permute.xlu0 0
        %997 = vperm.xlu0 %996, %v923
        %v998 = vpop.permute.xlu0 %997
        %1001 = vset.pattern.permute.xlu0 0
        %1002 = vperm.xlu0 %1001, %v924
        %v1003 = vpop.permute.xlu0 %1002
        %1006 = vset.pattern.permute.xlu0 0
        %1007 = vperm.xlu0 %1006, %v925
        %v1008 = vpop.permute.xlu0 %1007
        %1011 = vset.pattern.permute.xlu0 0
        %1012 = vperm.xlu0 %1011, %v926
        %v1013 = vpop.permute.xlu0 %1012
        %1016 = vset.pattern.permute.xlu0 0
        %1017 = vperm.xlu0 %1016, %v927
        %v1018 = vpop.permute.xlu0 %1017
        %1021 = vset.pattern.permute.xlu0 0
        %1022 = vperm.xlu0 %1021, %v928
        %v1023 = vpop.permute.xlu0 %1022
        %1026 = vset.pattern.permute.xlu0 0
        %1027 = vperm.xlu0 %1026, %v929
        %v1028 = vpop.permute.xlu0 %1027
        %1031 = vset.pattern.permute.xlu0 0
        %1032 = vperm.xlu0 %1031, %v930
        %v1033 = vpop.permute.xlu0 %1032
        %1036 = vset.pattern.permute.xlu0 0
        %1037 = vperm.xlu0 %1036, %v931
        %v1038 = vpop.permute.xlu0 %1037
        %1041 = vset.pattern.permute.xlu0 0
        %1042 = vperm.xlu0 %1041, %v932
        %v1043 = vpop.permute.xlu0 %1042
        %1046 = vset.pattern.permute.xlu0 0
        %1047 = vperm.xlu0 %1046, %v933
        %v1048 = vpop.permute.xlu0 %1047
        %1051 = vset.pattern.permute.xlu0 0
        %1052 = vperm.xlu0 %1051, %v934
        %v1053 = vpop.permute.xlu0 %1052
        %1056 = vset.pattern.permute.xlu0 0
        %1057 = vperm.xlu0 %1056, %v935
        %v1058 = vpop.permute.xlu0 %1057
        %1061 = vset.pattern.permute.xlu0 0
        %1062 = vperm.xlu0 %1061, %v936
        %v1063 = vpop.permute.xlu0 %1062
        %v1065 = vsub.f32 %v779, %v988
        %v1066 = vsub.f32 %v781, %v988
        %v1067 = vsub.f32 %v783, %v993
        %v1068 = vsub.f32 %v785, %v993
        %v1069 = vsub.f32 %v789, %v998
        %v1070 = vsub.f32 %v791, %v998
        %v1071 = vsub.f32 %v793, %v1003
        %v1072 = vsub.f32 %v795, %v1003
        %v1073 = vsub.f32 %v799, %v1008
        %v1074 = vsub.f32 %v801, %v1008
        %v1075 = vsub.f32 %v803, %v1013
        %v1076 = vsub.f32 %v805, %v1013
        %v1077 = vsub.f32 %v809, %v1018
        %v1078 = vsub.f32 %v811, %v1018
        %v1079 = vsub.f32 %v813, %v1023
        %v1080 = vsub.f32 %v815, %v1023
        %v1081 = vsub.f32 %v819, %v1028
        %v1082 = vsub.f32 %v821, %v1028
        %v1083 = vsub.f32 %v823, %v1033
        %v1084 = vsub.f32 %v825, %v1033
        %v1085 = vsub.f32 %v829, %v1038
        %v1086 = vsub.f32 %v831, %v1038
        %v1087 = vsub.f32 %v833, %v1043
        %v1088 = vsub.f32 %v835, %v1043
        %v1089 = vsub.f32 %v839, %v1048
        %v1090 = vsub.f32 %v841, %v1048
        %v1091 = vsub.f32 %v843, %v1053
        %v1092 = vsub.f32 %v845, %v1053
        %v1093 = vsub.f32 %v849, %v1058
        %v1094 = vsub.f32 %v851, %v1058
        %v1095 = vsub.f32 %v853, %v1063
        %v1096 = vsub.f32 %v855, %v1063
        %v1097 = vmul.f32 %v1065, 1.442695
        %v1098 = vpow.pop %v1097
        %v1099 = vmul.f32 %v1066, 1.442695
        %v1100 = vpow.pop %v1099
        %v1101 = vmul.f32 %v1067, 1.442695
        %v1102 = vpow.pop %v1101
        %v1103 = vmul.f32 %v1068, 1.442695
        %v1104 = vpow.pop %v1103
        %v1105 = vmul.f32 %v1069, 1.442695
        %v1106 = vpow.pop %v1105
        %v1107 = vmul.f32 %v1070, 1.442695
        %v1108 = vpow.pop %v1107
        %v1109 = vmul.f32 %v1071, 1.442695
        %v1110 = vpow.pop %v1109
        %v1111 = vmul.f32 %v1072, 1.442695
        %v1112 = vpow.pop %v1111
        %v1113 = vmul.f32 %v1073, 1.442695
        %v1114 = vpow.pop %v1113
        %v1115 = vmul.f32 %v1074, 1.442695
        %v1116 = vpow.pop %v1115
        %v1117 = vmul.f32 %v1075, 1.442695
        %v1118 = vpow.pop %v1117
        %v1119 = vmul.f32 %v1076, 1.442695
        %v1120 = vpow.pop %v1119
        %v1121 = vmul.f32 %v1077, 1.442695
        %v1122 = vpow.pop %v1121
        %v1123 = vmul.f32 %v1078, 1.442695
        %v1124 = vpow.pop %v1123
        %v1125 = vmul.f32 %v1079, 1.442695
        %v1126 = vpow.pop %v1125
        %v1127 = vmul.f32 %v1080, 1.442695
        %v1128 = vpow.pop %v1127
        %v1129 = vmul.f32 %v1081, 1.442695
        %v1130 = vpow.pop %v1129
        %v1131 = vmul.f32 %v1082, 1.442695
        %v1132 = vpow.pop %v1131
        %v1133 = vmul.f32 %v1083, 1.442695
        %v1134 = vpow.pop %v1133
        %v1135 = vmul.f32 %v1084, 1.442695
        %v1136 = vpow.pop %v1135
        %v1137 = vmul.f32 %v1085, 1.442695
        %v1138 = vpow.pop %v1137
        %v1139 = vmul.f32 %v1086, 1.442695
        %v1140 = vpow.pop %v1139
        %v1141 = vmul.f32 %v1087, 1.442695
        %v1142 = vpow.pop %v1141
        %v1143 = vmul.f32 %v1088, 1.442695
        %v1144 = vpow.pop %v1143
        %v1145 = vmul.f32 %v1089, 1.442695
        %v1146 = vpow.pop %v1145
        %v1147 = vmul.f32 %v1090, 1.442695
        %v1148 = vpow.pop %v1147
        %v1149 = vmul.f32 %v1091, 1.442695
        %v1150 = vpow.pop %v1149
        %v1151 = vmul.f32 %v1092, 1.442695
        %v1152 = vpow.pop %v1151
        %v1153 = vmul.f32 %v1093, 1.442695
        %v1154 = vpow.pop %v1153
        %v1155 = vmul.f32 %v1094, 1.442695
        %v1156 = vpow.pop %v1155
        %v1157 = vmul.f32 %v1095, 1.442695
        %v1158 = vpow.pop %v1157
        %v1159 = vmul.f32 %v1096, 1.442695
        %v1160 = vpow.pop %v1159
        %v1161 = vld [vmem:[#allocation3] sm:$0xff]
        %v1162 = vld [vmem:[#allocation3 + $0x8] sm:$0xff]
        %v1163 = vld [vmem:[#allocation3 + $0x10] sm:$0xff]
        %v1164 = vld [vmem:[#allocation3 + $0x18] sm:$0xff]
        %v1165 = vld [vmem:[#allocation3 + $0x20] sm:$0xff]
        %v1166 = vld [vmem:[#allocation3 + $0x28] sm:$0xff]
        %v1167 = vld [vmem:[#allocation3 + $0x30] sm:$0xff]
        %v1168 = vld [vmem:[#allocation3 + $0x38] sm:$0xff]
        %v1169 = vld [vmem:[#allocation3 + $0x40] sm:$0xff]
        %v1170 = vld [vmem:[#allocation3 + $0x48] sm:$0xff]
        %v1171 = vld [vmem:[#allocation3 + $0x50] sm:$0xff]
        %v1172 = vld [vmem:[#allocation3 + $0x58] sm:$0xff]
        %v1173 = vld [vmem:[#allocation3 + $0x60] sm:$0xff]
        %v1174 = vld [vmem:[#allocation3 + $0x68] sm:$0xff]
        %v1175 = vld [vmem:[#allocation3 + $0x70] sm:$0xff]
        %v1176 = vld [vmem:[#allocation3 + $0x78] sm:$0xff]
        %v1177 = vmul.f32 %v954, %v1161
        %v1178 = vmul.f32 %v956, %v1162
        %v1179 = vmul.f32 %v958, %v1163
        %v1180 = vmul.f32 %v960, %v1164
        %v1181 = vmul.f32 %v962, %v1165
        %v1182 = vmul.f32 %v964, %v1166
        %v1183 = vmul.f32 %v966, %v1167
        %v1184 = vmul.f32 %v968, %v1168
        %v1185 = vmul.f32 %v970, %v1169
        %v1186 = vmul.f32 %v972, %v1170
        %v1187 = vmul.f32 %v974, %v1171
        %v1188 = vmul.f32 %v976, %v1172
        %v1189 = vmul.f32 %v978, %v1173
        %v1190 = vmul.f32 %v980, %v1174
        %v1191 = vmul.f32 %v982, %v1175
        %v1192 = vmul.f32 %v984, %v1176
        %v1193 = vadd.f32 %v1098, %v1100
        %1194 = vadd.xlane.f32.xlu0 %v1193
        %v1195 = vpop.xlane.xlu0 %1194
        %v1196 = vadd.f32 %v1102, %v1104
        %1197 = vadd.xlane.f32.xlu0 %v1196
        %v1198 = vpop.xlane.xlu0 %1197
        %v1199 = vadd.f32 %v1106, %v1108
        %1200 = vadd.xlane.f32.xlu0 %v1199
        %v1201 = vpop.xlane.xlu0 %1200
        %v1202 = vadd.f32 %v1110, %v1112
        %1203 = vadd.xlane.f32.xlu0 %v1202
        %v1204 = vpop.xlane.xlu0 %1203
        %v1205 = vadd.f32 %v1114, %v1116
        %1206 = vadd.xlane.f32.xlu0 %v1205
        %v1207 = vpop.xlane.xlu0 %1206
        %v1208 = vadd.f32 %v1118, %v1120
        %1209 = vadd.xlane.f32.xlu0 %v1208
        %v1210 = vpop.xlane.xlu0 %1209
        %v1211 = vadd.f32 %v1122, %v1124
        %1212 = vadd.xlane.f32.xlu0 %v1211
        %v1213 = vpop.xlane.xlu0 %1212
        %v1214 = vadd.f32 %v1126, %v1128
        %1215 = vadd.xlane.f32.xlu0 %v1214
        %v1216 = vpop.xlane.xlu0 %1215
        %v1217 = vadd.f32 %v1130, %v1132
        %1218 = vadd.xlane.f32.xlu0 %v1217
        %v1219 = vpop.xlane.xlu0 %1218
        %v1220 = vadd.f32 %v1134, %v1136
        %1221 = vadd.xlane.f32.xlu0 %v1220
        %v1222 = vpop.xlane.xlu0 %1221
        %v1223 = vadd.f32 %v1138, %v1140
        %1224 = vadd.xlane.f32.xlu0 %v1223
        %v1225 = vpop.xlane.xlu0 %1224
        %v1226 = vadd.f32 %v1142, %v1144
        %1227 = vadd.xlane.f32.xlu0 %v1226
        %v1228 = vpop.xlane.xlu0 %1227
        %v1229 = vadd.f32 %v1146, %v1148
        %1230 = vadd.xlane.f32.xlu0 %v1229
        %v1231 = vpop.xlane.xlu0 %1230
        %v1232 = vadd.f32 %v1150, %v1152
        %1233 = vadd.xlane.f32.xlu0 %v1232
        %v1234 = vpop.xlane.xlu0 %1233
        %v1235 = vadd.f32 %v1154, %v1156
        %1236 = vadd.xlane.f32.xlu0 %v1235
        %v1237 = vpop.xlane.xlu0 %1236
        %v1238 = vadd.f32 %v1158, %v1160
        %1239 = vadd.xlane.f32.xlu0 %v1238
        %v1240 = vpop.xlane.xlu0 %1239
        %v1241 = vadd.f32 %v1177, %v1195
        %v1242 = vadd.f32 %v1178, %v1198
        %v1243 = vadd.f32 %v1179, %v1201
        %v1244 = vadd.f32 %v1180, %v1204
        %v1245 = vadd.f32 %v1181, %v1207
        %v1246 = vadd.f32 %v1182, %v1210
        %v1247 = vadd.f32 %v1183, %v1213
        %v1248 = vadd.f32 %v1184, %v1216
        %v1249 = vadd.f32 %v1185, %v1219
        %v1250 = vadd.f32 %v1186, %v1222
        %v1251 = vadd.f32 %v1187, %v1225
        %v1252 = vadd.f32 %v1188, %v1228
        %v1253 = vadd.f32 %v1189, %v1231
        %v1254 = vadd.f32 %v1190, %v1234
        %v1255 = vadd.f32 %v1191, %v1237
        %v1256 = vadd.f32 %v1192, %v1240
        %vm1257 = vcmask 7168
        %1258 = vst.msk [vmem:[#allocation3] sm:$0xff] %vm1257, %v1241
        %1259 = vst.msk [vmem:[#allocation3 + $0x8] sm:$0xff] %vm1257, %v1242
        %1260 = vst.msk [vmem:[#allocation3 + $0x10] sm:$0xff] %vm1257, %v1243
        %1261 = vst.msk [vmem:[#allocation3 + $0x18] sm:$0xff] %vm1257, %v1244
        %1262 = vst.msk [vmem:[#allocation3 + $0x20] sm:$0xff] %vm1257, %v1245
        %1263 = vst.msk [vmem:[#allocation3 + $0x28] sm:$0xff] %vm1257, %v1246
        %1264 = vst.msk [vmem:[#allocation3 + $0x30] sm:$0xff] %vm1257, %v1247
        %1265 = vst.msk [vmem:[#allocation3 + $0x38] sm:$0xff] %vm1257, %v1248
        %1266 = vst.msk [vmem:[#allocation3 + $0x40] sm:$0xff] %vm1257, %v1249
        %1267 = vst.msk [vmem:[#allocation3 + $0x48] sm:$0xff] %vm1257, %v1250
        %1268 = vst.msk [vmem:[#allocation3 + $0x50] sm:$0xff] %vm1257, %v1251
        %1269 = vst.msk [vmem:[#allocation3 + $0x58] sm:$0xff] %vm1257, %v1252
        %1270 = vst.msk [vmem:[#allocation3 + $0x60] sm:$0xff] %vm1257, %v1253
        %1271 = vst.msk [vmem:[#allocation3 + $0x68] sm:$0xff] %vm1257, %v1254
        %1272 = vst.msk [vmem:[#allocation3 + $0x70] sm:$0xff] %vm1257, %v1255
        %1273 = vst.msk [vmem:[#allocation3 + $0x78] sm:$0xff] %vm1257, %v1256
        %v1274 = vld [vmem:[#allocation4] sm:$0xff]
        %v1275 = vld [vmem:[#allocation4 + $0x8] sm:$0xff]
        %v1276 = vld [vmem:[#allocation4 + $0x10] sm:$0xff]
        %v1277 = vld [vmem:[#allocation4 + $0x18] sm:$0xff]
        %v1278 = vld [vmem:[#allocation4 + $0x20] sm:$0xff]
        %v1279 = vld [vmem:[#allocation4 + $0x28] sm:$0xff]
        %v1280 = vld [vmem:[#allocation4 + $0x30] sm:$0xff]
        %v1281 = vld [vmem:[#allocation4 + $0x38] sm:$0xff]
        %v1282 = vld [vmem:[#allocation4 + $0x40] sm:$0xff]
        %v1283 = vld [vmem:[#allocation4 + $0x48] sm:$0xff]
        %v1284 = vld [vmem:[#allocation4 + $0x50] sm:$0xff]
        %v1285 = vld [vmem:[#allocation4 + $0x58] sm:$0xff]
        %v1286 = vld [vmem:[#allocation4 + $0x60] sm:$0xff]
        %v1287 = vld [vmem:[#allocation4 + $0x68] sm:$0xff]
        %v1288 = vld [vmem:[#allocation4 + $0x70] sm:$0xff]
        %v1289 = vld [vmem:[#allocation4 + $0x78] sm:$0xff]
        %1291 = vset.pattern.permute.xlu0 0
        %1292 = vperm.xlu0 %1291, %v954
        %v1293 = vpop.permute.xlu0 %1292
        %1296 = vset.pattern.permute.xlu0 0
        %1297 = vperm.xlu0 %1296, %v956
        %v1298 = vpop.permute.xlu0 %1297
        %1301 = vset.pattern.permute.xlu0 0
        %1302 = vperm.xlu0 %1301, %v958
        %v1303 = vpop.permute.xlu0 %1302
        %1306 = vset.pattern.permute.xlu0 0
        %1307 = vperm.xlu0 %1306, %v960
        %v1308 = vpop.permute.xlu0 %1307
        %1311 = vset.pattern.permute.xlu0 0
        %1312 = vperm.xlu0 %1311, %v962
        %v1313 = vpop.permute.xlu0 %1312
        %1316 = vset.pattern.permute.xlu0 0
        %1317 = vperm.xlu0 %1316, %v964
        %v1318 = vpop.permute.xlu0 %1317
        %1321 = vset.pattern.permute.xlu0 0
        %1322 = vperm.xlu0 %1321, %v966
        %v1323 = vpop.permute.xlu0 %1322
        %1326 = vset.pattern.permute.xlu0 0
        %1327 = vperm.xlu0 %1326, %v968
        %v1328 = vpop.permute.xlu0 %1327
        %1331 = vset.pattern.permute.xlu0 0
        %1332 = vperm.xlu0 %1331, %v970
        %v1333 = vpop.permute.xlu0 %1332
        %1336 = vset.pattern.permute.xlu0 0
        %1337 = vperm.xlu0 %1336, %v972
        %v1338 = vpop.permute.xlu0 %1337
        %1341 = vset.pattern.permute.xlu0 0
        %1342 = vperm.xlu0 %1341, %v974
        %v1343 = vpop.permute.xlu0 %1342
        %1346 = vset.pattern.permute.xlu0 0
        %1347 = vperm.xlu0 %1346, %v976
        %v1348 = vpop.permute.xlu0 %1347
        %1351 = vset.pattern.permute.xlu0 0
        %1352 = vperm.xlu0 %1351, %v978
        %v1353 = vpop.permute.xlu0 %1352
        %1356 = vset.pattern.permute.xlu0 0
        %1357 = vperm.xlu0 %1356, %v980
        %v1358 = vpop.permute.xlu0 %1357
        %1361 = vset.pattern.permute.xlu0 0
        %1362 = vperm.xlu0 %1361, %v982
        %v1363 = vpop.permute.xlu0 %1362
        %1366 = vset.pattern.permute.xlu0 0
        %1367 = vperm.xlu0 %1366, %v984
        %v1368 = vpop.permute.xlu0 %1367
        %v1370 = vmul.f32 %v1293, %v1274
        %v1371 = vmul.f32 %v1298, %v1275
        %v1372 = vmul.f32 %v1303, %v1276
        %v1373 = vmul.f32 %v1308, %v1277
        %v1374 = vmul.f32 %v1313, %v1278
        %v1375 = vmul.f32 %v1318, %v1279
        %v1376 = vmul.f32 %v1323, %v1280
        %v1377 = vmul.f32 %v1328, %v1281
        %v1378 = vmul.f32 %v1333, %v1282
        %v1379 = vmul.f32 %v1338, %v1283
        %v1380 = vmul.f32 %v1343, %v1284
        %v1381 = vmul.f32 %v1348, %v1285
        %v1382 = vmul.f32 %v1353, %v1286
        %v1383 = vmul.f32 %v1358, %v1287
        %v1384 = vmul.f32 %v1363, %v1288
        %v1385 = vmul.f32 %v1368, %v1289
        %v1386 = vpack.c.bf16 %v1102, %v1098
        %v1387 = vpack.c.bf16 %v1104, %v1100
        %v1388 = vpack.c.bf16 %v1110, %v1106
        %v1389 = vpack.c.bf16 %v1112, %v1108
        %v1390 = vpack.c.bf16 %v1118, %v1114
        %v1391 = vpack.c.bf16 %v1120, %v1116
        %v1392 = vpack.c.bf16 %v1126, %v1122
        %v1393 = vpack.c.bf16 %v1128, %v1124
        %v1394 = vpack.c.bf16 %v1134, %v1130
        %v1395 = vpack.c.bf16 %v1136, %v1132
        %v1396 = vpack.c.bf16 %v1142, %v1138
        %v1397 = vpack.c.bf16 %v1144, %v1140
        %v1398 = vpack.c.bf16 %v1150, %v1146
        %v1399 = vpack.c.bf16 %v1152, %v1148
        %v1400 = vpack.c.bf16 %v1158, %v1154
        %v1401 = vpack.c.bf16 %v1160, %v1156
        %v1402 = vunpack.c.h.b16 %v552
        %v1403 = vunpack.c.h.b16 %v553
        %v1404 = vunpack.c.h.b16 %v554
        %v1405 = vunpack.c.h.b16 %v555
        %v1406 = vunpack.c.h.b16 %v556
        %v1407 = vunpack.c.h.b16 %v557
        %v1408 = vunpack.c.h.b16 %v558
        %v1409 = vunpack.c.h.b16 %v559
        %v1410 = vunpack.c.h.b16 %v560
        %v1411 = vunpack.c.h.b16 %v561
        %v1412 = vunpack.c.h.b16 %v562
        %v1413 = vunpack.c.h.b16 %v563
        %v1414 = vunpack.c.h.b16 %v564
        %v1415 = vunpack.c.h.b16 %v565
        %v1416 = vunpack.c.h.b16 %v566
        %v1417 = vunpack.c.h.b16 %v567
        %v1418 = vunpack.c.h.b16 %v568
        %v1419 = vunpack.c.h.b16 %v569
        %v1420 = vunpack.c.h.b16 %v570
        %v1421 = vunpack.c.h.b16 %v571
        %v1422 = vunpack.c.h.b16 %v572
        %v1423 = vunpack.c.h.b16 %v573
        %v1424 = vunpack.c.h.b16 %v574
        %v1425 = vunpack.c.h.b16 %v575
        %v1426 = vunpack.c.h.b16 %v576
        %v1427 = vunpack.c.h.b16 %v577
        %v1428 = vunpack.c.h.b16 %v578
        %v1429 = vunpack.c.h.b16 %v579
        %v1430 = vunpack.c.h.b16 %v580
        %v1431 = vunpack.c.h.b16 %v581
        %v1432 = vunpack.c.h.b16 %v582
        %v1433 = vunpack.c.h.b16 %v583
        %v1434 = vpack.c.b16 %v1403, %v1402
        %v1435 = vpack.c.b16 %v1405, %v1404
        %v1436 = vpack.c.b16 %v1407, %v1406
        %v1437 = vpack.c.b16 %v1409, %v1408
        %v1438 = vpack.c.b16 %v1411, %v1410
        %v1439 = vpack.c.b16 %v1413, %v1412
        %v1440 = vpack.c.b16 %v1415, %v1414
        %v1441 = vpack.c.b16 %v1417, %v1416
        %v1442 = vpack.c.b16 %v1419, %v1418
        %v1443 = vpack.c.b16 %v1421, %v1420
        %v1444 = vpack.c.b16 %v1423, %v1422
        %v1445 = vpack.c.b16 %v1425, %v1424
        %v1446 = vpack.c.b16 %v1427, %v1426
        %v1447 = vpack.c.b16 %v1429, %v1428
        %v1448 = vpack.c.b16 %v1431, %v1430
        %v1449 = vpack.c.b16 %v1433, %v1432
        %1466 = vmatprep.subr.bf16.mxu0 0
        %1467 = vmatpush1.bf16.msra.mxu0 %v1441
        %1468 = vmatprep.subr.bf16.mxu0 0
        %1469 = vmatpush1.bf16.msra.mxu0 %v1440
        %1470 = vmatprep.subr.bf16.mxu0 0
        %1471 = vmatpush1.bf16.msra.mxu0 %v1439
        %1472 = vmatprep.subr.bf16.mxu0 0
        %1473 = vmatpush1.bf16.msra.mxu0 %v1438
        %1474 = vmatprep.subr.bf16.mxu0 0
        %1475 = vmatpush1.bf16.msra.mxu0 %v1437
        %1476 = vmatprep.subr.bf16.mxu0 0
        %1477 = vmatpush1.bf16.msra.mxu0 %v1436
        %1478 = vmatprep.subr.bf16.mxu0 0
        %1479 = vmatpush1.bf16.msra.mxu0 %v1435
        %1480 = vmatprep.subr.bf16.mxu0 0
        %1481 = vmatpush1.bf16.msra.mxu0 %v1434
        %1482 = vmatprep.subr.bf16.mxu0 0
        %1483 = vmatpush2.bf16.msra.mxu0 %v1449
        %1484 = vmatprep.subr.bf16.mxu0 0
        %1485 = vmatpush2.bf16.msra.mxu0 %v1448
        %1486 = vmatprep.subr.bf16.mxu0 0
        %1487 = vmatpush2.bf16.msra.mxu0 %v1447
        %1488 = vmatprep.subr.bf16.mxu0 0
        %1489 = vmatpush2.bf16.msra.mxu0 %v1446
        %1490 = vmatprep.subr.bf16.mxu0 0
        %1491 = vmatpush2.bf16.msra.mxu0 %v1445
        %1492 = vmatprep.subr.bf16.mxu0 0
        %1493 = vmatpush2.bf16.msra.mxu0 %v1444
        %1494 = vmatprep.subr.bf16.mxu0 0
        %1495 = vmatpush2.bf16.msra.mxu0 %v1443
        %1496 = vmatprep.subr.bf16.mxu0 0
        %1497 = vmatpush2.bf16.msra.mxu0 %v1442
        %1498 = vmatprep.mubr.bf16.mxu0 %v1387
        %1499 = vmatmul.mubr.bf16.gmra.mxu0 %v1386
        %v1500 = vpop.f32.mrf.mxu0
        %v1501 = vadd.f32 0.0, %v1500
        %v1502 = vpop.f32.mrf.mxu0
        %v1503 = vpop.f32.mrf.mxu0
        %v1504 = vadd.f32 0.0, %v1503
        %v1505 = vpop.f32.mrf.mxu0
        %1506 = vmatprep.mubr.bf16.mxu0 %v1389
        %1507 = vmatmul.mubr.bf16.gmra.mxu0 %v1388
        %v1508 = vpop.f32.mrf.mxu0
        %v1509 = vadd.f32 0.0, %v1508
        %v1510 = vpop.f32.mrf.mxu0
        %v1511 = vpop.f32.mrf.mxu0
        %v1512 = vadd.f32 0.0, %v1511
        %v1513 = vpop.f32.mrf.mxu0
        %1514 = vmatprep.mubr.bf16.mxu0 %v1391
        %1515 = vmatmul.mubr.bf16.gmra.mxu0 %v1390
        %v1516 = vpop.f32.mrf.mxu0
        %v1517 = vadd.f32 0.0, %v1516
        %v1518 = vpop.f32.mrf.mxu0
        %v1519 = vpop.f32.mrf.mxu0
        %v1520 = vadd.f32 0.0, %v1519
        %v1521 = vpop.f32.mrf.mxu0
        %1522 = vmatprep.mubr.bf16.mxu0 %v1393
        %1523 = vmatmul.mubr.bf16.gmra.mxu0 %v1392
        %v1524 = vpop.f32.mrf.mxu0
        %v1525 = vadd.f32 0.0, %v1524
        %v1526 = vpop.f32.mrf.mxu0
        %v1527 = vpop.f32.mrf.mxu0
        %v1528 = vadd.f32 0.0, %v1527
        %v1529 = vpop.f32.mrf.mxu0
        %1530 = vmatprep.mubr.bf16.mxu0 %v1395
        %1531 = vmatmul.mubr.bf16.gmra.mxu0 %v1394
        %v1532 = vpop.f32.mrf.mxu0
        %v1533 = vadd.f32 0.0, %v1532
        %v1534 = vpop.f32.mrf.mxu0
        %v1535 = vpop.f32.mrf.mxu0
        %v1536 = vadd.f32 0.0, %v1535
        %v1537 = vpop.f32.mrf.mxu0
        %1538 = vmatprep.mubr.bf16.mxu0 %v1397
        %1539 = vmatmul.mubr.bf16.gmra.mxu0 %v1396
        %v1540 = vpop.f32.mrf.mxu0
        %v1541 = vadd.f32 0.0, %v1540
        %v1542 = vpop.f32.mrf.mxu0
        %v1543 = vpop.f32.mrf.mxu0
        %v1544 = vadd.f32 0.0, %v1543
        %v1545 = vpop.f32.mrf.mxu0
        %1546 = vmatprep.mubr.bf16.mxu0 %v1399
        %1547 = vmatmul.mubr.bf16.gmra.mxu0 %v1398
        %v1548 = vpop.f32.mrf.mxu0
        %v1549 = vadd.f32 0.0, %v1548
        %v1550 = vpop.f32.mrf.mxu0
        %v1551 = vpop.f32.mrf.mxu0
        %v1552 = vadd.f32 0.0, %v1551
        %v1553 = vpop.f32.mrf.mxu0
        %1554 = vmatprep.mubr.bf16.mxu0 %v1401
        %1555 = vmatmul.mubr.bf16.gmra.mxu0 %v1400
        %v1556 = vpop.f32.mrf.mxu0
        %v1557 = vadd.f32 0.0, %v1556
        %v1558 = vpop.f32.mrf.mxu0
        %v1559 = vpop.f32.mrf.mxu0
        %v1560 = vadd.f32 0.0, %v1559
        %v1561 = vpop.f32.mrf.mxu0
        %1562 = vdwg.mxu0
        %v1563 = vadd.f32 %v1370, %v1501
        %v1564 = vadd.f32 %v1371, %v1504
        %v1565 = vadd.f32 %v1372, %v1509
        %v1566 = vadd.f32 %v1373, %v1512
        %v1567 = vadd.f32 %v1374, %v1517
        %v1568 = vadd.f32 %v1375, %v1520
        %v1569 = vadd.f32 %v1376, %v1525
        %v1570 = vadd.f32 %v1377, %v1528
        %v1571 = vadd.f32 %v1378, %v1533
        %v1572 = vadd.f32 %v1379, %v1536
        %v1573 = vadd.f32 %v1380, %v1541
        %v1574 = vadd.f32 %v1381, %v1544
        %v1575 = vadd.f32 %v1382, %v1549
        %v1576 = vadd.f32 %v1383, %v1552
        %v1577 = vadd.f32 %v1384, %v1557
        %v1578 = vadd.f32 %v1385, %v1560
        %1579 = vst [vmem:[#allocation4] sm:$0xff] %v1563
        %1580 = vst [vmem:[#allocation4 + $0x8] sm:$0xff] %v1564
        %1581 = vst [vmem:[#allocation4 + $0x10] sm:$0xff] %v1565
        %1582 = vst [vmem:[#allocation4 + $0x18] sm:$0xff] %v1566
        %1583 = vst [vmem:[#allocation4 + $0x20] sm:$0xff] %v1567
        %1584 = vst [vmem:[#allocation4 + $0x28] sm:$0xff] %v1568
        %1585 = vst [vmem:[#allocation4 + $0x30] sm:$0xff] %v1569
        %1586 = vst [vmem:[#allocation4 + $0x38] sm:$0xff] %v1570
        %1587 = vst [vmem:[#allocation4 + $0x40] sm:$0xff] %v1571
        %1588 = vst [vmem:[#allocation4 + $0x48] sm:$0xff] %v1572
        %1589 = vst [vmem:[#allocation4 + $0x50] sm:$0xff] %v1573
        %1590 = vst [vmem:[#allocation4 + $0x58] sm:$0xff] %v1574
        %1591 = vst [vmem:[#allocation4 + $0x60] sm:$0xff] %v1575
        %1592 = vst [vmem:[#allocation4 + $0x68] sm:$0xff] %v1576
        %1593 = vst [vmem:[#allocation4 + $0x70] sm:$0xff] %v1577
        %1594 = vst [vmem:[#allocation4 + $0x78] sm:$0xff] %v1578
        %1595 = vst.msk [vmem:[#allocation2] sm:$0xff] %vm1257, %v921
        %1596 = vst.msk [vmem:[#allocation2 + $0x8] sm:$0xff] %vm1257, %v922
        %1597 = vst.msk [vmem:[#allocation2 + $0x10] sm:$0xff] %vm1257, %v923
        %1598 = vst.msk [vmem:[#allocation2 + $0x18] sm:$0xff] %vm1257, %v924
        %1599 = vst.msk [vmem:[#allocation2 + $0x20] sm:$0xff] %vm1257, %v925
        %1600 = vst.msk [vmem:[#allocation2 + $0x28] sm:$0xff] %vm1257, %v926
        %1601 = vst.msk [vmem:[#allocation2 + $0x30] sm:$0xff] %vm1257, %v927
        %1602 = vst.msk [vmem:[#allocation2 + $0x38] sm:$0xff] %vm1257, %v928
        %1603 = vst.msk [vmem:[#allocation2 + $0x40] sm:$0xff] %vm1257, %v929
        %1604 = vst.msk [vmem:[#allocation2 + $0x48] sm:$0xff] %vm1257, %v930
        %1605 = vst.msk [vmem:[#allocation2 + $0x50] sm:$0xff] %vm1257, %v931
        %1606 = vst.msk [vmem:[#allocation2 + $0x58] sm:$0xff] %vm1257, %v932
        %1607 = vst.msk [vmem:[#allocation2 + $0x60] sm:$0xff] %vm1257, %v933
        %1608 = vst.msk [vmem:[#allocation2 + $0x68] sm:$0xff] %vm1257, %v934
        %1609 = vst.msk [vmem:[#allocation2 + $0x70] sm:$0xff] %vm1257, %v935
        %1610 = vst.msk [vmem:[#allocation2 + $0x78] sm:$0xff] %vm1257, %v936
        %p1611 = scmp.eq.s32.totalorder %s32, 1
        // Predicated region
        $region69: #{_forward.3} parent=63 // pred_check
          %p1612 = pneg %p1611
        $region70: #{_forward.3} parent=63 // pred_check_branch
          %1614 = sbr.rel (%p1612) target = $region72
        $region71: #{_forward.3} parent=63 // pred_region
          %v1615 = vld [vmem:[#allocation4] sm:$0xff]
          %v1616 = vld [vmem:[#allocation4 + $0x8] sm:$0xff]
          %v1617 = vld [vmem:[#allocation4 + $0x10] sm:$0xff]
          %v1618 = vld [vmem:[#allocation4 + $0x18] sm:$0xff]
          %v1619 = vld [vmem:[#allocation4 + $0x20] sm:$0xff]
          %v1620 = vld [vmem:[#allocation4 + $0x28] sm:$0xff]
          %v1621 = vld [vmem:[#allocation4 + $0x30] sm:$0xff]
          %v1622 = vld [vmem:[#allocation4 + $0x38] sm:$0xff]
          %v1623 = vld [vmem:[#allocation4 + $0x40] sm:$0xff]
          %v1624 = vld [vmem:[#allocation4 + $0x48] sm:$0xff]
          %v1625 = vld [vmem:[#allocation4 + $0x50] sm:$0xff]
          %v1626 = vld [vmem:[#allocation4 + $0x58] sm:$0xff]
          %v1627 = vld [vmem:[#allocation4 + $0x60] sm:$0xff]
          %v1628 = vld [vmem:[#allocation4 + $0x68] sm:$0xff]
          %v1629 = vld [vmem:[#allocation4 + $0x70] sm:$0xff]
          %v1630 = vld [vmem:[#allocation4 + $0x78] sm:$0xff]
          %v1631 = vld [vmem:[#allocation3] sm:$0xff]
          %v1632 = vld [vmem:[#allocation3 + $0x8] sm:$0xff]
          %v1633 = vld [vmem:[#allocation3 + $0x10] sm:$0xff]
          %v1634 = vld [vmem:[#allocation3 + $0x18] sm:$0xff]
          %v1635 = vld [vmem:[#allocation3 + $0x20] sm:$0xff]
          %v1636 = vld [vmem:[#allocation3 + $0x28] sm:$0xff]
          %v1637 = vld [vmem:[#allocation3 + $0x30] sm:$0xff]
          %v1638 = vld [vmem:[#allocation3 + $0x38] sm:$0xff]
          %v1639 = vld [vmem:[#allocation3 + $0x40] sm:$0xff]
          %v1640 = vld [vmem:[#allocation3 + $0x48] sm:$0xff]
          %v1641 = vld [vmem:[#allocation3 + $0x50] sm:$0xff]
          %v1642 = vld [vmem:[#allocation3 + $0x58] sm:$0xff]
          %v1643 = vld [vmem:[#allocation3 + $0x60] sm:$0xff]
          %v1644 = vld [vmem:[#allocation3 + $0x68] sm:$0xff]
          %v1645 = vld [vmem:[#allocation3 + $0x70] sm:$0xff]
          %v1646 = vld [vmem:[#allocation3 + $0x78] sm:$0xff]
          %1648 = vset.pattern.permute.xlu0 0
          %1649 = vperm.xlu0 %1648, %v1631
          %v1650 = vpop.permute.xlu0 %1649
          %1653 = vset.pattern.permute.xlu0 0
          %1654 = vperm.xlu0 %1653, %v1632
          %v1655 = vpop.permute.xlu0 %1654
          %1658 = vset.pattern.permute.xlu0 0
          %1659 = vperm.xlu0 %1658, %v1633
          %v1660 = vpop.permute.xlu0 %1659
          %1663 = vset.pattern.permute.xlu0 0
          %1664 = vperm.xlu0 %1663, %v1634
          %v1665 = vpop.permute.xlu0 %1664
          %1668 = vset.pattern.permute.xlu0 0
          %1669 = vperm.xlu0 %1668, %v1635
          %v1670 = vpop.permute.xlu0 %1669
          %1673 = vset.pattern.permute.xlu0 0
          %1674 = vperm.xlu0 %1673, %v1636
          %v1675 = vpop.permute.xlu0 %1674
          %1678 = vset.pattern.permute.xlu0 0
          %1679 = vperm.xlu0 %1678, %v1637
          %v1680 = vpop.permute.xlu0 %1679
          %1683 = vset.pattern.permute.xlu0 0
          %1684 = vperm.xlu0 %1683, %v1638
          %v1685 = vpop.permute.xlu0 %1684
          %1688 = vset.pattern.permute.xlu0 0
          %1689 = vperm.xlu0 %1688, %v1639
          %v1690 = vpop.permute.xlu0 %1689
          %1693 = vset.pattern.permute.xlu0 0
          %1694 = vperm.xlu0 %1693, %v1640
          %v1695 = vpop.permute.xlu0 %1694
          %1698 = vset.pattern.permute.xlu0 0
          %1699 = vperm.xlu0 %1698, %v1641
          %v1700 = vpop.permute.xlu0 %1699
          %1703 = vset.pattern.permute.xlu0 0
          %1704 = vperm.xlu0 %1703, %v1642
          %v1705 = vpop.permute.xlu0 %1704
          %1708 = vset.pattern.permute.xlu0 0
          %1709 = vperm.xlu0 %1708, %v1643
          %v1710 = vpop.permute.xlu0 %1709
          %1713 = vset.pattern.permute.xlu0 0
          %1714 = vperm.xlu0 %1713, %v1644
          %v1715 = vpop.permute.xlu0 %1714
          %1718 = vset.pattern.permute.xlu0 0
          %1719 = vperm.xlu0 %1718, %v1645
          %v1720 = vpop.permute.xlu0 %1719
          %1723 = vset.pattern.permute.xlu0 0
          %1724 = vperm.xlu0 %1723, %v1646
          %v1725 = vpop.permute.xlu0 %1724
          %v1727 = vrcp.pop %v1650
          %v1728 = vmul.f32 %v1615, %v1727
          %v1729 = vrcp.pop %v1655
          %v1730 = vmul.f32 %v1616, %v1729
          %v1731 = vrcp.pop %v1660
          %v1732 = vmul.f32 %v1617, %v1731
          %v1733 = vrcp.pop %v1665
          %v1734 = vmul.f32 %v1618, %v1733
          %v1735 = vrcp.pop %v1670
          %v1736 = vmul.f32 %v1619, %v1735
          %v1737 = vrcp.pop %v1675
          %v1738 = vmul.f32 %v1620, %v1737
          %v1739 = vrcp.pop %v1680
          %v1740 = vmul.f32 %v1621, %v1739
          %v1741 = vrcp.pop %v1685
          %v1742 = vmul.f32 %v1622, %v1741
          %v1743 = vrcp.pop %v1690
          %v1744 = vmul.f32 %v1623, %v1743
          %v1745 = vrcp.pop %v1695
          %v1746 = vmul.f32 %v1624, %v1745
          %v1747 = vrcp.pop %v1700
          %v1748 = vmul.f32 %v1625, %v1747
          %v1749 = vrcp.pop %v1705
          %v1750 = vmul.f32 %v1626, %v1749
          %v1751 = vrcp.pop %v1710
          %v1752 = vmul.f32 %v1627, %v1751
          %v1753 = vrcp.pop %v1715
          %v1754 = vmul.f32 %v1628, %v1753
          %v1755 = vrcp.pop %v1720
          %v1756 = vmul.f32 %v1629, %v1755
          %v1757 = vrcp.pop %v1725
          %v1758 = vmul.f32 %v1630, %v1757
          %v1759 = vpack.c.bf16 %v1730, %v1728
          %v1760 = vpack.c.bf16 %v1734, %v1732
          %v1761 = vpack.c.bf16 %v1738, %v1736
          %v1762 = vpack.c.bf16 %v1742, %v1740
          %v1763 = vpack.c.bf16 %v1746, %v1744
          %v1764 = vpack.c.bf16 %v1750, %v1748
          %v1765 = vpack.c.bf16 %v1754, %v1752
          %v1766 = vpack.c.bf16 %v1758, %v1756
          %v1767 = vld [vmem:[%s5] sm:$0xf]
          %v1768 = vld [vmem:[%s5 + $0x4] sm:$0xf]
          %v1769 = vld [vmem:[%s5 + $0x8] sm:$0xf]
          %v1770 = vld [vmem:[%s5 + $0xc] sm:$0xf]
          %v1771 = vld [vmem:[%s5 + $0x10] sm:$0xf]
          %v1772 = vld [vmem:[%s5 + $0x14] sm:$0xf]
          %v1773 = vld [vmem:[%s5 + $0x18] sm:$0xf]
          %v1774 = vld [vmem:[%s5 + $0x1c] sm:$0xf]
          %v1775 = vld [vmem:[%s5 + $0x20] sm:$0xf]
          %v1776 = vld [vmem:[%s5 + $0x24] sm:$0xf]
          %v1777 = vld [vmem:[%s5 + $0x28] sm:$0xf]
          %v1778 = vld [vmem:[%s5 + $0x2c] sm:$0xf]
          %v1779 = vld [vmem:[%s5 + $0x30] sm:$0xf]
          %v1780 = vld [vmem:[%s5 + $0x34] sm:$0xf]
          %v1781 = vld [vmem:[%s5 + $0x38] sm:$0xf]
          %v1782 = vld [vmem:[%s5 + $0x3c] sm:$0xf]
          %v1783 = vld [vmem:[%s6] sm:$0x1]
          %v1785 = vlaneseq
          %v1786 = vshrl.u32 %v1785, 7
          %v1787 = vsub.s32 0, %v1786
          %v1788 = vrot.slane %v1783, %v1787
          %v1806 = vunpack.c.l.b16 %v1767
          %v1807 = vunpack.c.l.b16 %v1768
          %v1808 = vunpack.c.l.b16 %v1769
          %v1809 = vunpack.c.l.b16 %v1770
          %v1810 = vunpack.c.l.b16 %v1771
          %v1811 = vunpack.c.l.b16 %v1772
          %v1812 = vunpack.c.l.b16 %v1773
          %v1813 = vunpack.c.l.b16 %v1774
          %v1814 = vunpack.c.l.b16 %v1775
          %v1815 = vunpack.c.l.b16 %v1776
          %v1816 = vunpack.c.l.b16 %v1777
          %v1817 = vunpack.c.l.b16 %v1778
          %v1818 = vunpack.c.l.b16 %v1779
          %v1819 = vunpack.c.l.b16 %v1780
          %v1820 = vunpack.c.l.b16 %v1781
          %v1821 = vunpack.c.l.b16 %v1782
          %v1822 = vpack.c.b16 %v1807, %v1806
          %v1823 = vpack.c.b16 %v1809, %v1808
          %v1824 = vpack.c.b16 %v1811, %v1810
          %v1825 = vpack.c.b16 %v1813, %v1812
          %v1826 = vpack.c.b16 %v1815, %v1814
          %v1827 = vpack.c.b16 %v1817, %v1816
          %v1828 = vpack.c.b16 %v1819, %v1818
          %v1829 = vpack.c.b16 %v1821, %v1820
          %1838 = vmatprep.subr.bf16.mxu0 0
          %1839 = vmatpush1.bf16.msra.mxu0 %v1829
          %1840 = vmatprep.subr.bf16.mxu0 0
          %1841 = vmatpush1.bf16.msra.mxu0 %v1828
          %1842 = vmatprep.subr.bf16.mxu0 0
          %1843 = vmatpush1.bf16.msra.mxu0 %v1827
          %1844 = vmatprep.subr.bf16.mxu0 0
          %1845 = vmatpush1.bf16.msra.mxu0 %v1826
          %1846 = vmatprep.subr.bf16.mxu0 0
          %1847 = vmatpush1.bf16.msra.mxu0 %v1825
          %1848 = vmatprep.subr.bf16.mxu0 0
          %1849 = vmatpush1.bf16.msra.mxu0 %v1824
          %1850 = vmatprep.subr.bf16.mxu0 0
          %1851 = vmatpush1.bf16.msra.mxu0 %v1823
          %1852 = vmatprep.subr.bf16.mxu0 0
          %1853 = vmatpush1.bf16.msra.mxu0 %v1822
          %1854 = vmatprep.subr.bf16.mxu0 0
          %1855 = vmatpush2.bf16.msra.mxu0 0
          %1856 = vmatprep.subr.bf16.mxu0 0
          %1857 = vmatpush2.bf16.msra.mxu0 0
          %1858 = vmatprep.subr.bf16.mxu0 0
          %1859 = vmatpush2.bf16.msra.mxu0 0
          %1860 = vmatprep.subr.bf16.mxu0 0
          %1861 = vmatpush2.bf16.msra.mxu0 0
          %1862 = vmatprep.subr.bf16.mxu0 0
          %1863 = vmatpush2.bf16.msra.mxu0 0
          %1864 = vmatprep.subr.bf16.mxu0 0
          %1865 = vmatpush2.bf16.msra.mxu0 0
          %1866 = vmatprep.subr.bf16.mxu0 0
          %1867 = vmatpush2.bf16.msra.mxu0 0
          %1868 = vmatprep.subr.bf16.mxu0 0
          %1869 = vmatpush2.bf16.msra.mxu0 0
          %1870 = vmatprep.mubr.bf16.mxu0 0
          %1871 = vmatmul.mubr.bf16.gmra.mxu0 %v1759
          %v1872 = vpop.f32.mrf.mxu0
          %v1873 = vadd.f32 %v1788, %v1872
          %v1874 = vpop.f32.mrf.mxu0
          %v1875 = vpop.f32.mrf.mxu0
          %v1876 = vadd.f32 %v1788, %v1875
          %v1877 = vpop.f32.mrf.mxu0
          %1878 = vmatprep.mubr.bf16.mxu0 0
          %1879 = vmatmul.mubr.bf16.gmra.mxu0 %v1760
          %v1880 = vpop.f32.mrf.mxu0
          %v1881 = vadd.f32 %v1788, %v1880
          %v1882 = vpop.f32.mrf.mxu0
          %v1883 = vpop.f32.mrf.mxu0
          %v1884 = vadd.f32 %v1788, %v1883
          %v1885 = vpop.f32.mrf.mxu0
          %1886 = vmatprep.mubr.bf16.mxu0 0
          %1887 = vmatmul.mubr.bf16.gmra.mxu0 %v1761
          %v1888 = vpop.f32.mrf.mxu0
          %v1889 = vadd.f32 %v1788, %v1888
          %v1890 = vpop.f32.mrf.mxu0
          %v1891 = vpop.f32.mrf.mxu0
          %v1892 = vadd.f32 %v1788, %v1891
          %v1893 = vpop.f32.mrf.mxu0
          %1894 = vmatprep.mubr.bf16.mxu0 0
          %1895 = vmatmul.mubr.bf16.gmra.mxu0 %v1762
          %v1896 = vpop.f32.mrf.mxu0
          %v1897 = vadd.f32 %v1788, %v1896
          %v1898 = vpop.f32.mrf.mxu0
          %v1899 = vpop.f32.mrf.mxu0
          %v1900 = vadd.f32 %v1788, %v1899
          %v1901 = vpop.f32.mrf.mxu0
          %1902 = vmatprep.mubr.bf16.mxu0 0
          %1903 = vmatmul.mubr.bf16.gmra.mxu0 %v1763
          %v1904 = vpop.f32.mrf.mxu0
          %v1905 = vadd.f32 %v1788, %v1904
          %v1906 = vpop.f32.mrf.mxu0
          %v1907 = vpop.f32.mrf.mxu0
          %v1908 = vadd.f32 %v1788, %v1907
          %v1909 = vpop.f32.mrf.mxu0
          %1910 = vmatprep.mubr.bf16.mxu0 0
          %1911 = vmatmul.mubr.bf16.gmra.mxu0 %v1764
          %v1912 = vpop.f32.mrf.mxu0
          %v1913 = vadd.f32 %v1788, %v1912
          %v1914 = vpop.f32.mrf.mxu0
          %v1915 = vpop.f32.mrf.mxu0
          %v1916 = vadd.f32 %v1788, %v1915
          %v1917 = vpop.f32.mrf.mxu0
          %1918 = vmatprep.mubr.bf16.mxu0 0
          %1919 = vmatmul.mubr.bf16.gmra.mxu0 %v1765
          %v1920 = vpop.f32.mrf.mxu0
          %v1921 = vadd.f32 %v1788, %v1920
          %v1922 = vpop.f32.mrf.mxu0
          %v1923 = vpop.f32.mrf.mxu0
          %v1924 = vadd.f32 %v1788, %v1923
          %v1925 = vpop.f32.mrf.mxu0
          %1926 = vmatprep.mubr.bf16.mxu0 0
          %1927 = vmatmul.mubr.bf16.gmra.mxu0 %v1766
          %v1928 = vpop.f32.mrf.mxu0
          %v1929 = vadd.f32 %v1788, %v1928
          %v1930 = vpop.f32.mrf.mxu0
          %v1931 = vpop.f32.mrf.mxu0
          %v1932 = vadd.f32 %v1788, %v1931
          %v1933 = vpop.f32.mrf.mxu0
          %1934 = vdwg.mxu0
          %v1935 = vld [vmem:[%s495] sm:$0xff]
          %v1936 = vld [vmem:[%s495 + $0x8] sm:$0xff]
          %v1937 = vld [vmem:[%s495 + $0x10] sm:$0xff]
          %v1938 = vld [vmem:[%s495 + $0x18] sm:$0xff]
          %v1939 = vld [vmem:[%s495 + $0x20] sm:$0xff]
          %v1940 = vld [vmem:[%s495 + $0x28] sm:$0xff]
          %v1941 = vld [vmem:[%s495 + $0x30] sm:$0xff]
          %v1942 = vld [vmem:[%s495 + $0x38] sm:$0xff]
          %v1943 = vld [vmem:[%s495 + $0x40] sm:$0xff]
          %v1944 = vld [vmem:[%s495 + $0x48] sm:$0xff]
          %v1945 = vld [vmem:[%s495 + $0x50] sm:$0xff]
          %v1946 = vld [vmem:[%s495 + $0x58] sm:$0xff]
          %v1947 = vld [vmem:[%s495 + $0x60] sm:$0xff]
          %v1948 = vld [vmem:[%s495 + $0x68] sm:$0xff]
          %v1949 = vld [vmem:[%s495 + $0x70] sm:$0xff]
          %v1950 = vld [vmem:[%s495 + $0x78] sm:$0xff]
          %v1951 = vadd.f32 %v1873, %v1935
          %v1952 = vadd.f32 %v1876, %v1936
          %v1953 = vadd.f32 %v1881, %v1937
          %v1954 = vadd.f32 %v1884, %v1938
          %v1955 = vadd.f32 %v1889, %v1939
          %v1956 = vadd.f32 %v1892, %v1940
          %v1957 = vadd.f32 %v1897, %v1941
          %v1958 = vadd.f32 %v1900, %v1942
          %v1959 = vadd.f32 %v1905, %v1943
          %v1960 = vadd.f32 %v1908, %v1944
          %v1961 = vadd.f32 %v1913, %v1945
          %v1962 = vadd.f32 %v1916, %v1946
          %v1963 = vadd.f32 %v1921, %v1947
          %v1964 = vadd.f32 %v1924, %v1948
          %v1965 = vadd.f32 %v1929, %v1949
          %v1966 = vadd.f32 %v1932, %v1950
          %v1967 = vld [vmem:[%s3] sm:$0x1]
          %v1968 = vld [vmem:[%s4] sm:$0x1]
          %1969 = vadd.xlane.f32.xlu0 %v1951
          %v1970 = vpop.xlane.xlu0 %1969
          %1971 = vadd.xlane.f32.xlu0 %v1952
          %v1972 = vpop.xlane.xlu0 %1971
          %1973 = vadd.xlane.f32.xlu0 %v1953
          %v1974 = vpop.xlane.xlu0 %1973
          %1975 = vadd.xlane.f32.xlu0 %v1954
          %v1976 = vpop.xlane.xlu0 %1975
          %1977 = vadd.xlane.f32.xlu0 %v1955
          %v1978 = vpop.xlane.xlu0 %1977
          %1979 = vadd.xlane.f32.xlu0 %v1956
          %v1980 = vpop.xlane.xlu0 %1979
          %1981 = vadd.xlane.f32.xlu0 %v1957
          %v1982 = vpop.xlane.xlu0 %1981
          %1983 = vadd.xlane.f32.xlu0 %v1958
          %v1984 = vpop.xlane.xlu0 %1983
          %1985 = vadd.xlane.f32.xlu0 %v1959
          %v1986 = vpop.xlane.xlu0 %1985
          %1987 = vadd.xlane.f32.xlu0 %v1960
          %v1988 = vpop.xlane.xlu0 %1987
          %1989 = vadd.xlane.f32.xlu0 %v1961
          %v1990 = vpop.xlane.xlu0 %1989
          %1991 = vadd.xlane.f32.xlu0 %v1962
          %v1992 = vpop.xlane.xlu0 %1991
          %1993 = vadd.xlane.f32.xlu0 %v1963
          %v1994 = vpop.xlane.xlu0 %1993
          %1995 = vadd.xlane.f32.xlu0 %v1964
          %v1996 = vpop.xlane.xlu0 %1995
          %1997 = vadd.xlane.f32.xlu0 %v1965
          %v1998 = vpop.xlane.xlu0 %1997
          %1999 = vadd.xlane.f32.xlu0 %v1966
          %v2000 = vpop.xlane.xlu0 %1999
          %v2001 = vrcp.pop 128.0
          %v2002 = vmul.f32 %v1970, %v2001
          %v2003 = vmul.f32 %v1972, %v2001
          %v2004 = vmul.f32 %v1974, %v2001
          %v2005 = vmul.f32 %v1976, %v2001
          %v2006 = vmul.f32 %v1978, %v2001
          %v2007 = vmul.f32 %v1980, %v2001
          %v2008 = vmul.f32 %v1982, %v2001
          %v2009 = vmul.f32 %v1984, %v2001
          %v2010 = vmul.f32 %v1986, %v2001
          %v2011 = vmul.f32 %v1988, %v2001
          %v2012 = vmul.f32 %v1990, %v2001
          %v2013 = vmul.f32 %v1992, %v2001
          %v2014 = vmul.f32 %v1994, %v2001
          %v2015 = vmul.f32 %v1996, %v2001
          %v2016 = vmul.f32 %v1998, %v2001
          %v2017 = vmul.f32 %v2000, %v2001
          %v2018 = vsub.f32 %v1951, %v2002
          %v2019 = vsub.f32 %v1952, %v2003
          %v2020 = vsub.f32 %v1953, %v2004
          %v2021 = vsub.f32 %v1954, %v2005
          %v2022 = vsub.f32 %v1955, %v2006
          %v2023 = vsub.f32 %v1956, %v2007
          %v2024 = vsub.f32 %v1957, %v2008
          %v2025 = vsub.f32 %v1958, %v2009
          %v2026 = vsub.f32 %v1959, %v2010
          %v2027 = vsub.f32 %v1960, %v2011
          %v2028 = vsub.f32 %v1961, %v2012
          %v2029 = vsub.f32 %v1962, %v2013
          %v2030 = vsub.f32 %v1963, %v2014
          %v2031 = vsub.f32 %v1964, %v2015
          %v2032 = vsub.f32 %v1965, %v2016
          %v2033 = vsub.f32 %v1966, %v2017
          %v2034 = vmul.f32 %v2018, %v2018
          %v2035 = vmul.f32 %v2019, %v2019
          %v2036 = vmul.f32 %v2020, %v2020
          %v2037 = vmul.f32 %v2021, %v2021
          %v2038 = vmul.f32 %v2022, %v2022
          %v2039 = vmul.f32 %v2023, %v2023
          %v2040 = vmul.f32 %v2024, %v2024
          %v2041 = vmul.f32 %v2025, %v2025
          %v2042 = vmul.f32 %v2026, %v2026
          %v2043 = vmul.f32 %v2027, %v2027
          %v2044 = vmul.f32 %v2028, %v2028
          %v2045 = vmul.f32 %v2029, %v2029
          %v2046 = vmul.f32 %v2030, %v2030
          %v2047 = vmul.f32 %v2031, %v2031
          %v2048 = vmul.f32 %v2032, %v2032
          %v2049 = vmul.f32 %v2033, %v2033
          %2050 = vadd.xlane.f32.xlu0 %v2034
          %v2051 = vpop.xlane.xlu0 %2050
          %2052 = vadd.xlane.f32.xlu0 %v2035
          %v2053 = vpop.xlane.xlu0 %2052
          %2054 = vadd.xlane.f32.xlu0 %v2036
          %v2055 = vpop.xlane.xlu0 %2054
          %2056 = vadd.xlane.f32.xlu0 %v2037
          %v2057 = vpop.xlane.xlu0 %2056
          %2058 = vadd.xlane.f32.xlu0 %v2038
          %v2059 = vpop.xlane.xlu0 %2058
          %2060 = vadd.xlane.f32.xlu0 %v2039
          %v2061 = vpop.xlane.xlu0 %2060
          %2062 = vadd.xlane.f32.xlu0 %v2040
          %v2063 = vpop.xlane.xlu0 %2062
          %2064 = vadd.xlane.f32.xlu0 %v2041
          %v2065 = vpop.xlane.xlu0 %2064
          %2066 = vadd.xlane.f32.xlu0 %v2042
          %v2067 = vpop.xlane.xlu0 %2066
          %2068 = vadd.xlane.f32.xlu0 %v2043
          %v2069 = vpop.xlane.xlu0 %2068
          %2070 = vadd.xlane.f32.xlu0 %v2044
          %v2071 = vpop.xlane.xlu0 %2070
          %2072 = vadd.xlane.f32.xlu0 %v2045
          %v2073 = vpop.xlane.xlu0 %2072
          %2074 = vadd.xlane.f32.xlu0 %v2046
          %v2075 = vpop.xlane.xlu0 %2074
          %2076 = vadd.xlane.f32.xlu0 %v2047
          %v2077 = vpop.xlane.xlu0 %2076
          %2078 = vadd.xlane.f32.xlu0 %v2048
          %v2079 = vpop.xlane.xlu0 %2078
          %2080 = vadd.xlane.f32.xlu0 %v2049
          %v2081 = vpop.xlane.xlu0 %2080
          %v2082 = vmul.f32 %v2051, %v2001
          %v2083 = vmul.f32 %v2053, %v2001
          %v2084 = vmul.f32 %v2055, %v2001
          %v2085 = vmul.f32 %v2057, %v2001
          %v2086 = vmul.f32 %v2059, %v2001
          %v2087 = vmul.f32 %v2061, %v2001
          %v2088 = vmul.f32 %v2063, %v2001
          %v2089 = vmul.f32 %v2065, %v2001
          %v2090 = vmul.f32 %v2067, %v2001
          %v2091 = vmul.f32 %v2069, %v2001
          %v2092 = vmul.f32 %v2071, %v2001
          %v2093 = vmul.f32 %v2073, %v2001
          %v2094 = vmul.f32 %v2075, %v2001
          %v2095 = vmul.f32 %v2077, %v2001
          %v2096 = vmul.f32 %v2079, %v2001
          %v2097 = vmul.f32 %v2081, %v2001
          %v2098 = vadd.f32 %v2082, 1e-05
          %v2099 = vadd.f32 %v2083, 1e-05
          %v2100 = vadd.f32 %v2084, 1e-05
          %v2101 = vadd.f32 %v2085, 1e-05
          %v2102 = vadd.f32 %v2086, 1e-05
          %v2103 = vadd.f32 %v2087, 1e-05
          %v2104 = vadd.f32 %v2088, 1e-05
          %v2105 = vadd.f32 %v2089, 1e-05
          %v2106 = vadd.f32 %v2090, 1e-05
          %v2107 = vadd.f32 %v2091, 1e-05
          %v2108 = vadd.f32 %v2092, 1e-05
          %v2109 = vadd.f32 %v2093, 1e-05
          %v2110 = vadd.f32 %v2094, 1e-05
          %v2111 = vadd.f32 %v2095, 1e-05
          %v2112 = vadd.f32 %v2096, 1e-05
          %v2113 = vadd.f32 %v2097, 1e-05
          %v2114 = vrsqrt.pop %v2098
          %v2115 = vrsqrt.pop %v2099
          %v2116 = vrsqrt.pop %v2100
          %v2117 = vrsqrt.pop %v2101
          %v2118 = vrsqrt.pop %v2102
          %v2119 = vrsqrt.pop %v2103
          %v2120 = vrsqrt.pop %v2104
          %v2121 = vrsqrt.pop %v2105
          %v2122 = vrsqrt.pop %v2106
          %v2123 = vrsqrt.pop %v2107
          %v2124 = vrsqrt.pop %v2108
          %v2125 = vrsqrt.pop %v2109
          %v2126 = vrsqrt.pop %v2110
          %v2127 = vrsqrt.pop %v2111
          %v2128 = vrsqrt.pop %v2112
          %v2129 = vrsqrt.pop %v2113
          %v2130 = vmul.f32 %v2018, %v2114
          %v2131 = vmul.f32 %v2019, %v2115
          %v2132 = vmul.f32 %v2020, %v2116
          %v2133 = vmul.f32 %v2021, %v2117
          %v2134 = vmul.f32 %v2022, %v2118
          %v2135 = vmul.f32 %v2023, %v2119
          %v2136 = vmul.f32 %v2024, %v2120
          %v2137 = vmul.f32 %v2025, %v2121
          %v2138 = vmul.f32 %v2026, %v2122
          %v2139 = vmul.f32 %v2027, %v2123
          %v2140 = vmul.f32 %v2028, %v2124
          %v2141 = vmul.f32 %v2029, %v2125
          %v2142 = vmul.f32 %v2030, %v2126
          %v2143 = vmul.f32 %v2031, %v2127
          %v2144 = vmul.f32 %v2032, %v2128
          %v2145 = vmul.f32 %v2033, %v2129
          %v2147 = vlaneseq
          %v2148 = vshrl.u32 %v2147, 7
          %v2149 = vsub.s32 0, %v2148
          %v2150 = vrot.slane %v1967, %v2149
          %v2152 = vmul.f32 %v2130, %v2150
          %v2153 = vmul.f32 %v2131, %v2150
          %v2154 = vmul.f32 %v2132, %v2150
          %v2155 = vmul.f32 %v2133, %v2150
          %v2156 = vmul.f32 %v2134, %v2150
          %v2157 = vmul.f32 %v2135, %v2150
          %v2158 = vmul.f32 %v2136, %v2150
          %v2159 = vmul.f32 %v2137, %v2150
          %v2160 = vmul.f32 %v2138, %v2150
          %v2161 = vmul.f32 %v2139, %v2150
          %v2162 = vmul.f32 %v2140, %v2150
          %v2163 = vmul.f32 %v2141, %v2150
          %v2164 = vmul.f32 %v2142, %v2150
          %v2165 = vmul.f32 %v2143, %v2150
          %v2166 = vmul.f32 %v2144, %v2150
          %v2167 = vmul.f32 %v2145, %v2150
          %v2169 = vlaneseq
          %v2170 = vshrl.u32 %v2169, 7
          %v2171 = vsub.s32 0, %v2170
          %v2172 = vrot.slane %v1968, %v2171
          %v2174 = vadd.f32 %v2152, %v2172
          %v2175 = vadd.f32 %v2153, %v2172
          %v2176 = vadd.f32 %v2154, %v2172
          %v2177 = vadd.f32 %v2155, %v2172
          %v2178 = vadd.f32 %v2156, %v2172
          %v2179 = vadd.f32 %v2157, %v2172
          %v2180 = vadd.f32 %v2158, %v2172
          %v2181 = vadd.f32 %v2159, %v2172
          %v2182 = vadd.f32 %v2160, %v2172
          %v2183 = vadd.f32 %v2161, %v2172
          %v2184 = vadd.f32 %v2162, %v2172
          %v2185 = vadd.f32 %v2163, %v2172
          %v2186 = vadd.f32 %v2164, %v2172
          %v2187 = vadd.f32 %v2165, %v2172
          %v2188 = vadd.f32 %v2166, %v2172
          %v2189 = vadd.f32 %v2167, %v2172
          %v2190 = vpack.c.bf16 %v2175, %v2174
          %v2191 = vpack.c.bf16 %v2177, %v2176
          %v2192 = vpack.c.bf16 %v2179, %v2178
          %v2193 = vpack.c.bf16 %v2181, %v2180
          %v2194 = vpack.c.bf16 %v2183, %v2182
          %v2195 = vpack.c.bf16 %v2185, %v2184
          %v2196 = vpack.c.bf16 %v2187, %v2186
          %v2197 = vpack.c.bf16 %v2189, %v2188
          %v2198 = vld [vmem:[%s7] sm:$0xff]
          %v2199 = vld [vmem:[%s7 + $0x8] sm:$0xff]
          %v2200 = vld [vmem:[%s7 + $0x10] sm:$0xff]
          %v2201 = vld [vmem:[%s7 + $0x18] sm:$0xff]
          %v2202 = vld [vmem:[%s7 + $0x20] sm:$0xff]
          %v2203 = vld [vmem:[%s7 + $0x28] sm:$0xff]
          %v2204 = vld [vmem:[%s7 + $0x30] sm:$0xff]
          %v2205 = vld [vmem:[%s7 + $0x38] sm:$0xff]
          %v2206 = vld [vmem:[%s7 + $0x40] sm:$0xff]
          %v2207 = vld [vmem:[%s7 + $0x48] sm:$0xff]
          %v2208 = vld [vmem:[%s7 + $0x50] sm:$0xff]
          %v2209 = vld [vmem:[%s7 + $0x58] sm:$0xff]
          %v2210 = vld [vmem:[%s7 + $0x60] sm:$0xff]
          %v2211 = vld [vmem:[%s7 + $0x68] sm:$0xff]
          %v2212 = vld [vmem:[%s7 + $0x70] sm:$0xff]
          %v2213 = vld [vmem:[%s7 + $0x78] sm:$0xff]
          %v2214 = vld [vmem:[%s8] sm:$0x3]
          %v2216 = vlaneseq
          %v2217 = vshrl.u32 %v2216, 7
          %v2218 = vsub.s32 0, %v2217
          %v2219 = vrot.slane %v2214, %v2218
          %v2220 = vlaneseq
          %v2221 = vshrl.u32 %v2220, 7
          %v2222 = vsub.s32 1, %v2221
          %v2223 = vrot.slane %v2214, %v2222
          %v2242 = vunpack.c.l.b16 %v2198
          %v2243 = vunpack.c.h.b16 %v2198
          %v2244 = vunpack.c.l.b16 %v2199
          %v2245 = vunpack.c.h.b16 %v2199
          %v2246 = vunpack.c.l.b16 %v2200
          %v2247 = vunpack.c.h.b16 %v2200
          %v2248 = vunpack.c.l.b16 %v2201
          %v2249 = vunpack.c.h.b16 %v2201
          %v2250 = vunpack.c.l.b16 %v2202
          %v2251 = vunpack.c.h.b16 %v2202
          %v2252 = vunpack.c.l.b16 %v2203
          %v2253 = vunpack.c.h.b16 %v2203
          %v2254 = vunpack.c.l.b16 %v2204
          %v2255 = vunpack.c.h.b16 %v2204
          %v2256 = vunpack.c.l.b16 %v2205
          %v2257 = vunpack.c.h.b16 %v2205
          %v2258 = vunpack.c.l.b16 %v2206
          %v2259 = vunpack.c.h.b16 %v2206
          %v2260 = vunpack.c.l.b16 %v2207
          %v2261 = vunpack.c.h.b16 %v2207
          %v2262 = vunpack.c.l.b16 %v2208
          %v2263 = vunpack.c.h.b16 %v2208
          %v2264 = vunpack.c.l.b16 %v2209
          %v2265 = vunpack.c.h.b16 %v2209
          %v2266 = vunpack.c.l.b16 %v2210
          %v2267 = vunpack.c.h.b16 %v2210
          %v2268 = vunpack.c.l.b16 %v2211
          %v2269 = vunpack.c.h.b16 %v2211
          %v2270 = vunpack.c.l.b16 %v2212
          %v2271 = vunpack.c.h.b16 %v2212
          %v2272 = vunpack.c.l.b16 %v2213
          %v2273 = vunpack.c.h.b16 %v2213
          %v2274 = vpack.c.b16 %v2244, %v2242
          %v2275 = vpack.c.b16 %v2245, %v2243
          %v2276 = vpack.c.b16 %v2248, %v2246
          %v2277 = vpack.c.b16 %v2249, %v2247
          %v2278 = vpack.c.b16 %v2252, %v2250
          %v2279 = vpack.c.b16 %v2253, %v2251
          %v2280 = vpack.c.b16 %v2256, %v2254
          %v2281 = vpack.c.b16 %v2257, %v2255
          %v2282 = vpack.c.b16 %v2260, %v2258
          %v2283 = vpack.c.b16 %v2261, %v2259
          %v2284 = vpack.c.b16 %v2264, %v2262
          %v2285 = vpack.c.b16 %v2265, %v2263
          %v2286 = vpack.c.b16 %v2268, %v2266
          %v2287 = vpack.c.b16 %v2269, %v2267
          %v2288 = vpack.c.b16 %v2272, %v2270
          %v2289 = vpack.c.b16 %v2273, %v2271
          %2306 = vmatprep.subr.bf16.mxu0 %v2289
          %2307 = vmatpush1.bf16.msra.mxu0 %v2288
          %2308 = vmatprep.subr.bf16.mxu0 %v2287
          %2309 = vmatpush1.bf16.msra.mxu0 %v2286
          %2310 = vmatprep.subr.bf16.mxu0 %v2285
          %2311 = vmatpush1.bf16.msra.mxu0 %v2284
          %2312 = vmatprep.subr.bf16.mxu0 %v2283
          %2313 = vmatpush1.bf16.msra.mxu0 %v2282
          %2314 = vmatprep.subr.bf16.mxu0 %v2281
          %2315 = vmatpush1.bf16.msra.mxu0 %v2280
          %2316 = vmatprep.subr.bf16.mxu0 %v2279
          %2317 = vmatpush1.bf16.msra.mxu0 %v2278
          %2318 = vmatprep.subr.bf16.mxu0 %v2277
          %2319 = vmatpush1.bf16.msra.mxu0 %v2276
          %2320 = vmatprep.subr.bf16.mxu0 %v2275
          %2321 = vmatpush1.bf16.msra.mxu0 %v2274
          %2322 = vmatprep.subr.bf16.mxu0 0
          %2323 = vmatpush2.bf16.msra.mxu0 0
          %2324 = vmatprep.subr.bf16.mxu0 0
          %2325 = vmatpush2.bf16.msra.mxu0 0
          %2326 = vmatprep.subr.bf16.mxu0 0
          %2327 = vmatpush2.bf16.msra.mxu0 0
          %2328 = vmatprep.subr.bf16.mxu0 0
          %2329 = vmatpush2.bf16.msra.mxu0 0
          %2330 = vmatprep.subr.bf16.mxu0 0
          %2331 = vmatpush2.bf16.msra.mxu0 0
          %2332 = vmatprep.subr.bf16.mxu0 0
          %2333 = vmatpush2.bf16.msra.mxu0 0
          %2334 = vmatprep.subr.bf16.mxu0 0
          %2335 = vmatpush2.bf16.msra.mxu0 0
          %2336 = vmatprep.subr.bf16.mxu0 0
          %2337 = vmatpush2.bf16.msra.mxu0 0
          %2338 = vmatprep.mubr.bf16.mxu0 0
          %2339 = vmatmul.mubr.bf16.gmra.mxu0 %v2190
          %v2340 = vpop.f32.mrf.mxu0
          %v2341 = vadd.f32 %v2219, %v2340
          %v2342 = vpop.f32.mrf.mxu0
          %v2343 = vadd.f32 %v2223, %v2342
          %v2344 = vpop.f32.mrf.mxu0
          %v2345 = vadd.f32 %v2219, %v2344
          %v2346 = vpop.f32.mrf.mxu0
          %v2347 = vadd.f32 %v2223, %v2346
          %2348 = vmatprep.mubr.bf16.mxu0 0
          %2349 = vmatmul.mubr.bf16.gmra.mxu0 %v2191
          %v2350 = vpop.f32.mrf.mxu0
          %v2351 = vadd.f32 %v2219, %v2350
          %v2352 = vpop.f32.mrf.mxu0
          %v2353 = vadd.f32 %v2223, %v2352
          %v2354 = vpop.f32.mrf.mxu0
          %v2355 = vadd.f32 %v2219, %v2354
          %v2356 = vpop.f32.mrf.mxu0
          %v2357 = vadd.f32 %v2223, %v2356
          %2358 = vmatprep.mubr.bf16.mxu0 0
          %2359 = vmatmul.mubr.bf16.gmra.mxu0 %v2192
          %v2360 = vpop.f32.mrf.mxu0
          %v2361 = vadd.f32 %v2219, %v2360
          %v2362 = vpop.f32.mrf.mxu0
          %v2363 = vadd.f32 %v2223, %v2362
          %v2364 = vpop.f32.mrf.mxu0
          %v2365 = vadd.f32 %v2219, %v2364
          %v2366 = vpop.f32.mrf.mxu0
          %v2367 = vadd.f32 %v2223, %v2366
          %2368 = vmatprep.mubr.bf16.mxu0 0
          %2369 = vmatmul.mubr.bf16.gmra.mxu0 %v2193
          %v2370 = vpop.f32.mrf.mxu0
          %v2371 = vadd.f32 %v2219, %v2370
          %v2372 = vpop.f32.mrf.mxu0
          %v2373 = vadd.f32 %v2223, %v2372
          %v2374 = vpop.f32.mrf.mxu0
          %v2375 = vadd.f32 %v2219, %v2374
          %v2376 = vpop.f32.mrf.mxu0
          %v2377 = vadd.f32 %v2223, %v2376
          %2378 = vmatprep.mubr.bf16.mxu0 0
          %2379 = vmatmul.mubr.bf16.gmra.mxu0 %v2194
          %v2380 = vpop.f32.mrf.mxu0
          %v2381 = vadd.f32 %v2219, %v2380
          %v2382 = vpop.f32.mrf.mxu0
          %v2383 = vadd.f32 %v2223, %v2382
          %v2384 = vpop.f32.mrf.mxu0
          %v2385 = vadd.f32 %v2219, %v2384
          %v2386 = vpop.f32.mrf.mxu0
          %v2387 = vadd.f32 %v2223, %v2386
          %2388 = vmatprep.mubr.bf16.mxu0 0
          %2389 = vmatmul.mubr.bf16.gmra.mxu0 %v2195
          %v2390 = vpop.f32.mrf.mxu0
          %v2391 = vadd.f32 %v2219, %v2390
          %v2392 = vpop.f32.mrf.mxu0
          %v2393 = vadd.f32 %v2223, %v2392
          %v2394 = vpop.f32.mrf.mxu0
          %v2395 = vadd.f32 %v2219, %v2394
          %v2396 = vpop.f32.mrf.mxu0
          %v2397 = vadd.f32 %v2223, %v2396
          %2398 = vmatprep.mubr.bf16.mxu0 0
          %2399 = vmatmul.mubr.bf16.gmra.mxu0 %v2196
          %v2400 = vpop.f32.mrf.mxu0
          %v2401 = vadd.f32 %v2219, %v2400
          %v2402 = vpop.f32.mrf.mxu0
          %v2403 = vadd.f32 %v2223, %v2402
          %v2404 = vpop.f32.mrf.mxu0
          %v2405 = vadd.f32 %v2219, %v2404
          %v2406 = vpop.f32.mrf.mxu0
          %v2407 = vadd.f32 %v2223, %v2406
          %2408 = vmatprep.mubr.bf16.mxu0 0
          %2409 = vmatmul.mubr.bf16.gmra.mxu0 %v2197
          %v2410 = vpop.f32.mrf.mxu0
          %v2411 = vadd.f32 %v2219, %v2410
          %v2412 = vpop.f32.mrf.mxu0
          %v2413 = vadd.f32 %v2223, %v2412
          %v2414 = vpop.f32.mrf.mxu0
          %v2415 = vadd.f32 %v2219, %v2414
          %v2416 = vpop.f32.mrf.mxu0
          %v2417 = vadd.f32 %v2223, %v2416
          %2418 = vdwg.mxu0
          %v2419 = vmax.f32 %v2341, 0.0
          %v2420 = vmax.f32 %v2343, 0.0
          %v2421 = vmax.f32 %v2345, 0.0
          %v2422 = vmax.f32 %v2347, 0.0
          %v2423 = vmax.f32 %v2351, 0.0
          %v2424 = vmax.f32 %v2353, 0.0
          %v2425 = vmax.f32 %v2355, 0.0
          %v2426 = vmax.f32 %v2357, 0.0
          %v2427 = vmax.f32 %v2361, 0.0
          %v2428 = vmax.f32 %v2363, 0.0
          %v2429 = vmax.f32 %v2365, 0.0
          %v2430 = vmax.f32 %v2367, 0.0
          %v2431 = vmax.f32 %v2371, 0.0
          %v2432 = vmax.f32 %v2373, 0.0
          %v2433 = vmax.f32 %v2375, 0.0
          %v2434 = vmax.f32 %v2377, 0.0
          %v2435 = vmax.f32 %v2381, 0.0
          %v2436 = vmax.f32 %v2383, 0.0
          %v2437 = vmax.f32 %v2385, 0.0
          %v2438 = vmax.f32 %v2387, 0.0
          %v2439 = vmax.f32 %v2391, 0.0
          %v2440 = vmax.f32 %v2393, 0.0
          %v2441 = vmax.f32 %v2395, 0.0
          %v2442 = vmax.f32 %v2397, 0.0
          %v2443 = vmax.f32 %v2401, 0.0
          %v2444 = vmax.f32 %v2403, 0.0
          %v2445 = vmax.f32 %v2405, 0.0
          %v2446 = vmax.f32 %v2407, 0.0
          %v2447 = vmax.f32 %v2411, 0.0
          %v2448 = vmax.f32 %v2413, 0.0
          %v2449 = vmax.f32 %v2415, 0.0
          %v2450 = vmax.f32 %v2417, 0.0
          %v2451 = vpack.c.bf16 %v2421, %v2419
          %v2452 = vpack.c.bf16 %v2422, %v2420
          %v2453 = vpack.c.bf16 %v2425, %v2423
          %v2454 = vpack.c.bf16 %v2426, %v2424
          %v2455 = vpack.c.bf16 %v2429, %v2427
          %v2456 = vpack.c.bf16 %v2430, %v2428
          %v2457 = vpack.c.bf16 %v2433, %v2431
          %v2458 = vpack.c.bf16 %v2434, %v2432
          %v2459 = vpack.c.bf16 %v2437, %v2435
          %v2460 = vpack.c.bf16 %v2438, %v2436
          %v2461 = vpack.c.bf16 %v2441, %v2439
          %v2462 = vpack.c.bf16 %v2442, %v2440
          %v2463 = vpack.c.bf16 %v2445, %v2443
          %v2464 = vpack.c.bf16 %v2446, %v2444
          %v2465 = vpack.c.bf16 %v2449, %v2447
          %v2466 = vpack.c.bf16 %v2450, %v2448
          %v2467 = vld [vmem:[%s9] sm:$0xf]
          %v2468 = vld [vmem:[%s9 + $0x4] sm:$0xf]
          %v2469 = vld [vmem:[%s9 + $0x8] sm:$0xf]
          %v2470 = vld [vmem:[%s9 + $0xc] sm:$0xf]
          %v2471 = vld [vmem:[%s9 + $0x10] sm:$0xf]
          %v2472 = vld [vmem:[%s9 + $0x14] sm:$0xf]
          %v2473 = vld [vmem:[%s9 + $0x18] sm:$0xf]
          %v2474 = vld [vmem:[%s9 + $0x1c] sm:$0xf]
          %v2475 = vld [vmem:[%s9 + $0x20] sm:$0xf]
          %v2476 = vld [vmem:[%s9 + $0x24] sm:$0xf]
          %v2477 = vld [vmem:[%s9 + $0x28] sm:$0xf]
          %v2478 = vld [vmem:[%s9 + $0x2c] sm:$0xf]
          %v2479 = vld [vmem:[%s9 + $0x30] sm:$0xf]
          %v2480 = vld [vmem:[%s9 + $0x34] sm:$0xf]
          %v2481 = vld [vmem:[%s9 + $0x38] sm:$0xf]
          %v2482 = vld [vmem:[%s9 + $0x3c] sm:$0xf]
          %v2483 = vld [vmem:[%s9 + $0x40] sm:$0xf]
          %v2484 = vld [vmem:[%s9 + $0x44] sm:$0xf]
          %v2485 = vld [vmem:[%s9 + $0x48] sm:$0xf]
          %v2486 = vld [vmem:[%s9 + $0x4c] sm:$0xf]
          %v2487 = vld [vmem:[%s9 + $0x50] sm:$0xf]
          %v2488 = vld [vmem:[%s9 + $0x54] sm:$0xf]
          %v2489 = vld [vmem:[%s9 + $0x58] sm:$0xf]
          %v2490 = vld [vmem:[%s9 + $0x5c] sm:$0xf]
          %v2491 = vld [vmem:[%s9 + $0x60] sm:$0xf]
          %v2492 = vld [vmem:[%s9 + $0x64] sm:$0xf]
          %v2493 = vld [vmem:[%s9 + $0x68] sm:$0xf]
          %v2494 = vld [vmem:[%s9 + $0x6c] sm:$0xf]
          %v2495 = vld [vmem:[%s9 + $0x70] sm:$0xf]
          %v2496 = vld [vmem:[%s9 + $0x74] sm:$0xf]
          %v2497 = vld [vmem:[%s9 + $0x78] sm:$0xf]
          %v2498 = vld [vmem:[%s9 + $0x7c] sm:$0xf]
          %v2499 = vld [vmem:[%s10] sm:$0x1]
          %v2501 = vlaneseq
          %v2502 = vshrl.u32 %v2501, 7
          %v2503 = vsub.s32 0, %v2502
          %v2504 = vrot.slane %v2499, %v2503
          %v2538 = vunpack.c.l.b16 %v2467
          %v2539 = vunpack.c.l.b16 %v2468
          %v2540 = vunpack.c.l.b16 %v2469
          %v2541 = vunpack.c.l.b16 %v2470
          %v2542 = vunpack.c.l.b16 %v2471
          %v2543 = vunpack.c.l.b16 %v2472
          %v2544 = vunpack.c.l.b16 %v2473
          %v2545 = vunpack.c.l.b16 %v2474
          %v2546 = vunpack.c.l.b16 %v2475
          %v2547 = vunpack.c.l.b16 %v2476
          %v2548 = vunpack.c.l.b16 %v2477
          %v2549 = vunpack.c.l.b16 %v2478
          %v2550 = vunpack.c.l.b16 %v2479
          %v2551 = vunpack.c.l.b16 %v2480
          %v2552 = vunpack.c.l.b16 %v2481
          %v2553 = vunpack.c.l.b16 %v2482
          %v2554 = vunpack.c.l.b16 %v2483
          %v2555 = vunpack.c.l.b16 %v2484
          %v2556 = vunpack.c.l.b16 %v2485
          %v2557 = vunpack.c.l.b16 %v2486
          %v2558 = vunpack.c.l.b16 %v2487
          %v2559 = vunpack.c.l.b16 %v2488
          %v2560 = vunpack.c.l.b16 %v2489
          %v2561 = vunpack.c.l.b16 %v2490
          %v2562 = vunpack.c.l.b16 %v2491
          %v2563 = vunpack.c.l.b16 %v2492
          %v2564 = vunpack.c.l.b16 %v2493
          %v2565 = vunpack.c.l.b16 %v2494
          %v2566 = vunpack.c.l.b16 %v2495
          %v2567 = vunpack.c.l.b16 %v2496
          %v2568 = vunpack.c.l.b16 %v2497
          %v2569 = vunpack.c.l.b16 %v2498
          %v2570 = vpack.c.b16 %v2539, %v2538
          %v2571 = vpack.c.b16 %v2541, %v2540
          %v2572 = vpack.c.b16 %v2543, %v2542
          %v2573 = vpack.c.b16 %v2545, %v2544
          %v2574 = vpack.c.b16 %v2547, %v2546
          %v2575 = vpack.c.b16 %v2549, %v2548
          %v2576 = vpack.c.b16 %v2551, %v2550
          %v2577 = vpack.c.b16 %v2553, %v2552
          %v2578 = vpack.c.b16 %v2555, %v2554
          %v2579 = vpack.c.b16 %v2557, %v2556
          %v2580 = vpack.c.b16 %v2559, %v2558
          %v2581 = vpack.c.b16 %v2561, %v2560
          %v2582 = vpack.c.b16 %v2563, %v2562
          %v2583 = vpack.c.b16 %v2565, %v2564
          %v2584 = vpack.c.b16 %v2567, %v2566
          %v2585 = vpack.c.b16 %v2569, %v2568
          %2602 = vmatprep.subr.bf16.mxu0 0
          %2603 = vmatpush1.bf16.msra.mxu0 %v2577
          %2604 = vmatprep.subr.bf16.mxu0 0
          %2605 = vmatpush1.bf16.msra.mxu0 %v2576
          %2606 = vmatprep.subr.bf16.mxu0 0
          %2607 = vmatpush1.bf16.msra.mxu0 %v2575
          %2608 = vmatprep.subr.bf16.mxu0 0
          %2609 = vmatpush1.bf16.msra.mxu0 %v2574
          %2610 = vmatprep.subr.bf16.mxu0 0
          %2611 = vmatpush1.bf16.msra.mxu0 %v2573
          %2612 = vmatprep.subr.bf16.mxu0 0
          %2613 = vmatpush1.bf16.msra.mxu0 %v2572
          %2614 = vmatprep.subr.bf16.mxu0 0
          %2615 = vmatpush1.bf16.msra.mxu0 %v2571
          %2616 = vmatprep.subr.bf16.mxu0 0
          %2617 = vmatpush1.bf16.msra.mxu0 %v2570
          %2618 = vmatprep.subr.bf16.mxu0 0
          %2619 = vmatpush2.bf16.msra.mxu0 %v2585
          %2620 = vmatprep.subr.bf16.mxu0 0
          %2621 = vmatpush2.bf16.msra.mxu0 %v2584
          %2622 = vmatprep.subr.bf16.mxu0 0
          %2623 = vmatpush2.bf16.msra.mxu0 %v2583
          %2624 = vmatprep.subr.bf16.mxu0 0
          %2625 = vmatpush2.bf16.msra.mxu0 %v2582
          %2626 = vmatprep.subr.bf16.mxu0 0
          %2627 = vmatpush2.bf16.msra.mxu0 %v2581
          %2628 = vmatprep.subr.bf16.mxu0 0
          %2629 = vmatpush2.bf16.msra.mxu0 %v2580
          %2630 = vmatprep.subr.bf16.mxu0 0
          %2631 = vmatpush2.bf16.msra.mxu0 %v2579
          %2632 = vmatprep.subr.bf16.mxu0 0
          %2633 = vmatpush2.bf16.msra.mxu0 %v2578
          %2634 = vmatprep.mubr.bf16.mxu0 %v2452
          %2635 = vmatmul.mubr.bf16.gmra.mxu0 %v2451
          %v2636 = vpop.f32.mrf.mxu0
          %v2637 = vadd.f32 %v2504, %v2636
          %v2638 = vpop.f32.mrf.mxu0
          %v2639 = vpop.f32.mrf.mxu0
          %v2640 = vadd.f32 %v2504, %v2639
          %v2641 = vpop.f32.mrf.mxu0
          %2642 = vmatprep.mubr.bf16.mxu0 %v2454
          %2643 = vmatmul.mubr.bf16.gmra.mxu0 %v2453
          %v2644 = vpop.f32.mrf.mxu0
          %v2645 = vadd.f32 %v2504, %v2644
          %v2646 = vpop.f32.mrf.mxu0
          %v2647 = vpop.f32.mrf.mxu0
          %v2648 = vadd.f32 %v2504, %v2647
          %v2649 = vpop.f32.mrf.mxu0
          %2650 = vmatprep.mubr.bf16.mxu0 %v2456
          %2651 = vmatmul.mubr.bf16.gmra.mxu0 %v2455
          %v2652 = vpop.f32.mrf.mxu0
          %v2653 = vadd.f32 %v2504, %v2652
          %v2654 = vpop.f32.mrf.mxu0
          %v2655 = vpop.f32.mrf.mxu0
          %v2656 = vadd.f32 %v2504, %v2655
          %v2657 = vpop.f32.mrf.mxu0
          %2658 = vmatprep.mubr.bf16.mxu0 %v2458
          %2659 = vmatmul.mubr.bf16.gmra.mxu0 %v2457
          %v2660 = vpop.f32.mrf.mxu0
          %v2661 = vadd.f32 %v2504, %v2660
          %v2662 = vpop.f32.mrf.mxu0
          %v2663 = vpop.f32.mrf.mxu0
          %v2664 = vadd.f32 %v2504, %v2663
          %v2665 = vpop.f32.mrf.mxu0
          %2666 = vmatprep.mubr.bf16.mxu0 %v2460
          %2667 = vmatmul.mubr.bf16.gmra.mxu0 %v2459
          %v2668 = vpop.f32.mrf.mxu0
          %v2669 = vadd.f32 %v2504, %v2668
          %v2670 = vpop.f32.mrf.mxu0
          %v2671 = vpop.f32.mrf.mxu0
          %v2672 = vadd.f32 %v2504, %v2671
          %v2673 = vpop.f32.mrf.mxu0
          %2674 = vmatprep.mubr.bf16.mxu0 %v2462
          %2675 = vmatmul.mubr.bf16.gmra.mxu0 %v2461
          %v2676 = vpop.f32.mrf.mxu0
          %v2677 = vadd.f32 %v2504, %v2676
          %v2678 = vpop.f32.mrf.mxu0
          %v2679 = vpop.f32.mrf.mxu0
          %v2680 = vadd.f32 %v2504, %v2679
          %v2681 = vpop.f32.mrf.mxu0
          %2682 = vmatprep.mubr.bf16.mxu0 %v2464
          %2683 = vmatmul.mubr.bf16.gmra.mxu0 %v2463
          %v2684 = vpop.f32.mrf.mxu0
          %v2685 = vadd.f32 %v2504, %v2684
          %v2686 = vpop.f32.mrf.mxu0
          %v2687 = vpop.f32.mrf.mxu0
          %v2688 = vadd.f32 %v2504, %v2687
          %v2689 = vpop.f32.mrf.mxu0
          %2690 = vmatprep.mubr.bf16.mxu0 %v2466
          %2691 = vmatmul.mubr.bf16.gmra.mxu0 %v2465
          %v2692 = vpop.f32.mrf.mxu0
          %v2693 = vadd.f32 %v2504, %v2692
          %v2694 = vpop.f32.mrf.mxu0
          %v2695 = vpop.f32.mrf.mxu0
          %v2696 = vadd.f32 %v2504, %v2695
          %v2697 = vpop.f32.mrf.mxu0
          %2698 = vdwg.mxu0
          %v2699 = vadd.f32 %v1951, %v2637
          %v2700 = vadd.f32 %v1952, %v2640
          %v2701 = vadd.f32 %v1953, %v2645
          %v2702 = vadd.f32 %v1954, %v2648
          %v2703 = vadd.f32 %v1955, %v2653
          %v2704 = vadd.f32 %v1956, %v2656
          %v2705 = vadd.f32 %v1957, %v2661
          %v2706 = vadd.f32 %v1958, %v2664
          %v2707 = vadd.f32 %v1959, %v2669
          %v2708 = vadd.f32 %v1960, %v2672
          %v2709 = vadd.f32 %v1961, %v2677
          %v2710 = vadd.f32 %v1962, %v2680
          %v2711 = vadd.f32 %v1963, %v2685
          %v2712 = vadd.f32 %v1964, %v2688
          %v2713 = vadd.f32 %v1965, %v2693
          %v2714 = vadd.f32 %v1966, %v2696
          %2715 = vst [vmem:[%s465] sm:$0xff] %v2699
          %2716 = vst [vmem:[%s465 + $0x8] sm:$0xff] %v2700
          %2717 = vst [vmem:[%s465 + $0x10] sm:$0xff] %v2701
          %2718 = vst [vmem:[%s465 + $0x18] sm:$0xff] %v2702
          %2719 = vst [vmem:[%s465 + $0x20] sm:$0xff] %v2703
          %2720 = vst [vmem:[%s465 + $0x28] sm:$0xff] %v2704
          %2721 = vst [vmem:[%s465 + $0x30] sm:$0xff] %v2705
          %2722 = vst [vmem:[%s465 + $0x38] sm:$0xff] %v2706
          %2723 = vst [vmem:[%s465 + $0x40] sm:$0xff] %v2707
          %2724 = vst [vmem:[%s465 + $0x48] sm:$0xff] %v2708
          %2725 = vst [vmem:[%s465 + $0x50] sm:$0xff] %v2709
          %2726 = vst [vmem:[%s465 + $0x58] sm:$0xff] %v2710
          %2727 = vst [vmem:[%s465 + $0x60] sm:$0xff] %v2711
          %2728 = vst [vmem:[%s465 + $0x68] sm:$0xff] %v2712
          %2729 = vst [vmem:[%s465 + $0x70] sm:$0xff] %v2713
          %2730 = vst [vmem:[%s465 + $0x78] sm:$0xff] %v2714
        $region72: #{_forward.3} parent=63 // pred_fallthru
          _
        %s2731 = sand.u32 %s306, 1
        %s2732 = scalar_lea.sflag [#allocation6], %s2731
        %s2733 = sand.u32 %s306, 1
        %s2734 = smul.addr %s2733, 128
        %s2735 = scalar_lea.vmem [#allocation5], %s2734
        // Predicated region
        $region73: #{_forward.3} parent=63 // pred_check
          %p2736 = pneg %p316
        $region74: #{_forward.3} parent=63 // pred_check_branch
          %2738 = sbr.rel (%p2736) target = $region76
        $region75: #{_forward.3} parent=63 // pred_region
          %s2739 = smul.u32 16, %s31
          %s2741 = ssub.s32 2048, 2048
          %2742 = vsyncadd %s2732, %s2741
          %s2743 = smul.addr %s30, 64
          %s2744 = sadd.s32 %s2739, %s2743
          %s2745 = smul.addr %s2744, 128
          %s2746 = scalar_lea.hbm %s11, %s2745
          %s2747 = sshll.u32 %s2735, 4
          %s2748 = int_to_ptr.vmem [resolvable:$true] %s2747
          %2753 = dma.vmem_to_hbm [thread:$0]  %s2748, 2048, %s2746, %s2732, 128, 128, 8
        $region76: #{_forward.3} parent=63 // pred_fallthru
          _
      $region64: #{_forward.3} parent=5 // pred_fallthru
        _
      %p2754 = scmp.le.s32.totalorder 2, %s20
      // Predicated region
      $region77: #{_forward.3} parent=5 // pred_check
        %p2755 = pneg %p2754
      $region78: #{_forward.3} parent=5 // pred_check_branch
        %2757 = sbr.rel (%p2755) target = $region80
      $region79: #{_forward.3} parent=5 // pred_region
        %s2758 = ssub.s32 %s20, 2
        // Predicated region
        $region81: #{_forward.3} parent=79 // pred_check
          %p2759 = pneg %p322
        $region82: #{_forward.3} parent=79 // pred_check_branch
          %2761 = sbr.rel (%p2759) target = $region84
        $region83: #{_forward.3} parent=79 // pred_region
          %s2762 = sand.u32 %s307, 1
          %s2763 = scalar_lea.sflag [#allocation6], %s2762
          %s2764 = sand.u32 %s307, 1
          %s2765 = smul.addr %s2764, 128
          %s2766 = scalar_lea.vmem [#allocation5], %s2765
          %2767 = dma.done %s2763, 2048
        $region84: #{_forward.3} parent=79 // pred_fallthru
          _
      $region80: #{_forward.3} parent=5 // pred_fallthru
        _
    $region6: #{_forward.3} parent=1 // loop_footer
      %s24 = sadd.s32 1, %s20
    $region7: #{_forward.3} parent=1 // loop_footer_branch
      %19 = sbr.rel target = $region3
    $region8: #{_forward.3} parent=1 // loop_exit
      _
    %2768 = vsyncpa [#allocation6], 1
    %s2769 = scalar_lea.sflag [#allocation6], 1
    %2770 = vsyncpa %s2769, 1

</llo_original>
